<compile_context>
chip_gen: v6e
topology: v6e:2x2x1
jax: 0.10.0
libtpu: 0.0.40
codegen_flags: <defaults>
</compile_context>

<pallas_src>
import jax
import jax.numpy as jnp
from jax import lax
from jax.experimental import pallas as pl
from jax.experimental.pallas import tpu as pltpu


def _layernorm(x, eps=1e-5):
    m = jnp.mean(x, axis=-1, keepdims=True)
    v = jnp.mean((x - m) ** 2, axis=-1, keepdims=True)
    return (x - m) * lax.rsqrt(v + eps)


# ----------------------------------------------------------------------------
# Single fused per-batch kernel:
#   patch-embed + masked text pool + neck + decoder layer + FFN + projector
# ----------------------------------------------------------------------------
def _barleria_fused_kernel(patch_ref, wemb_ref, keep_ref,
                           wpatch_ref, wwd_ref, wneck_ref,
                           wq_ref, wkv_ref, wo_ref,
                           w1_ref, w2_ref, wdyn_ref,
                           o_ref):
    f32 = jnp.float32
    bf16 = jnp.bfloat16
    C = wq_ref.shape[0]
    scale = 1.0 / float(C) ** 0.5

    patches = patch_ref[0]                                         # (N, K) bf16
    wemb = wemb_ref[0]                                             # (L, C) bf16
    keep = keep_ref[0]                                             # (1, L) f32

    # ---- patch embedding (bf16 MXU operands, f32 accumulation) -------------
    vis = jnp.dot(patches, wpatch_ref[...],
                  preferred_element_type=f32)                      # (N, C)

    # ---- text branch: masked mean pool -> per-batch state (1, C), f32 ------
    cnt = jnp.maximum(jnp.sum(keep, axis=-1, keepdims=True), 1.0)  # (1, 1)
    pooled = jnp.dot(keep.astype(bf16), wemb,
                     preferred_element_type=f32)                   # (1, C)
    # approx reciprocal (~2^-12 rel err): fine for eval, not bitwise parity.
    pooled = pooled * pl.reciprocal(cnt, approx=True)
    state = jnp.dot(pooled.astype(bf16), wwd_ref[...],
                    preferred_element_type=f32)                    # (1, C) f32

    # ---- neck: text-modulated visual features (f32 broadcast, no one-hot) --
    fq = jnp.dot(vis.astype(bf16), wneck_ref[...],
                 preferred_element_type=f32) * state               # (N, C)

    # ---- decoder layer: masked cross-attention over text tokens ------------
    fq_bf = fq.astype(bf16)
    q = jnp.dot(fq_bf, wq_ref[...], preferred_element_type=f32)    # (N, C)
    kv = jnp.dot(wemb, wkv_ref[...], preferred_element_type=f32)   # (L, 2C)
    k = kv[:, :C]
    v = kv[:, C:]

    # scores: contract channel dims directly (no materialized k.T)
    s = lax.dot_general(q.astype(bf16), k.astype(bf16),
                        (((1,), (1,)), ((), ())),
                        preferred_element_type=f32) * scale        # (N, L)
    s = jnp.where(keep > 0.0, s, -1e9)                             # single select

    m = jnp.max(s, axis=-1, keepdims=True)
    p = jnp.exp(s - m) * keep           # zero padded lanes; all-padding guard
    denom = jnp.maximum(jnp.sum(p, axis=-1, keepdims=True), 1e-6)
    p = p * pl.reciprocal(denom, approx=True)

    ctx = jnp.dot(p.astype(bf16), v.astype(bf16),
                  preferred_element_type=f32)                      # (N, C)
    ctx = jnp.dot(ctx.astype(bf16), wo_ref[...],
                  preferred_element_type=f32)
    fq = _layernorm(fq + ctx)                                      # f32

    # ---- decoder FFN --------------------------------------------------------
    fq_bf = fq.astype(bf16)
    ff = jnp.maximum(jnp.dot(fq_bf, w1_ref[...],
                             preferred_element_type=f32), 0.0)
    fq = _layernorm(fq + jnp.dot(ff.astype(bf16), w2_ref[...],
                                 preferred_element_type=f32))      # (N, C)

    # ---- projector: dynamic per-batch 1x1 conv from the text state ---------
    w_dyn_b = jnp.dot(state.astype(bf16), wdyn_ref[...],
                      preferred_element_type=f32)                  # (1, C)
    pred = lax.dot_general(w_dyn_b.astype(bf16), fq.astype(bf16),
                           (((1,), (1,)), ((), ())),
                           preferred_element_type=f32)             # (1, N) lane-dense
    o_ref[0] = pred


# ----------------------------------------------------------------------------
# Wrappers
# ----------------------------------------------------------------------------
def prepare_params(params):
    """One-time weight prep: fold wk/wv behind w_wd and cast everything to bf16.

    Doing this per model (not per forward) removes a CxCx2C GEMM + a full
    weight-set re-cast from every call.  Note: folding in f32 then casting to
    bf16 rounds slightly differently than two separate bf16 matmuls.
    """
    wkv = jnp.dot(params["w_wd"],
                  jnp.concatenate([params["wk"], params["wv"]], axis=1))
    bf = lambda x: x.astype(jnp.bfloat16)
    return {
        "embed":   bf(params["embed"]),
        "w_patch": bf(params["w_patch"]),
        "w_wd":    bf(params["w_wd"]),
        "w_neck":  bf(params["w_neck"]),
        "wq":      bf(params["wq"]),
        "wkv":     bf(wkv),
        "wo":      bf(params["wo"]),
        "w1":      bf(params["w1"]),
        "w2":      bf(params["w2"]),
        "w_dyn":   bf(params["w_dyn"]),
    }


def barleria_forward(img, word, prepared, patch=4):
    """img: (B, 3, H, W) f32 NCHW; word: (B, L) int32. Returns (B, 1, H/p, W/p)."""
    B, Cin, H, W = img.shape
    h, w = H // patch, W // patch
    N = h * w
    L = word.shape[1]
    K = Cin * patch * patch
    C = prepared["w_patch"].shape[1]
    F = prepared["w1"].shape[1]

    # glue: im2col (fused XLA transpose+reshape; see TODO above)
    p = img.reshape(B, Cin, h, patch, w, patch)
    patches = p.transpose(0, 2, 4, 1, 3, 5).reshape(B, N, K).astype(jnp.bfloat16)

    # glue: word-embedding lookup and keep mask (word == 0 -> padded)
    wemb = jnp.take(prepared["embed"], word, axis=0)               # (B, L, C) bf16
    keep = (word != 0).astype(jnp.float32)[:, None, :]             # (B, 1, L)

    weights = (prepared["w_patch"], prepared["w_wd"], prepared["w_neck"],
               prepared["wq"], prepared["wkv"], prepared["wo"],
               prepared["w1"], prepared["w2"], prepared["w_dyn"])

    pred_flat = pl.pallas_call(
        _barleria_fused_kernel,
        out_shape=jax.ShapeDtypeStruct((B, 1, N), jnp.float32),
        grid=(B,),
        in_specs=[
            pl.BlockSpec((1, N, K), lambda b: (b, 0, 0)),    # im2col patches
            pl.BlockSpec((1, L, C), lambda b: (b, 0, 0)),    # word embeddings
            pl.BlockSpec((1, 1, L), lambda b: (b, 0, 0)),    # keep mask
            pl.BlockSpec((K, C), lambda b: (0, 0)),          # w_patch
            pl.BlockSpec((C, C), lambda b: (0, 0)),          # w_wd
            pl.BlockSpec((C, C), lambda b: (0, 0)),          # w_neck
            pl.BlockSpec((C, C), lambda b: (0, 0)),          # wq
            pl.BlockSpec((C, 2 * C), lambda b: (0, 0)),      # wkv (pre-folded)
            pl.BlockSpec((C, C), lambda b: (0, 0)),          # wo
            pl.BlockSpec((C, F), lambda b: (0, 0)),          # ffn w1
            pl.BlockSpec((F, C), lambda b: (0, 0)),          # ffn w2
            pl.BlockSpec((C, C), lambda b: (0, 0)),          # w_dyn
        ],
        out_specs=pl.BlockSpec((1, 1, N), lambda b: (b, 0, 0)),  # lane-dense
        compiler_params=pltpu.CompilerParams(
            dimension_semantics=("parallel",)),
    )(patches, wemb, keep, *weights)

    # glue: lane-dense flat prediction -> NCHW prediction map
    return pred_flat.reshape(B, h, w)[:, None, :, :]


def init_params(key, Cin=3, patch=4, C=128, ffn=256, vocab=64):
    ks = jax.random.split(key, 12)
    s = 0.02
    K = Cin * patch * patch
    return {
        "w_patch": s * jax.random.normal(ks[0], (K, C), jnp.float32),
        "embed":   s * jax.random.normal(ks[1], (vocab, C), jnp.float32),
        "w_wd":    s * jax.random.normal(ks[2], (C, C), jnp.float32),
        "w_neck":  s * jax.random.normal(ks[3], (C, C), jnp.float32),
        "wq":      s * jax.random.normal(ks[4], (C, C), jnp.float32),
        "wk":      s * jax.random.normal(ks[5], (C, C), jnp.float32),
        "wv":      s * jax.random.normal(ks[6], (C, C), jnp.float32),
        "wo":      s * jax.random.normal(ks[7], (C, C), jnp.float32),
        "w1":      s * jax.random.normal(ks[8], (C, ffn), jnp.float32),
        "w2":      s * jax.random.normal(ks[9], (ffn, C), jnp.float32),
        "w_dyn":   s * jax.random.normal(ks[10], (C, C), jnp.float32),
    }


if __name__ == "__main__":
    key = jax.random.PRNGKey(0)
    k_img, k_word, k_param = jax.random.split(key, 3)

    # lane-aligned synthetic shapes: C=128 channels, N=256 tokens per batch
    B, H, W, L, vocab, patch = 2, 64, 64, 16, 64, 4
    img = jax.random.normal(k_img, (B, 3, H, W), jnp.float32)
    word = jax.random.randint(k_word, (B, L), 1, vocab, dtype=jnp.int32)
    word = word.at[:, 11:].set(0)   # trailing padding -> exercises pad_mask

    params = init_params(k_param, patch=patch, C=128, ffn=256, vocab=vocab)
    prepared = prepare_params(params)   # one-time fold + bf16 cast

    fwd = jax.jit(barleria_forward, static_argnames=("patch",))
    pred = fwd(img, word, prepared, patch=patch)
    pred = jax.block_until_ready(pred)

    assert pred.shape == (B, 1, H // patch, W // patch)
    assert bool(jnp.all(jnp.isfinite(pred)))
    print("KERNEL_OK")
</pallas_src>

<mosaic_0001>
module attributes {stable_mosaic.version = 11 : i64} {
  func.func @_barleria_fused_kernel(%arg0: i32, %arg1: memref<1x256x48xbf16, #tpu.memory_space<vmem>>, %arg2: memref<1x16x128xbf16, #tpu.memory_space<vmem>>, %arg3: memref<1x1x16xf32, #tpu.memory_space<vmem>>, %arg4: memref<48x128xbf16, #tpu.memory_space<vmem>>, %arg5: memref<128x128xbf16, #tpu.memory_space<vmem>>, %arg6: memref<128x128xbf16, #tpu.memory_space<vmem>>, %arg7: memref<128x128xbf16, #tpu.memory_space<vmem>>, %arg8: memref<128x256xbf16, #tpu.memory_space<vmem>>, %arg9: memref<128x128xbf16, #tpu.memory_space<vmem>>, %arg10: memref<128x256xbf16, #tpu.memory_space<vmem>>, %arg11: memref<256x128xbf16, #tpu.memory_space<vmem>>, %arg12: memref<128x128xbf16, #tpu.memory_space<vmem>>, %arg13: memref<1x1x256xf32, #tpu.memory_space<vmem>>) attributes {dimension_semantics = [#tpu.dimension_semantics<parallel>], iteration_bounds = array<i64: 2>, scalar_prefetch = 0 : i64, scratch_operands = 0 : i64, tpu.core_type = #tpu.core_type<tc>, window_params = [{transform_indices = @transform_0, window_bounds = array<i64: 1, 256, 48>}, {transform_indices = @transform_1, window_bounds = array<i64: 1, 16, 128>}, {transform_indices = @transform_2, window_bounds = array<i64: 1, 1, 16>}, {pipeline_mode = #tpu.pipeline_mode<synchronous>, transform_indices = @transform_3, window_bounds = array<i64: 48, 128>}, {pipeline_mode = #tpu.pipeline_mode<synchronous>, transform_indices = @transform_4, window_bounds = array<i64: 128, 128>}, {pipeline_mode = #tpu.pipeline_mode<synchronous>, transform_indices = @transform_5, window_bounds = array<i64: 128, 128>}, {pipeline_mode = #tpu.pipeline_mode<synchronous>, transform_indices = @transform_6, window_bounds = array<i64: 128, 128>}, {pipeline_mode = #tpu.pipeline_mode<synchronous>, transform_indices = @transform_7, window_bounds = array<i64: 128, 256>}, {pipeline_mode = #tpu.pipeline_mode<synchronous>, transform_indices = @transform_8, window_bounds = array<i64: 128, 128>}, {pipeline_mode = #tpu.pipeline_mode<synchronous>, transform_indices = @transform_9, window_bounds = array<i64: 128, 256>}, {pipeline_mode = #tpu.pipeline_mode<synchronous>, transform_indices = @transform_10, window_bounds = array<i64: 256, 128>}, {pipeline_mode = #tpu.pipeline_mode<synchronous>, transform_indices = @transform_11, window_bounds = array<i64: 128, 128>}, {transform_indices = @transform_12, window_bounds = array<i64: 1, 1, 256>}]} {
    %c0 = arith.constant 0 : index
    %c0_0 = arith.constant 0 : index
    %c0_1 = arith.constant 0 : index
    %0 = vector.load %arg1[%c0, %c0_0, %c0_1] : memref<1x256x48xbf16, #tpu.memory_space<vmem>>, vector<1x256x48xbf16>
    %1 = vector.shape_cast %0 : vector<1x256x48xbf16> to vector<256x48xbf16>
    %c0_2 = arith.constant 0 : index
    %c0_3 = arith.constant 0 : index
    %c0_4 = arith.constant 0 : index
    %2 = vector.load %arg2[%c0_2, %c0_3, %c0_4] : memref<1x16x128xbf16, #tpu.memory_space<vmem>>, vector<1x16x128xbf16>
    %3 = vector.shape_cast %2 : vector<1x16x128xbf16> to vector<16x128xbf16>
    %c0_5 = arith.constant 0 : index
    %c0_6 = arith.constant 0 : index
    %c0_7 = arith.constant 0 : index
    %4 = vector.load %arg3[%c0_5, %c0_6, %c0_7] : memref<1x1x16xf32, #tpu.memory_space<vmem>>, vector<1x1x16xf32>
    %5 = vector.shape_cast %4 : vector<1x1x16xf32> to vector<1x16xf32>
    %c0_8 = arith.constant 0 : index
    %c0_9 = arith.constant 0 : index
    %6 = vector.load %arg4[%c0_8, %c0_9] : memref<48x128xbf16, #tpu.memory_space<vmem>>, vector<48x128xbf16>
    %cst = arith.constant dense<0.000000e+00> : vector<256x128xf32>
    %7 = tpu.matmul %1, %6, %cst {dimension_numbers = #tpu.dot_dimension_numbers<[1], [0], [0], [1], [0, 0, 1, 1], [], []>} : vector<256x48xbf16>, vector<48x128xbf16>, vector<256x128xf32> -> vector<256x128xf32>
    %cst_10 = arith.constant dense<0.000000e+00> : vector<1xf32>
    %8 = vector.multi_reduction <add>, %5, %cst_10 [1] : vector<1x16xf32> to vector<1xf32>
    %9 = vector.shape_cast %8 : vector<1xf32> to vector<1x1xf32>
    %cst_11 = arith.constant 1.000000e+00 : f32
    %10 = vector.broadcast %cst_11 : f32 to vector<1x1xf32>
    %11 = arith.maximumf %9, %10 : vector<1x1xf32>
    %12 = arith.truncf %5 : vector<1x16xf32> to vector<1x16xbf16>
    %cst_12 = arith.constant dense<0.000000e+00> : vector<1x128xf32>
    %13 = tpu.matmul %12, %3, %cst_12 {dimension_numbers = #tpu.dot_dimension_numbers<[1], [0], [0], [1], [0, 0, 1, 1], [], []>} : vector<1x16xbf16>, vector<16x128xbf16>, vector<1x128xf32> -> vector<1x128xf32>
    %14 = tpu.reciprocal %11 {approx = true} : vector<1x1xf32> -> vector<1x1xf32>
    %15 = vector.broadcast %14 : vector<1x1xf32> to vector<1x128xf32>
    %16 = arith.mulf %13, %15 : vector<1x128xf32>
    %17 = arith.truncf %16 : vector<1x128xf32> to vector<1x128xbf16>
    %c0_13 = arith.constant 0 : index
    %c0_14 = arith.constant 0 : index
    %18 = vector.load %arg5[%c0_13, %c0_14] : memref<128x128xbf16, #tpu.memory_space<vmem>>, vector<128x128xbf16>
    %cst_15 = arith.constant dense<0.000000e+00> : vector<1x128xf32>
    %19 = tpu.matmul %17, %18, %cst_15 {dimension_numbers = #tpu.dot_dimension_numbers<[1], [0], [0], [1], [0, 0, 1, 1], [], []>} : vector<1x128xbf16>, vector<128x128xbf16>, vector<1x128xf32> -> vector<1x128xf32>
    %20 = arith.truncf %7 : vector<256x128xf32> to vector<256x128xbf16>
    %c0_16 = arith.constant 0 : index
    %c0_17 = arith.constant 0 : index
    %21 = vector.load %arg6[%c0_16, %c0_17] : memref<128x128xbf16, #tpu.memory_space<vmem>>, vector<128x128xbf16>
    %cst_18 = arith.constant dense<0.000000e+00> : vector<256x128xf32>
    %22 = tpu.matmul %20, %21, %cst_18 {dimension_numbers = #tpu.dot_dimension_numbers<[1], [0], [0], [1], [0, 0, 1, 1], [], []>} : vector<256x128xbf16>, vector<128x128xbf16>, vector<256x128xf32> -> vector<256x128xf32>
    %23 = vector.broadcast %19 : vector<1x128xf32> to vector<256x128xf32>
    %24 = arith.mulf %22, %23 : vector<256x128xf32>
    %25 = arith.truncf %24 : vector<256x128xf32> to vector<256x128xbf16>
    %c0_19 = arith.constant 0 : index
    %c0_20 = arith.constant 0 : index
    %26 = vector.load %arg7[%c0_19, %c0_20] : memref<128x128xbf16, #tpu.memory_space<vmem>>, vector<128x128xbf16>
    %cst_21 = arith.constant dense<0.000000e+00> : vector<256x128xf32>
    %27 = tpu.matmul %25, %26, %cst_21 {dimension_numbers = #tpu.dot_dimension_numbers<[1], [0], [0], [1], [0, 0, 1, 1], [], []>} : vector<256x128xbf16>, vector<128x128xbf16>, vector<256x128xf32> -> vector<256x128xf32>
    %c0_22 = arith.constant 0 : index
    %c0_23 = arith.constant 0 : index
    %28 = vector.load %arg8[%c0_22, %c0_23] : memref<128x256xbf16, #tpu.memory_space<vmem>>, vector<128x256xbf16>
    %cst_24 = arith.constant dense<0.000000e+00> : vector<16x256xf32>
    %29 = tpu.matmul %3, %28, %cst_24 {dimension_numbers = #tpu.dot_dimension_numbers<[1], [0], [0], [1], [0, 0, 1, 1], [], []>} : vector<16x128xbf16>, vector<128x256xbf16>, vector<16x256xf32> -> vector<16x256xf32>
    %30 = vector.extract_strided_slice %29 {offsets = [0, 0], sizes = [16, 128], strides = [1, 1]} : vector<16x256xf32> to vector<16x128xf32>
    %31 = vector.extract_strided_slice %29 {offsets = [0, 128], sizes = [16, 128], strides = [1, 1]} : vector<16x256xf32> to vector<16x128xf32>
    %32 = arith.truncf %27 : vector<256x128xf32> to vector<256x128xbf16>
    %33 = arith.truncf %30 : vector<16x128xf32> to vector<16x128xbf16>
    %cst_25 = arith.constant dense<0.000000e+00> : vector<256x16xf32>
    %34 = tpu.matmul %32, %33, %cst_25 {dimension_numbers = #tpu.dot_dimension_numbers<[1], [1], [0], [0], [0, 0, 1, 0], [], []>} : vector<256x128xbf16>, vector<16x128xbf16>, vector<256x16xf32> -> vector<256x16xf32>
    %cst_26 = arith.constant 0.0883883461 : f32
    %35 = vector.broadcast %cst_26 : f32 to vector<256x16xf32>
    %36 = arith.mulf %34, %35 : vector<256x16xf32>
    %cst_27 = arith.constant 0.000000e+00 : f32
    %37 = vector.broadcast %cst_27 : f32 to vector<1x16xf32>
    %38 = arith.cmpf ogt, %5, %37 : vector<1x16xf32>
    %cst_28 = arith.constant -1.000000e+09 : f32
    %39 = vector.shape_cast %38 : vector<1x16xi1> to vector<1x16xi1>
    %40 = vector.broadcast %39 : vector<1x16xi1> to vector<256x16xi1>
    %41 = vector.broadcast %cst_28 : f32 to vector<256x16xf32>
    %42 = arith.select %40, %36, %41 : vector<256x16xi1>, vector<256x16xf32>
    %cst_29 = arith.constant dense<0xFF800000> : vector<256xf32>
    %43 = vector.multi_reduction <maximumf>, %42, %cst_29 [1] : vector<256x16xf32> to vector<256xf32>
    %44 = vector.shape_cast %43 : vector<256xf32> to vector<256x1xf32>
    %45 = vector.broadcast %44 : vector<256x1xf32> to vector<256x16xf32>
    %46 = arith.subf %42, %45 : vector<256x16xf32>
    %47 = math.exp %46 : vector<256x16xf32>
    %48 = vector.broadcast %5 : vector<1x16xf32> to vector<256x16xf32>
    %49 = arith.mulf %47, %48 : vector<256x16xf32>
    %cst_30 = arith.constant dense<0.000000e+00> : vector<256xf32>
    %50 = vector.multi_reduction <add>, %49, %cst_30 [1] : vector<256x16xf32> to vector<256xf32>
    %51 = vector.shape_cast %50 : vector<256xf32> to vector<256x1xf32>
    %cst_31 = arith.constant 9.99999997E-7 : f32
    %52 = vector.broadcast %cst_31 : f32 to vector<256x1xf32>
    %53 = arith.maximumf %51, %52 : vector<256x1xf32>
    %54 = tpu.reciprocal %53 {approx = true} : vector<256x1xf32> -> vector<256x1xf32>
    %55 = vector.broadcast %54 : vector<256x1xf32> to vector<256x16xf32>
    %56 = arith.mulf %49, %55 : vector<256x16xf32>
    %57 = arith.truncf %56 : vector<256x16xf32> to vector<256x16xbf16>
    %58 = arith.truncf %31 : vector<16x128xf32> to vector<16x128xbf16>
    %cst_32 = arith.constant dense<0.000000e+00> : vector<256x128xf32>
    %59 = tpu.matmul %57, %58, %cst_32 {dimension_numbers = #tpu.dot_dimension_numbers<[1], [0], [0], [1], [0, 0, 1, 1], [], []>} : vector<256x16xbf16>, vector<16x128xbf16>, vector<256x128xf32> -> vector<256x128xf32>
    %60 = arith.truncf %59 : vector<256x128xf32> to vector<256x128xbf16>
    %c0_33 = arith.constant 0 : index
    %c0_34 = arith.constant 0 : index
    %61 = vector.load %arg9[%c0_33, %c0_34] : memref<128x128xbf16, #tpu.memory_space<vmem>>, vector<128x128xbf16>
    %cst_35 = arith.constant dense<0.000000e+00> : vector<256x128xf32>
    %62 = tpu.matmul %60, %61, %cst_35 {dimension_numbers = #tpu.dot_dimension_numbers<[1], [0], [0], [1], [0, 0, 1, 1], [], []>} : vector<256x128xbf16>, vector<128x128xbf16>, vector<256x128xf32> -> vector<256x128xf32>
    %63 = arith.addf %24, %62 : vector<256x128xf32>
    %cst_36 = arith.constant dense<0.000000e+00> : vector<256xf32>
    %64 = vector.multi_reduction <add>, %63, %cst_36 [1] : vector<256x128xf32> to vector<256xf32>
    %65 = vector.shape_cast %64 : vector<256xf32> to vector<256x1xf32>
    %cst_37 = arith.constant 1.280000e+02 : f32
    %66 = vector.broadcast %cst_37 : f32 to vector<256x1xf32>
    %67 = arith.divf %65, %66 : vector<256x1xf32>
    %68 = vector.broadcast %67 : vector<256x1xf32> to vector<256x128xf32>
    %69 = arith.subf %63, %68 : vector<256x128xf32>
    %70 = arith.mulf %69, %69 : vector<256x128xf32>
    %cst_38 = arith.constant dense<0.000000e+00> : vector<256xf32>
    %71 = vector.multi_reduction <add>, %70, %cst_38 [1] : vector<256x128xf32> to vector<256xf32>
    %72 = vector.shape_cast %71 : vector<256xf32> to vector<256x1xf32>
    %cst_39 = arith.constant 1.280000e+02 : f32
    %73 = vector.broadcast %cst_39 : f32 to vector<256x1xf32>
    %74 = arith.divf %72, %73 : vector<256x1xf32>
    %75 = vector.broadcast %67 : vector<256x1xf32> to vector<256x128xf32>
    %76 = arith.subf %63, %75 : vector<256x128xf32>
    %cst_40 = arith.constant 9.99999974E-6 : f32
    %77 = vector.broadcast %cst_40 : f32 to vector<256x1xf32>
    %78 = arith.addf %74, %77 : vector<256x1xf32>
    %79 = math.rsqrt %78 : vector<256x1xf32>
    %80 = vector.broadcast %79 : vector<256x1xf32> to vector<256x128xf32>
    %81 = arith.mulf %76, %80 : vector<256x128xf32>
    %82 = arith.truncf %81 : vector<256x128xf32> to vector<256x128xbf16>
    %c0_41 = arith.constant 0 : index
    %c0_42 = arith.constant 0 : index
    %83 = vector.load %arg10[%c0_41, %c0_42] : memref<128x256xbf16, #tpu.memory_space<vmem>>, vector<128x256xbf16>
    %cst_43 = arith.constant dense<0.000000e+00> : vector<256x256xf32>
    %84 = tpu.matmul %82, %83, %cst_43 {dimension_numbers = #tpu.dot_dimension_numbers<[1], [0], [0], [1], [0, 0, 1, 1], [], []>} : vector<256x128xbf16>, vector<128x256xbf16>, vector<256x256xf32> -> vector<256x256xf32>
    %cst_44 = arith.constant 0.000000e+00 : f32
    %85 = vector.broadcast %cst_44 : f32 to vector<256x256xf32>
    %86 = arith.maximumf %84, %85 : vector<256x256xf32>
    %87 = arith.truncf %86 : vector<256x256xf32> to vector<256x256xbf16>
    %c0_45 = arith.constant 0 : index
    %c0_46 = arith.constant 0 : index
    %88 = vector.load %arg11[%c0_45, %c0_46] : memref<256x128xbf16, #tpu.memory_space<vmem>>, vector<256x128xbf16>
    %cst_47 = arith.constant dense<0.000000e+00> : vector<256x128xf32>
    %89 = tpu.matmul %87, %88, %cst_47 {dimension_numbers = #tpu.dot_dimension_numbers<[1], [0], [0], [1], [0, 0, 1, 1], [], []>} : vector<256x256xbf16>, vector<256x128xbf16>, vector<256x128xf32> -> vector<256x128xf32>
    %90 = arith.addf %81, %89 : vector<256x128xf32>
    %cst_48 = arith.constant dense<0.000000e+00> : vector<256xf32>
    %91 = vector.multi_reduction <add>, %90, %cst_48 [1] : vector<256x128xf32> to vector<256xf32>
    %92 = vector.shape_cast %91 : vector<256xf32> to vector<256x1xf32>
    %cst_49 = arith.constant 1.280000e+02 : f32
    %93 = vector.broadcast %cst_49 : f32 to vector<256x1xf32>
    %94 = arith.divf %92, %93 : vector<256x1xf32>
    %95 = vector.broadcast %94 : vector<256x1xf32> to vector<256x128xf32>
    %96 = arith.subf %90, %95 : vector<256x128xf32>
    %97 = arith.mulf %96, %96 : vector<256x128xf32>
    %cst_50 = arith.constant dense<0.000000e+00> : vector<256xf32>
    %98 = vector.multi_reduction <add>, %97, %cst_50 [1] : vector<256x128xf32> to vector<256xf32>
    %99 = vector.shape_cast %98 : vector<256xf32> to vector<256x1xf32>
    %cst_51 = arith.constant 1.280000e+02 : f32
    %100 = vector.broadcast %cst_51 : f32 to vector<256x1xf32>
    %101 = arith.divf %99, %100 : vector<256x1xf32>
    %102 = vector.broadcast %94 : vector<256x1xf32> to vector<256x128xf32>
    %103 = arith.subf %90, %102 : vector<256x128xf32>
    %cst_52 = arith.constant 9.99999974E-6 : f32
    %104 = vector.broadcast %cst_52 : f32 to vector<256x1xf32>
    %105 = arith.addf %101, %104 : vector<256x1xf32>
    %106 = math.rsqrt %105 : vector<256x1xf32>
    %107 = vector.broadcast %106 : vector<256x1xf32> to vector<256x128xf32>
    %108 = arith.mulf %103, %107 : vector<256x128xf32>
    %109 = arith.truncf %19 : vector<1x128xf32> to vector<1x128xbf16>
    %c0_53 = arith.constant 0 : index
    %c0_54 = arith.constant 0 : index
    %110 = vector.load %arg12[%c0_53, %c0_54] : memref<128x128xbf16, #tpu.memory_space<vmem>>, vector<128x128xbf16>
    %cst_55 = arith.constant dense<0.000000e+00> : vector<1x128xf32>
    %111 = tpu.matmul %109, %110, %cst_55 {dimension_numbers = #tpu.dot_dimension_numbers<[1], [0], [0], [1], [0, 0, 1, 1], [], []>} : vector<1x128xbf16>, vector<128x128xbf16>, vector<1x128xf32> -> vector<1x128xf32>
    %112 = arith.truncf %111 : vector<1x128xf32> to vector<1x128xbf16>
    %113 = arith.truncf %108 : vector<256x128xf32> to vector<256x128xbf16>
    %cst_56 = arith.constant dense<0.000000e+00> : vector<1x256xf32>
    %114 = tpu.matmul %112, %113, %cst_56 {dimension_numbers = #tpu.dot_dimension_numbers<[1], [1], [0], [0], [0, 0, 1, 0], [], []>} : vector<1x128xbf16>, vector<256x128xbf16>, vector<1x256xf32> -> vector<1x256xf32>
    %c0_57 = arith.constant 0 : index
    %c0_58 = arith.constant 0 : index
    %c0_59 = arith.constant 0 : index
    %115 = vector.load %arg13[%c0_57, %c0_58, %c0_59] : memref<1x1x256xf32, #tpu.memory_space<vmem>>, vector<1x1x256xf32>
    %116 = vector.shape_cast %115 : vector<1x1x256xf32> to vector<1x256xf32>
    %117 = vector.shape_cast %114 : vector<1x256xf32> to vector<1x1x256xf32>
    tpu.vector_store %arg13[%c0_57, %c0_58, %c0_59], %117 {strides = array<i32>} : memref<1x1x256xf32, #tpu.memory_space<vmem>>, vector<1x1x256xf32>,
    return
  }
  func.func @transform_0(%arg0: i32) -> (i32, i32, i32) {
    %c0_i32 = arith.constant 0 : i32
    %c0_i32_0 = arith.constant 0 : i32
    %c0_i32_1 = arith.constant 0 : i32
    return %arg0, %c0_i32, %c0_i32_0 : i32, i32, i32
  }
  func.func @transform_1(%arg0: i32) -> (i32, i32, i32) {
    %c0_i32 = arith.constant 0 : i32
    %c0_i32_0 = arith.constant 0 : i32
    %c0_i32_1 = arith.constant 0 : i32
    return %arg0, %c0_i32, %c0_i32_0 : i32, i32, i32
  }
  func.func @transform_2(%arg0: i32) -> (i32, i32, i32) {
    %c0_i32 = arith.constant 0 : i32
    %c0_i32_0 = arith.constant 0 : i32
    %c0_i32_1 = arith.constant 0 : i32
    return %arg0, %c0_i32, %c0_i32_0 : i32, i32, i32
  }
  func.func @transform_3(%arg0: i32) -> (i32, i32) {
    %c0_i32 = arith.constant 0 : i32
    %c0_i32_0 = arith.constant 0 : i32
    %c0_i32_1 = arith.constant 0 : i32
    return %c0_i32, %c0_i32_0 : i32, i32
  }
  func.func @transform_4(%arg0: i32) -> (i32, i32) {
    %c0_i32 = arith.constant 0 : i32
    %c0_i32_0 = arith.constant 0 : i32
    %c0_i32_1 = arith.constant 0 : i32
    return %c0_i32, %c0_i32_0 : i32, i32
  }
  func.func @transform_5(%arg0: i32) -> (i32, i32) {
    %c0_i32 = arith.constant 0 : i32
    %c0_i32_0 = arith.constant 0 : i32
    %c0_i32_1 = arith.constant 0 : i32
    return %c0_i32, %c0_i32_0 : i32, i32
  }
  func.func @transform_6(%arg0: i32) -> (i32, i32) {
    %c0_i32 = arith.constant 0 : i32
    %c0_i32_0 = arith.constant 0 : i32
    %c0_i32_1 = arith.constant 0 : i32
    return %c0_i32, %c0_i32_0 : i32, i32
  }
  func.func @transform_7(%arg0: i32) -> (i32, i32) {
    %c0_i32 = arith.constant 0 : i32
    %c0_i32_0 = arith.constant 0 : i32
    %c0_i32_1 = arith.constant 0 : i32
    return %c0_i32, %c0_i32_0 : i32, i32
  }
  func.func @transform_8(%arg0: i32) -> (i32, i32) {
    %c0_i32 = arith.constant 0 : i32
    %c0_i32_0 = arith.constant 0 : i32
    %c0_i32_1 = arith.constant 0 : i32
    return %c0_i32, %c0_i32_0 : i32, i32
  }
  func.func @transform_9(%arg0: i32) -> (i32, i32) {
    %c0_i32 = arith.constant 0 : i32
    %c0_i32_0 = arith.constant 0 : i32
    %c0_i32_1 = arith.constant 0 : i32
    return %c0_i32, %c0_i32_0 : i32, i32
  }
  func.func @transform_10(%arg0: i32) -> (i32, i32) {
    %c0_i32 = arith.constant 0 : i32
    %c0_i32_0 = arith.constant 0 : i32
    %c0_i32_1 = arith.constant 0 : i32
    return %c0_i32, %c0_i32_0 : i32, i32
  }
  func.func @transform_11(%arg0: i32) -> (i32, i32) {
    %c0_i32 = arith.constant 0 : i32
    %c0_i32_0 = arith.constant 0 : i32
    %c0_i32_1 = arith.constant 0 : i32
    return %c0_i32, %c0_i32_0 : i32, i32
  }
  func.func @transform_12(%arg0: i32) -> (i32, i32, i32) {
    %c0_i32 = arith.constant 0 : i32
    %c0_i32_0 = arith.constant 0 : i32
    %c0_i32_1 = arith.constant 0 : i32
    return %arg0, %c0_i32, %c0_i32_0 : i32, i32, i32
  }
}

</mosaic_0001>

<llo_original>
// kernel: barleria_forward.1
$region0: #{barleria_forward.1}
  #allocation0 [shape = 'u32[]', space=smem, size = 0x4, offset = 0x4, fixed_abs, tag = 'smem constant byte address 0x4 - core index']
  #allocation1 [shape = 'u32[144,128]{1,0:T(1,128)}', space=vmem, size = 0x12000, scoped, tag = 'internal scratch']
  %s0 = inlined_call_operand.vmem [shape: bf16[2,256,48], index: 0, kind: input, shape index: {}]
  %s1 = inlined_call_operand.vmem [shape: bf16[2,16,128], index: 1, kind: input, shape index: {}]
  %s2 = inlined_call_operand.vmem [shape: f32[2,1,16], index: 2, kind: input, shape index: {}]
  %s3 = inlined_call_operand.vmem [shape: bf16[48,128], index: 3, kind: input, shape index: {}]
  %s4 = inlined_call_operand.vmem [shape: bf16[128,128], index: 4, kind: input, shape index: {}]
  %s5 = inlined_call_operand.vmem [shape: bf16[128,128], index: 5, kind: input, shape index: {}]
  %s6 = inlined_call_operand.vmem [shape: bf16[128,128], index: 6, kind: input, shape index: {}]
  %s7 = inlined_call_operand.vmem [shape: bf16[128,256], index: 7, kind: input, shape index: {}]
  %s8 = inlined_call_operand.vmem [shape: bf16[128,128], index: 8, kind: input, shape index: {}]
  %s9 = inlined_call_operand.vmem [shape: bf16[128,256], index: 9, kind: input, shape index: {}]
  %s10 = inlined_call_operand.vmem [shape: bf16[256,128], index: 10, kind: input, shape index: {}]
  %s11 = inlined_call_operand.vmem [shape: bf16[128,128], index: 11, kind: input, shape index: {}]
  %s12 = inlined_call_operand.vmem [shape: f32[2,1,256], index: 12, kind: output, shape index: {}]
  %s13 = sld [smem:[#allocation0]]
  $region81: #{barleria_forward.1} parent=0
    _
  %s15 = ssub.s32 1, %s13
  %s16 = scalar_select 0, %s15, %s13
  loop: start=0, step=1, limit=4
  $region2: #{barleria_forward.1} parent=0 // loop_pre_header
    _
  $region3: #{barleria_forward.1} parent=0 // loop_header
    %s18 = sphi 0, %s22
    %p19 = scmp.ge.s32.totalorder %s18, 4
    %s28 = sphi 0, %s30
    %s31 = sphi 0, %s28
    %s32 = sphi 0, %s31
    %s48 = sphi 0, %s32
    %s54 = sphi 0, %s56
    %s57 = sphi 0, %s54
    %s58 = sphi 0, %s57
    %s74 = sphi 0, %s58
    %s80 = sphi 0, %s82
    %s83 = sphi 0, %s80
    %s84 = sphi 0, %s83
    %s100 = sphi 0, %s84
    %s104 = sphi 0, %s104
    %s106 = sphi 0, %s104
    %s107 = sphi 0, %s106
    %s121 = sphi 0, %s107
    %s125 = sphi 0, %s125
    %s127 = sphi 0, %s125
    %s128 = sphi 0, %s127
    %s142 = sphi 0, %s128
    %s146 = sphi 0, %s146
    %s148 = sphi 0, %s146
    %s149 = sphi 0, %s148
    %s163 = sphi 0, %s149
    %s167 = sphi 0, %s167
    %s169 = sphi 0, %s167
    %s170 = sphi 0, %s169
    %s184 = sphi 0, %s170
    %s188 = sphi 0, %s188
    %s190 = sphi 0, %s188
    %s191 = sphi 0, %s190
    %s205 = sphi 0, %s191
    %s209 = sphi 0, %s209
    %s211 = sphi 0, %s209
    %s212 = sphi 0, %s211
    %s226 = sphi 0, %s212
    %s230 = sphi 0, %s230
    %s232 = sphi 0, %s230
    %s233 = sphi 0, %s232
    %s247 = sphi 0, %s233
    %s251 = sphi 0, %s251
    %s253 = sphi 0, %s251
    %s254 = sphi 0, %s253
    %s268 = sphi 0, %s254
    %s272 = sphi 0, %s272
    %s274 = sphi 0, %s272
    %s275 = sphi 0, %s274
    %s289 = sphi 0, %s275
    %s295 = sphi 0, %s297
    %s298 = sphi 0, %s295
    %s299 = sphi 0, %s298
    %s315 = sphi 0, %s299
  $region4: #{barleria_forward.1} parent=0 // loop_header_branch
    %21 = sbr.rel (%p19) target = $region8
  $region5: #{barleria_forward.1} parent=0 // loop_body
    %s23 = ssub.s32 %s18, 1
    %s24 = ssub.s32 %s18, 2
    %s25 = sadd.s32 %s18, 1
    %s26 = ssub.s32 %s18, %s25
    %p27 = scmp.eq.s32.totalorder %s26, 0
    %s29 = sadd.s32 %s28, 1
    %s30 = scalar_select %p27, %s28, %s29
    %p33 = pneg %p27
    %p34 = scmp.eq.s32.totalorder %s18, 1
    %p35 = por %p33, %p34
    %p36 = scmp.ne.s32.totalorder %s28, %s31
    %p37 = scmp.eq.s32.totalorder %s18, 0
    %p38 = por %p36, %p37
    %p39 = scmp.ne.s32.totalorder %s28, %s31
    %p40 = scmp.eq.s32.totalorder %s23, 1
    %p41 = por %p39, %p40
    %p42 = scmp.ne.s32.totalorder %s31, %s32
    %p43 = scmp.eq.s32.totalorder %s23, 0
    %p44 = por %p42, %p43
    %p45 = scmp.ne.s32.totalorder %s31, %s32
    %p46 = scmp.eq.s32.totalorder %s24, 1
    %p47 = por %p45, %p46
    %p49 = scmp.ne.s32.totalorder %s32, %s48
    %p50 = scmp.eq.s32.totalorder %s24, 0
    %p51 = por %p49, %p50
    %s52 = ssub.s32 %s18, %s25
    %p53 = scmp.eq.s32.totalorder %s52, 0
    %s55 = sadd.s32 %s54, 1
    %s56 = scalar_select %p53, %s54, %s55
    %p59 = pneg %p53
    %p60 = scmp.eq.s32.totalorder %s18, 1
    %p61 = por %p59, %p60
    %p62 = scmp.ne.s32.totalorder %s54, %s57
    %p63 = scmp.eq.s32.totalorder %s18, 0
    %p64 = por %p62, %p63
    %p65 = scmp.ne.s32.totalorder %s54, %s57
    %p66 = scmp.eq.s32.totalorder %s23, 1
    %p67 = por %p65, %p66
    %p68 = scmp.ne.s32.totalorder %s57, %s58
    %p69 = scmp.eq.s32.totalorder %s23, 0
    %p70 = por %p68, %p69
    %p71 = scmp.ne.s32.totalorder %s57, %s58
    %p72 = scmp.eq.s32.totalorder %s24, 1
    %p73 = por %p71, %p72
    %p75 = scmp.ne.s32.totalorder %s58, %s74
    %p76 = scmp.eq.s32.totalorder %s24, 0
    %p77 = por %p75, %p76
    %s78 = ssub.s32 %s18, %s25
    %p79 = scmp.eq.s32.totalorder %s78, 0
    %s81 = sadd.s32 %s80, 1
    %s82 = scalar_select %p79, %s80, %s81
    %p85 = pneg %p79
    %p86 = scmp.eq.s32.totalorder %s18, 1
    %p87 = por %p85, %p86
    %p88 = scmp.ne.s32.totalorder %s80, %s83
    %p89 = scmp.eq.s32.totalorder %s18, 0
    %p90 = por %p88, %p89
    %p91 = scmp.ne.s32.totalorder %s80, %s83
    %p92 = scmp.eq.s32.totalorder %s23, 1
    %p93 = por %p91, %p92
    %p94 = scmp.ne.s32.totalorder %s83, %s84
    %p95 = scmp.eq.s32.totalorder %s23, 0
    %p96 = por %p94, %p95
    %p97 = scmp.ne.s32.totalorder %s83, %s84
    %p98 = scmp.eq.s32.totalorder %s24, 1
    %p99 = por %p97, %p98
    %p101 = scmp.ne.s32.totalorder %s84, %s100
    %p102 = scmp.eq.s32.totalorder %s24, 0
    %p103 = por %p101, %p102
    %s105 = sadd.s32 %s104, 1
    %p108 = scmp.eq.s32.totalorder %s18, 1
    %p109 = scmp.ne.s32.totalorder %s104, %s106
    %p110 = scmp.eq.s32.totalorder %s18, 0
    %p111 = por %p109, %p110
    %p112 = scmp.ne.s32.totalorder %s104, %s106
    %p113 = scmp.eq.s32.totalorder %s23, 1
    %p114 = por %p112, %p113
    %p115 = scmp.ne.s32.totalorder %s106, %s107
    %p116 = scmp.eq.s32.totalorder %s23, 0
    %p117 = por %p115, %p116
    %p118 = scmp.ne.s32.totalorder %s106, %s107
    %p119 = scmp.eq.s32.totalorder %s24, 1
    %p120 = por %p118, %p119
    %p122 = scmp.ne.s32.totalorder %s107, %s121
    %p123 = scmp.eq.s32.totalorder %s24, 0
    %p124 = por %p122, %p123
    %s126 = sadd.s32 %s125, 1
    %p129 = scmp.eq.s32.totalorder %s18, 1
    %p130 = scmp.ne.s32.totalorder %s125, %s127
    %p131 = scmp.eq.s32.totalorder %s18, 0
    %p132 = por %p130, %p131
    %p133 = scmp.ne.s32.totalorder %s125, %s127
    %p134 = scmp.eq.s32.totalorder %s23, 1
    %p135 = por %p133, %p134
    %p136 = scmp.ne.s32.totalorder %s127, %s128
    %p137 = scmp.eq.s32.totalorder %s23, 0
    %p138 = por %p136, %p137
    %p139 = scmp.ne.s32.totalorder %s127, %s128
    %p140 = scmp.eq.s32.totalorder %s24, 1
    %p141 = por %p139, %p140
    %p143 = scmp.ne.s32.totalorder %s128, %s142
    %p144 = scmp.eq.s32.totalorder %s24, 0
    %p145 = por %p143, %p144
    %s147 = sadd.s32 %s146, 1
    %p150 = scmp.eq.s32.totalorder %s18, 1
    %p151 = scmp.ne.s32.totalorder %s146, %s148
    %p152 = scmp.eq.s32.totalorder %s18, 0
    %p153 = por %p151, %p152
    %p154 = scmp.ne.s32.totalorder %s146, %s148
    %p155 = scmp.eq.s32.totalorder %s23, 1
    %p156 = por %p154, %p155
    %p157 = scmp.ne.s32.totalorder %s148, %s149
    %p158 = scmp.eq.s32.totalorder %s23, 0
    %p159 = por %p157, %p158
    %p160 = scmp.ne.s32.totalorder %s148, %s149
    %p161 = scmp.eq.s32.totalorder %s24, 1
    %p162 = por %p160, %p161
    %p164 = scmp.ne.s32.totalorder %s149, %s163
    %p165 = scmp.eq.s32.totalorder %s24, 0
    %p166 = por %p164, %p165
    %s168 = sadd.s32 %s167, 1
    %p171 = scmp.eq.s32.totalorder %s18, 1
    %p172 = scmp.ne.s32.totalorder %s167, %s169
    %p173 = scmp.eq.s32.totalorder %s18, 0
    %p174 = por %p172, %p173
    %p175 = scmp.ne.s32.totalorder %s167, %s169
    %p176 = scmp.eq.s32.totalorder %s23, 1
    %p177 = por %p175, %p176
    %p178 = scmp.ne.s32.totalorder %s169, %s170
    %p179 = scmp.eq.s32.totalorder %s23, 0
    %p180 = por %p178, %p179
    %p181 = scmp.ne.s32.totalorder %s169, %s170
    %p182 = scmp.eq.s32.totalorder %s24, 1
    %p183 = por %p181, %p182
    %p185 = scmp.ne.s32.totalorder %s170, %s184
    %p186 = scmp.eq.s32.totalorder %s24, 0
    %p187 = por %p185, %p186
    %s189 = sadd.s32 %s188, 1
    %p192 = scmp.eq.s32.totalorder %s18, 1
    %p193 = scmp.ne.s32.totalorder %s188, %s190
    %p194 = scmp.eq.s32.totalorder %s18, 0
    %p195 = por %p193, %p194
    %p196 = scmp.ne.s32.totalorder %s188, %s190
    %p197 = scmp.eq.s32.totalorder %s23, 1
    %p198 = por %p196, %p197
    %p199 = scmp.ne.s32.totalorder %s190, %s191
    %p200 = scmp.eq.s32.totalorder %s23, 0
    %p201 = por %p199, %p200
    %p202 = scmp.ne.s32.totalorder %s190, %s191
    %p203 = scmp.eq.s32.totalorder %s24, 1
    %p204 = por %p202, %p203
    %p206 = scmp.ne.s32.totalorder %s191, %s205
    %p207 = scmp.eq.s32.totalorder %s24, 0
    %p208 = por %p206, %p207
    %s210 = sadd.s32 %s209, 1
    %p213 = scmp.eq.s32.totalorder %s18, 1
    %p214 = scmp.ne.s32.totalorder %s209, %s211
    %p215 = scmp.eq.s32.totalorder %s18, 0
    %p216 = por %p214, %p215
    %p217 = scmp.ne.s32.totalorder %s209, %s211
    %p218 = scmp.eq.s32.totalorder %s23, 1
    %p219 = por %p217, %p218
    %p220 = scmp.ne.s32.totalorder %s211, %s212
    %p221 = scmp.eq.s32.totalorder %s23, 0
    %p222 = por %p220, %p221
    %p223 = scmp.ne.s32.totalorder %s211, %s212
    %p224 = scmp.eq.s32.totalorder %s24, 1
    %p225 = por %p223, %p224
    %p227 = scmp.ne.s32.totalorder %s212, %s226
    %p228 = scmp.eq.s32.totalorder %s24, 0
    %p229 = por %p227, %p228
    %s231 = sadd.s32 %s230, 1
    %p234 = scmp.eq.s32.totalorder %s18, 1
    %p235 = scmp.ne.s32.totalorder %s230, %s232
    %p236 = scmp.eq.s32.totalorder %s18, 0
    %p237 = por %p235, %p236
    %p238 = scmp.ne.s32.totalorder %s230, %s232
    %p239 = scmp.eq.s32.totalorder %s23, 1
    %p240 = por %p238, %p239
    %p241 = scmp.ne.s32.totalorder %s232, %s233
    %p242 = scmp.eq.s32.totalorder %s23, 0
    %p243 = por %p241, %p242
    %p244 = scmp.ne.s32.totalorder %s232, %s233
    %p245 = scmp.eq.s32.totalorder %s24, 1
    %p246 = por %p244, %p245
    %p248 = scmp.ne.s32.totalorder %s233, %s247
    %p249 = scmp.eq.s32.totalorder %s24, 0
    %p250 = por %p248, %p249
    %s252 = sadd.s32 %s251, 1
    %p255 = scmp.eq.s32.totalorder %s18, 1
    %p256 = scmp.ne.s32.totalorder %s251, %s253
    %p257 = scmp.eq.s32.totalorder %s18, 0
    %p258 = por %p256, %p257
    %p259 = scmp.ne.s32.totalorder %s251, %s253
    %p260 = scmp.eq.s32.totalorder %s23, 1
    %p261 = por %p259, %p260
    %p262 = scmp.ne.s32.totalorder %s253, %s254
    %p263 = scmp.eq.s32.totalorder %s23, 0
    %p264 = por %p262, %p263
    %p265 = scmp.ne.s32.totalorder %s253, %s254
    %p266 = scmp.eq.s32.totalorder %s24, 1
    %p267 = por %p265, %p266
    %p269 = scmp.ne.s32.totalorder %s254, %s268
    %p270 = scmp.eq.s32.totalorder %s24, 0
    %p271 = por %p269, %p270
    %s273 = sadd.s32 %s272, 1
    %p276 = scmp.eq.s32.totalorder %s18, 1
    %p277 = scmp.ne.s32.totalorder %s272, %s274
    %p278 = scmp.eq.s32.totalorder %s18, 0
    %p279 = por %p277, %p278
    %p280 = scmp.ne.s32.totalorder %s272, %s274
    %p281 = scmp.eq.s32.totalorder %s23, 1
    %p282 = por %p280, %p281
    %p283 = scmp.ne.s32.totalorder %s274, %s275
    %p284 = scmp.eq.s32.totalorder %s23, 0
    %p285 = por %p283, %p284
    %p286 = scmp.ne.s32.totalorder %s274, %s275
    %p287 = scmp.eq.s32.totalorder %s24, 1
    %p288 = por %p286, %p287
    %p290 = scmp.ne.s32.totalorder %s275, %s289
    %p291 = scmp.eq.s32.totalorder %s24, 0
    %p292 = por %p290, %p291
    %s293 = ssub.s32 %s18, %s25
    %p294 = scmp.eq.s32.totalorder %s293, 0
    %s296 = sadd.s32 %s295, 1
    %s297 = scalar_select %p294, %s295, %s296
    %p300 = pneg %p294
    %p301 = scmp.eq.s32.totalorder %s18, 1
    %p302 = por %p300, %p301
    %p303 = scmp.ne.s32.totalorder %s295, %s298
    %p304 = scmp.eq.s32.totalorder %s18, 0
    %p305 = por %p303, %p304
    %p306 = scmp.ne.s32.totalorder %s295, %s298
    %p307 = scmp.eq.s32.totalorder %s23, 1
    %p308 = por %p306, %p307
    %p309 = scmp.ne.s32.totalorder %s298, %s299
    %p310 = scmp.eq.s32.totalorder %s23, 0
    %p311 = por %p309, %p310
    %p312 = scmp.ne.s32.totalorder %s298, %s299
    %p313 = scmp.eq.s32.totalorder %s24, 1
    %p314 = por %p312, %p313
    %p316 = scmp.ne.s32.totalorder %s299, %s315
    %p317 = scmp.eq.s32.totalorder %s24, 0
    %p318 = por %p316, %p317
    %p319 = scmp.le.s32.totalorder 1, %s18
    %p320 = scmp.lt.s32.totalorder %s18, 3
    %p321 = pnand %p319, %p320
    %p322 = pneg %p321
    // Predicated region
    $region9: #{barleria_forward.1} parent=5 // pred_check
      _
    $region10: #{barleria_forward.1} parent=5 // pred_check_branch
      %324 = sbr.rel (%p321) target = $region12
    $region11: #{barleria_forward.1} parent=5 // pred_region
      %s325 = ssub.s32 %s18, 1
      // Predicated region
      $region13: #{barleria_forward.1} parent=11 // pred_check
        %p326 = pneg %p117
      $region14: #{barleria_forward.1} parent=11 // pred_check_branch
        %328 = sbr.rel (%p326) target = $region16
      $region15: #{barleria_forward.1} parent=11 // pred_region
        _
      $region16: #{barleria_forward.1} parent=11 // pred_fallthru
        _
      // Predicated region
      $region17: #{barleria_forward.1} parent=11 // pred_check
        %p329 = pneg %p138
      $region18: #{barleria_forward.1} parent=11 // pred_check_branch
        %331 = sbr.rel (%p329) target = $region20
      $region19: #{barleria_forward.1} parent=11 // pred_region
        _
      $region20: #{barleria_forward.1} parent=11 // pred_fallthru
        _
      // Predicated region
      $region21: #{barleria_forward.1} parent=11 // pred_check
        %p332 = pneg %p159
      $region22: #{barleria_forward.1} parent=11 // pred_check_branch
        %334 = sbr.rel (%p332) target = $region24
      $region23: #{barleria_forward.1} parent=11 // pred_region
        _
      $region24: #{barleria_forward.1} parent=11 // pred_fallthru
        _
      // Predicated region
      $region25: #{barleria_forward.1} parent=11 // pred_check
        %p335 = pneg %p180
      $region26: #{barleria_forward.1} parent=11 // pred_check_branch
        %337 = sbr.rel (%p335) target = $region28
      $region27: #{barleria_forward.1} parent=11 // pred_region
        _
      $region28: #{barleria_forward.1} parent=11 // pred_fallthru
        _
      // Predicated region
      $region29: #{barleria_forward.1} parent=11 // pred_check
        %p338 = pneg %p201
      $region30: #{barleria_forward.1} parent=11 // pred_check_branch
        %340 = sbr.rel (%p338) target = $region32
      $region31: #{barleria_forward.1} parent=11 // pred_region
        _
      $region32: #{barleria_forward.1} parent=11 // pred_fallthru
        _
      // Predicated region
      $region33: #{barleria_forward.1} parent=11 // pred_check
        %p341 = pneg %p222
      $region34: #{barleria_forward.1} parent=11 // pred_check_branch
        %343 = sbr.rel (%p341) target = $region36
      $region35: #{barleria_forward.1} parent=11 // pred_region
        _
      $region36: #{barleria_forward.1} parent=11 // pred_fallthru
        _
      // Predicated region
      $region37: #{barleria_forward.1} parent=11 // pred_check
        %p344 = pneg %p243
      $region38: #{barleria_forward.1} parent=11 // pred_check_branch
        %346 = sbr.rel (%p344) target = $region40
      $region39: #{barleria_forward.1} parent=11 // pred_region
        _
      $region40: #{barleria_forward.1} parent=11 // pred_fallthru
        _
      // Predicated region
      $region41: #{barleria_forward.1} parent=11 // pred_check
        %p347 = pneg %p264
      $region42: #{barleria_forward.1} parent=11 // pred_check_branch
        %349 = sbr.rel (%p347) target = $region44
      $region43: #{barleria_forward.1} parent=11 // pred_region
        _
      $region44: #{barleria_forward.1} parent=11 // pred_fallthru
        _
      // Predicated region
      $region45: #{barleria_forward.1} parent=11 // pred_check
        %p350 = pneg %p285
      $region46: #{barleria_forward.1} parent=11 // pred_check_branch
        %352 = sbr.rel (%p350) target = $region48
      $region47: #{barleria_forward.1} parent=11 // pred_region
        _
      $region48: #{barleria_forward.1} parent=11 // pred_fallthru
        _
    $region12: #{barleria_forward.1} parent=5 // pred_fallthru
      _
    %p353 = scmp.lt.s32.totalorder %s18, 2
    // Predicated region
    $region49: #{barleria_forward.1} parent=5 // pred_check
      %p354 = pneg %p353
    $region50: #{barleria_forward.1} parent=5 // pred_check_branch
      %356 = sbr.rel (%p354) target = $region52
    $region51: #{barleria_forward.1} parent=5 // pred_region
      // Predicated region
      $region53: #{barleria_forward.1} parent=51 // pred_check
        %p357 = pneg %p38
      $region54: #{barleria_forward.1} parent=51 // pred_check_branch
        %359 = sbr.rel (%p357) target = $region56
      $region55: #{barleria_forward.1} parent=51 // pred_region
        %p360 = scmp.lt.s32.totalorder %s18, 1
        %s361 = scalar_select %p360, %s18, 1
        %s362 = smul.addr %s361, 32
        %s363 = smul.addr %s362, 4
        %s364 = scalar_lea.vmem %s0, %s363
      $region56: #{barleria_forward.1} parent=51 // pred_fallthru
        _
      // Predicated region
      $region57: #{barleria_forward.1} parent=51 // pred_check
        %p365 = pneg %p64
      $region58: #{barleria_forward.1} parent=51 // pred_check_branch
        %367 = sbr.rel (%p365) target = $region60
      $region59: #{barleria_forward.1} parent=51 // pred_region
        %p368 = scmp.lt.s32.totalorder %s18, 1
        %s369 = scalar_select %p368, %s18, 1
        %s370 = smul.addr %s369, 2
        %s371 = smul.addr %s370, 4
        %s372 = scalar_lea.vmem %s1, %s371
      $region60: #{barleria_forward.1} parent=51 // pred_fallthru
        _
      // Predicated region
      $region61: #{barleria_forward.1} parent=51 // pred_check
        %p373 = pneg %p90
      $region62: #{barleria_forward.1} parent=51 // pred_check_branch
        %375 = sbr.rel (%p373) target = $region64
      $region63: #{barleria_forward.1} parent=51 // pred_region
        %p376 = scmp.lt.s32.totalorder %s18, 1
        %s377 = scalar_select %p376, %s18, 1
        %s378 = scalar_lea.vmem %s2, %s377
      $region64: #{barleria_forward.1} parent=51 // pred_fallthru
        _
    $region52: #{barleria_forward.1} parent=5 // pred_fallthru
      _
    %p379 = scmp.le.s32.totalorder 1, %s18
    %p380 = scmp.lt.s32.totalorder %s18, 3
    %p381 = pnand %p379, %p380
    %p382 = pneg %p381
    // Predicated region
    $region65: #{barleria_forward.1} parent=5 // pred_check
      _
    $region66: #{barleria_forward.1} parent=5 // pred_check_branch
      %384 = sbr.rel (%p381) target = $region68
    $region67: #{barleria_forward.1} parent=5 // pred_region
      %s385 = ssub.s32 %s18, 1
      %p386 = scmp.lt.s32.totalorder %s23, 1
      %s387 = scalar_select %p386, %s23, 1
      %s388 = smul.addr %s387, 32
      %s389 = smul.addr %s388, 4
      %s390 = scalar_lea.vmem %s0, %s389
      %p391 = pneg %p44
      %p392 = pneg %p41
      %p393 = scmp.lt.s32.totalorder %s23, 1
      %s394 = scalar_select %p393, %s23, 1
      %s395 = smul.addr %s394, 2
      %s396 = smul.addr %s395, 4
      %s397 = scalar_lea.vmem %s1, %s396
      %p398 = pneg %p70
      %p399 = pneg %p67
      %p400 = scmp.lt.s32.totalorder %s23, 1
      %s401 = scalar_select %p400, %s23, 1
      %s402 = scalar_lea.vmem %s2, %s401
      %p403 = pneg %p96
      %p404 = pneg %p93
      %p405 = pneg %p117
      %p406 = pneg %p114
      %p407 = pneg %p138
      %p408 = pneg %p135
      %p409 = pneg %p159
      %p410 = pneg %p156
      %p411 = pneg %p180
      %p412 = pneg %p177
      %p413 = pneg %p201
      %p414 = pneg %p198
      %p415 = pneg %p222
      %p416 = pneg %p219
      %p417 = pneg %p243
      %p418 = pneg %p240
      %p419 = pneg %p264
      %p420 = pneg %p261
      %p421 = pneg %p285
      %p422 = pneg %p282
      %p423 = pneg %p311
      %p424 = pneg %p308
      %p425 = scmp.lt.s32.totalorder %s23, 1
      %s426 = scalar_select %p425, %s23, 1
      %s427 = smul.addr %s426, 2
      %s428 = scalar_lea.vmem %s12, %s427
      %p429 = scmp.lt.s32.totalorder %s23, 1
      %s430 = scalar_select %p429, %s23, 1
      %s431 = smul.addr %s430, 32
      %s432 = smul.addr %s431, 4
      %s433 = scalar_lea.vmem %s0, %s432
      %p434 = scmp.lt.s32.totalorder %s23, 1
      %s435 = scalar_select %p434, %s23, 1
      %s436 = smul.addr %s435, 2
      %s437 = smul.addr %s436, 4
      %s438 = scalar_lea.vmem %s1, %s437
      %p439 = scmp.lt.s32.totalorder %s23, 1
      %s440 = scalar_select %p439, %s23, 1
      %s441 = scalar_lea.vmem %s2, %s440
      %p442 = scmp.lt.s32.totalorder %s23, 1
      %s443 = scalar_select %p442, %s23, 1
      %s444 = smul.addr %s443, 2
      %s445 = scalar_lea.vmem %s12, %s444
      %v447 = vld [vmem:[%s433] sm:$0xf]
      %v448 = vld [vmem:[%s433 + $0x4] sm:$0xf]
      %v449 = vld [vmem:[%s433 + $0x8] sm:$0xf]
      %v450 = vld [vmem:[%s433 + $0xc] sm:$0xf]
      %v451 = vld [vmem:[%s433 + $0x10] sm:$0xf]
      %v452 = vld [vmem:[%s433 + $0x14] sm:$0xf]
      %v453 = vld [vmem:[%s433 + $0x18] sm:$0xf]
      %v454 = vld [vmem:[%s433 + $0x1c] sm:$0xf]
      %v455 = vld [vmem:[%s433 + $0x20] sm:$0xf]
      %v456 = vld [vmem:[%s433 + $0x24] sm:$0xf]
      %v457 = vld [vmem:[%s433 + $0x28] sm:$0xf]
      %v458 = vld [vmem:[%s433 + $0x2c] sm:$0xf]
      %v459 = vld [vmem:[%s433 + $0x30] sm:$0xf]
      %v460 = vld [vmem:[%s433 + $0x34] sm:$0xf]
      %v461 = vld [vmem:[%s433 + $0x38] sm:$0xf]
      %v462 = vld [vmem:[%s433 + $0x3c] sm:$0xf]
      %v463 = vld [vmem:[%s433 + $0x40] sm:$0xf]
      %v464 = vld [vmem:[%s433 + $0x44] sm:$0xf]
      %v465 = vld [vmem:[%s433 + $0x48] sm:$0xf]
      %v466 = vld [vmem:[%s433 + $0x4c] sm:$0xf]
      %v467 = vld [vmem:[%s433 + $0x50] sm:$0xf]
      %v468 = vld [vmem:[%s433 + $0x54] sm:$0xf]
      %v469 = vld [vmem:[%s433 + $0x58] sm:$0xf]
      %v470 = vld [vmem:[%s433 + $0x5c] sm:$0xf]
      %v471 = vld [vmem:[%s433 + $0x60] sm:$0xf]
      %v472 = vld [vmem:[%s433 + $0x64] sm:$0xf]
      %v473 = vld [vmem:[%s433 + $0x68] sm:$0xf]
      %v474 = vld [vmem:[%s433 + $0x6c] sm:$0xf]
      %v475 = vld [vmem:[%s433 + $0x70] sm:$0xf]
      %v476 = vld [vmem:[%s433 + $0x74] sm:$0xf]
      %v477 = vld [vmem:[%s433 + $0x78] sm:$0xf]
      %v478 = vld [vmem:[%s433 + $0x7c] sm:$0xf]
      %v479 = vld [vmem:[%s438] sm:$0xf]
      %v480 = vld [vmem:[%s438 + $0x4] sm:$0xf]
      %v481 = vld [vmem:[%s441] sm:$0x1]
      %v482 = vld [vmem:[%s3] sm:$0xf]
      %v483 = vld [vmem:[%s3 + $0x4] sm:$0xf]
      %v484 = vld [vmem:[%s3 + $0x8] sm:$0xf]
      %v485 = vld [vmem:[%s3 + $0xc] sm:$0xf]
      %v486 = vld [vmem:[%s3 + $0x10] sm:$0xf]
      %v487 = vld [vmem:[%s3 + $0x14] sm:$0xf]
      %v520 = vunpack.c.l.b16 %v447
      %v521 = vunpack.c.l.b16 %v448
      %v522 = vunpack.c.l.b16 %v449
      %v523 = vunpack.c.l.b16 %v450
      %v524 = vunpack.c.l.b16 %v451
      %v525 = vunpack.c.l.b16 %v452
      %v526 = vunpack.c.l.b16 %v453
      %v527 = vunpack.c.l.b16 %v454
      %v528 = vunpack.c.l.b16 %v455
      %v529 = vunpack.c.l.b16 %v456
      %v530 = vunpack.c.l.b16 %v457
      %v531 = vunpack.c.l.b16 %v458
      %v532 = vunpack.c.l.b16 %v459
      %v533 = vunpack.c.l.b16 %v460
      %v534 = vunpack.c.l.b16 %v461
      %v535 = vunpack.c.l.b16 %v462
      %v536 = vunpack.c.l.b16 %v463
      %v537 = vunpack.c.l.b16 %v464
      %v538 = vunpack.c.l.b16 %v465
      %v539 = vunpack.c.l.b16 %v466
      %v540 = vunpack.c.l.b16 %v467
      %v541 = vunpack.c.l.b16 %v468
      %v542 = vunpack.c.l.b16 %v469
      %v543 = vunpack.c.l.b16 %v470
      %v544 = vunpack.c.l.b16 %v471
      %v545 = vunpack.c.l.b16 %v472
      %v546 = vunpack.c.l.b16 %v473
      %v547 = vunpack.c.l.b16 %v474
      %v548 = vunpack.c.l.b16 %v475
      %v549 = vunpack.c.l.b16 %v476
      %v550 = vunpack.c.l.b16 %v477
      %v551 = vunpack.c.l.b16 %v478
      %v552 = vpack.c.b16 %v521, %v520
      %v553 = vpack.c.b16 %v523, %v522
      %v554 = vpack.c.b16 %v525, %v524
      %v555 = vpack.c.b16 %v527, %v526
      %v556 = vpack.c.b16 %v529, %v528
      %v557 = vpack.c.b16 %v531, %v530
      %v558 = vpack.c.b16 %v533, %v532
      %v559 = vpack.c.b16 %v535, %v534
      %v560 = vpack.c.b16 %v537, %v536
      %v561 = vpack.c.b16 %v539, %v538
      %v562 = vpack.c.b16 %v541, %v540
      %v563 = vpack.c.b16 %v543, %v542
      %v564 = vpack.c.b16 %v545, %v544
      %v565 = vpack.c.b16 %v547, %v546
      %v566 = vpack.c.b16 %v549, %v548
      %v567 = vpack.c.b16 %v551, %v550
      %v574 = vunpack.c.l.b16 %v482
      %v575 = vunpack.c.l.b16 %v483
      %v576 = vunpack.c.l.b16 %v484
      %v577 = vunpack.c.l.b16 %v485
      %v578 = vunpack.c.l.b16 %v486
      %v579 = vunpack.c.l.b16 %v487
      %v580 = vpack.c.b16 %v575, %v574
      %v581 = vpack.c.b16 %v577, %v576
      %v582 = vpack.c.b16 %v579, %v578
      %vm586 = vcmask 392192
      %v588 = vsel %vm586, %v552, 0
      %v591 = vsel %vm586, %v553, 0
      %v594 = vsel %vm586, %v554, 0
      %v597 = vsel %vm586, %v555, 0
      %v600 = vsel %vm586, %v556, 0
      %v603 = vsel %vm586, %v557, 0
      %v606 = vsel %vm586, %v558, 0
      %v609 = vsel %vm586, %v559, 0
      %v612 = vsel %vm586, %v560, 0
      %v615 = vsel %vm586, %v561, 0
      %v618 = vsel %vm586, %v562, 0
      %v621 = vsel %vm586, %v563, 0
      %v624 = vsel %vm586, %v564, 0
      %v627 = vsel %vm586, %v565, 0
      %v630 = vsel %vm586, %v566, 0
      %v633 = vsel %vm586, %v567, 0
      %635 = vmatprep.subr.bf16.mxu0 0
      %636 = vmatpush1.bf16.msra.mxu0 0
      %637 = vmatprep.subr.bf16.mxu0 0
      %638 = vmatpush1.bf16.msra.mxu0 0
      %639 = vmatprep.subr.bf16.mxu0 0
      %640 = vmatpush1.bf16.msra.mxu0 0
      %641 = vmatprep.subr.bf16.mxu0 0
      %642 = vmatpush1.bf16.msra.mxu0 0
      %643 = vmatprep.subr.bf16.mxu0 0
      %644 = vmatpush1.bf16.msra.mxu0 0
      %645 = vmatprep.subr.bf16.mxu0 0
      %646 = vmatpush1.bf16.msra.mxu0 %v582
      %647 = vmatprep.subr.bf16.mxu0 0
      %648 = vmatpush1.bf16.msra.mxu0 %v581
      %649 = vmatprep.subr.bf16.mxu0 0
      %650 = vmatpush1.bf16.msra.mxu0 %v580
      %651 = vmatprep.subr.bf16.mxu0 0
      %652 = vmatpush2.bf16.msra.mxu0 0
      %653 = vmatprep.subr.bf16.mxu0 0
      %654 = vmatpush2.bf16.msra.mxu0 0
      %655 = vmatprep.subr.bf16.mxu0 0
      %656 = vmatpush2.bf16.msra.mxu0 0
      %657 = vmatprep.subr.bf16.mxu0 0
      %658 = vmatpush2.bf16.msra.mxu0 0
      %659 = vmatprep.subr.bf16.mxu0 0
      %660 = vmatpush2.bf16.msra.mxu0 0
      %661 = vmatprep.subr.bf16.mxu0 0
      %662 = vmatpush2.bf16.msra.mxu0 0
      %663 = vmatprep.subr.bf16.mxu0 0
      %664 = vmatpush2.bf16.msra.mxu0 0
      %665 = vmatprep.subr.bf16.mxu0 0
      %666 = vmatpush2.bf16.msra.mxu0 0
      %667 = vmatprep.mubr.bf16.mxu0 0
      %668 = vmatmul.mubr.bf16.gmra.mxu0 %v588
      %v669 = vpop.f32.mrf.mxu0
      %v670 = vadd.f32 0.0, %v669
      %v671 = vpop.f32.mrf.mxu0
      %v672 = vpop.f32.mrf.mxu0
      %v673 = vadd.f32 0.0, %v672
      %v674 = vpop.f32.mrf.mxu0
      %675 = vmatprep.mubr.bf16.mxu0 0
      %676 = vmatmul.mubr.bf16.gmra.mxu0 %v591
      %v677 = vpop.f32.mrf.mxu0
      %v678 = vadd.f32 0.0, %v677
      %v679 = vpop.f32.mrf.mxu0
      %v680 = vpop.f32.mrf.mxu0
      %v681 = vadd.f32 0.0, %v680
      %v682 = vpop.f32.mrf.mxu0
      %683 = vmatprep.mubr.bf16.mxu0 0
      %684 = vmatmul.mubr.bf16.gmra.mxu0 %v594
      %v685 = vpop.f32.mrf.mxu0
      %v686 = vadd.f32 0.0, %v685
      %v687 = vpop.f32.mrf.mxu0
      %v688 = vpop.f32.mrf.mxu0
      %v689 = vadd.f32 0.0, %v688
      %v690 = vpop.f32.mrf.mxu0
      %691 = vmatprep.mubr.bf16.mxu0 0
      %692 = vmatmul.mubr.bf16.gmra.mxu0 %v597
      %v693 = vpop.f32.mrf.mxu0
      %v694 = vadd.f32 0.0, %v693
      %v695 = vpop.f32.mrf.mxu0
      %v696 = vpop.f32.mrf.mxu0
      %v697 = vadd.f32 0.0, %v696
      %v698 = vpop.f32.mrf.mxu0
      %699 = vmatprep.mubr.bf16.mxu0 0
      %700 = vmatmul.mubr.bf16.gmra.mxu0 %v600
      %v701 = vpop.f32.mrf.mxu0
      %v702 = vadd.f32 0.0, %v701
      %v703 = vpop.f32.mrf.mxu0
      %v704 = vpop.f32.mrf.mxu0
      %v705 = vadd.f32 0.0, %v704
      %v706 = vpop.f32.mrf.mxu0
      %707 = vmatprep.mubr.bf16.mxu0 0
      %708 = vmatmul.mubr.bf16.gmra.mxu0 %v603
      %v709 = vpop.f32.mrf.mxu0
      %v710 = vadd.f32 0.0, %v709
      %v711 = vpop.f32.mrf.mxu0
      %v712 = vpop.f32.mrf.mxu0
      %v713 = vadd.f32 0.0, %v712
      %v714 = vpop.f32.mrf.mxu0
      %715 = vmatprep.mubr.bf16.mxu0 0
      %716 = vmatmul.mubr.bf16.gmra.mxu0 %v606
      %v717 = vpop.f32.mrf.mxu0
      %v718 = vadd.f32 0.0, %v717
      %v719 = vpop.f32.mrf.mxu0
      %v720 = vpop.f32.mrf.mxu0
      %v721 = vadd.f32 0.0, %v720
      %v722 = vpop.f32.mrf.mxu0
      %723 = vmatprep.mubr.bf16.mxu0 0
      %724 = vmatmul.mubr.bf16.gmra.mxu0 %v609
      %v725 = vpop.f32.mrf.mxu0
      %v726 = vadd.f32 0.0, %v725
      %v727 = vpop.f32.mrf.mxu0
      %v728 = vpop.f32.mrf.mxu0
      %v729 = vadd.f32 0.0, %v728
      %v730 = vpop.f32.mrf.mxu0
      %731 = vmatprep.mubr.bf16.mxu0 0
      %732 = vmatmul.mubr.bf16.gmra.mxu0 %v612
      %v733 = vpop.f32.mrf.mxu0
      %v734 = vadd.f32 0.0, %v733
      %v735 = vpop.f32.mrf.mxu0
      %v736 = vpop.f32.mrf.mxu0
      %v737 = vadd.f32 0.0, %v736
      %v738 = vpop.f32.mrf.mxu0
      %739 = vmatprep.mubr.bf16.mxu0 0
      %740 = vmatmul.mubr.bf16.gmra.mxu0 %v615
      %v741 = vpop.f32.mrf.mxu0
      %v742 = vadd.f32 0.0, %v741
      %v743 = vpop.f32.mrf.mxu0
      %v744 = vpop.f32.mrf.mxu0
      %v745 = vadd.f32 0.0, %v744
      %v746 = vpop.f32.mrf.mxu0
      %747 = vmatprep.mubr.bf16.mxu0 0
      %748 = vmatmul.mubr.bf16.gmra.mxu0 %v618
      %v749 = vpop.f32.mrf.mxu0
      %v750 = vadd.f32 0.0, %v749
      %v751 = vpop.f32.mrf.mxu0
      %v752 = vpop.f32.mrf.mxu0
      %v753 = vadd.f32 0.0, %v752
      %v754 = vpop.f32.mrf.mxu0
      %755 = vmatprep.mubr.bf16.mxu0 0
      %756 = vmatmul.mubr.bf16.gmra.mxu0 %v621
      %v757 = vpop.f32.mrf.mxu0
      %v758 = vadd.f32 0.0, %v757
      %v759 = vpop.f32.mrf.mxu0
      %v760 = vpop.f32.mrf.mxu0
      %v761 = vadd.f32 0.0, %v760
      %v762 = vpop.f32.mrf.mxu0
      %763 = vmatprep.mubr.bf16.mxu0 0
      %764 = vmatmul.mubr.bf16.gmra.mxu0 %v624
      %v765 = vpop.f32.mrf.mxu0
      %v766 = vadd.f32 0.0, %v765
      %v767 = vpop.f32.mrf.mxu0
      %v768 = vpop.f32.mrf.mxu0
      %v769 = vadd.f32 0.0, %v768
      %v770 = vpop.f32.mrf.mxu0
      %771 = vmatprep.mubr.bf16.mxu0 0
      %772 = vmatmul.mubr.bf16.gmra.mxu0 %v627
      %v773 = vpop.f32.mrf.mxu0
      %v774 = vadd.f32 0.0, %v773
      %v775 = vpop.f32.mrf.mxu0
      %v776 = vpop.f32.mrf.mxu0
      %v777 = vadd.f32 0.0, %v776
      %v778 = vpop.f32.mrf.mxu0
      %779 = vmatprep.mubr.bf16.mxu0 0
      %780 = vmatmul.mubr.bf16.gmra.mxu0 %v630
      %v781 = vpop.f32.mrf.mxu0
      %v782 = vadd.f32 0.0, %v781
      %v783 = vpop.f32.mrf.mxu0
      %v784 = vpop.f32.mrf.mxu0
      %v785 = vadd.f32 0.0, %v784
      %v786 = vpop.f32.mrf.mxu0
      %787 = vmatprep.mubr.bf16.mxu0 0
      %788 = vmatmul.mubr.bf16.gmra.mxu0 %v633
      %v789 = vpop.f32.mrf.mxu0
      %v790 = vadd.f32 0.0, %v789
      %v791 = vpop.f32.mrf.mxu0
      %v792 = vpop.f32.mrf.mxu0
      %v793 = vadd.f32 0.0, %v792
      %v794 = vpop.f32.mrf.mxu0
      %795 = vdwg.mxu0
      %vm796 = vcmask 122880
      %v797 = vsel %vm796, %v481, 0.0
      %798 = vadd.xlane.f32.xlu0 %v797
      %v799 = vpop.xlane.xlu0 %798
      %v800 = vmax.f32 %v799, 1.0
      %v801 = vpack.c.bf16 %v481, %v481
      %v804 = vunpack.c.l.b16 %v479
      %v805 = vunpack.c.l.b16 %v480
      %v806 = vpack.c.b16 %v805, %v804
      %vm808 = vcmask 130048
      %v810 = vsel %vm808, %v801, 0
      %812 = vmatprep.subr.bf16.mxu0 0
      %813 = vmatpush1.bf16.msra.mxu0 0
      %814 = vmatprep.subr.bf16.mxu0 0
      %815 = vmatpush1.bf16.msra.mxu0 0
      %816 = vmatprep.subr.bf16.mxu0 0
      %817 = vmatpush1.bf16.msra.mxu0 0
      %818 = vmatprep.subr.bf16.mxu0 0
      %819 = vmatpush1.bf16.msra.mxu0 0
      %820 = vmatprep.subr.bf16.mxu0 0
      %821 = vmatpush1.bf16.msra.mxu0 0
      %822 = vmatprep.subr.bf16.mxu0 0
      %823 = vmatpush1.bf16.msra.mxu0 0
      %824 = vmatprep.subr.bf16.mxu0 0
      %825 = vmatpush1.bf16.msra.mxu0 0
      %826 = vmatprep.subr.bf16.mxu0 0
      %827 = vmatpush1.bf16.msra.mxu0 %v806
      %828 = vmatprep.subr.bf16.mxu0 0
      %829 = vmatpush2.bf16.msra.mxu0 0
      %830 = vmatprep.subr.bf16.mxu0 0
      %831 = vmatpush2.bf16.msra.mxu0 0
      %832 = vmatprep.subr.bf16.mxu0 0
      %833 = vmatpush2.bf16.msra.mxu0 0
      %834 = vmatprep.subr.bf16.mxu0 0
      %835 = vmatpush2.bf16.msra.mxu0 0
      %836 = vmatprep.subr.bf16.mxu0 0
      %837 = vmatpush2.bf16.msra.mxu0 0
      %838 = vmatprep.subr.bf16.mxu0 0
      %839 = vmatpush2.bf16.msra.mxu0 0
      %840 = vmatprep.subr.bf16.mxu0 0
      %841 = vmatpush2.bf16.msra.mxu0 0
      %842 = vmatprep.subr.bf16.mxu0 0
      %843 = vmatpush2.bf16.msra.mxu0 0
      %844 = vmatprep.mubr.bf16.mxu0 0
      %845 = vmatmul.mubr.bf16.gmra.mxu0 %v810
      %v846 = vpop.f32.mrf.mxu0
      %v847 = vadd.f32 0.0, %v846
      %v848 = vpop.f32.mrf.mxu0
      %v849 = vpop.f32.mrf.mxu0
      %v850 = vpop.f32.mrf.mxu0
      %851 = vdwg.mxu0
      %v852 = vrcp.pop %v800
      %v853 = vmul.f32 %v847, %v852
      %v854 = vpack.c.bf16 %v853, %v853
      %v855 = vld [vmem:[%s4] sm:$0xf]
      %v856 = vld [vmem:[%s4 + $0x4] sm:$0xf]
      %v857 = vld [vmem:[%s4 + $0x8] sm:$0xf]
      %v858 = vld [vmem:[%s4 + $0xc] sm:$0xf]
      %v859 = vld [vmem:[%s4 + $0x10] sm:$0xf]
      %v860 = vld [vmem:[%s4 + $0x14] sm:$0xf]
      %v861 = vld [vmem:[%s4 + $0x18] sm:$0xf]
      %v862 = vld [vmem:[%s4 + $0x1c] sm:$0xf]
      %v863 = vld [vmem:[%s4 + $0x20] sm:$0xf]
      %v864 = vld [vmem:[%s4 + $0x24] sm:$0xf]
      %v865 = vld [vmem:[%s4 + $0x28] sm:$0xf]
      %v866 = vld [vmem:[%s4 + $0x2c] sm:$0xf]
      %v867 = vld [vmem:[%s4 + $0x30] sm:$0xf]
      %v868 = vld [vmem:[%s4 + $0x34] sm:$0xf]
      %v869 = vld [vmem:[%s4 + $0x38] sm:$0xf]
      %v870 = vld [vmem:[%s4 + $0x3c] sm:$0xf]
      %v887 = vunpack.c.l.b16 %v855
      %v888 = vunpack.c.l.b16 %v856
      %v889 = vunpack.c.l.b16 %v857
      %v890 = vunpack.c.l.b16 %v858
      %v891 = vunpack.c.l.b16 %v859
      %v892 = vunpack.c.l.b16 %v860
      %v893 = vunpack.c.l.b16 %v861
      %v894 = vunpack.c.l.b16 %v862
      %v895 = vunpack.c.l.b16 %v863
      %v896 = vunpack.c.l.b16 %v864
      %v897 = vunpack.c.l.b16 %v865
      %v898 = vunpack.c.l.b16 %v866
      %v899 = vunpack.c.l.b16 %v867
      %v900 = vunpack.c.l.b16 %v868
      %v901 = vunpack.c.l.b16 %v869
      %v902 = vunpack.c.l.b16 %v870
      %v903 = vpack.c.b16 %v888, %v887
      %v904 = vpack.c.b16 %v890, %v889
      %v905 = vpack.c.b16 %v892, %v891
      %v906 = vpack.c.b16 %v894, %v893
      %v907 = vpack.c.b16 %v896, %v895
      %v908 = vpack.c.b16 %v898, %v897
      %v909 = vpack.c.b16 %v900, %v899
      %v910 = vpack.c.b16 %v902, %v901
      %919 = vmatprep.subr.bf16.mxu0 0
      %920 = vmatpush1.bf16.msra.mxu0 %v910
      %921 = vmatprep.subr.bf16.mxu0 0
      %922 = vmatpush1.bf16.msra.mxu0 %v909
      %923 = vmatprep.subr.bf16.mxu0 0
      %924 = vmatpush1.bf16.msra.mxu0 %v908
      %925 = vmatprep.subr.bf16.mxu0 0
      %926 = vmatpush1.bf16.msra.mxu0 %v907
      %927 = vmatprep.subr.bf16.mxu0 0
      %928 = vmatpush1.bf16.msra.mxu0 %v906
      %929 = vmatprep.subr.bf16.mxu0 0
      %930 = vmatpush1.bf16.msra.mxu0 %v905
      %931 = vmatprep.subr.bf16.mxu0 0
      %932 = vmatpush1.bf16.msra.mxu0 %v904
      %933 = vmatprep.subr.bf16.mxu0 0
      %934 = vmatpush1.bf16.msra.mxu0 %v903
      %935 = vmatprep.subr.bf16.mxu0 0
      %936 = vmatpush2.bf16.msra.mxu0 0
      %937 = vmatprep.subr.bf16.mxu0 0
      %938 = vmatpush2.bf16.msra.mxu0 0
      %939 = vmatprep.subr.bf16.mxu0 0
      %940 = vmatpush2.bf16.msra.mxu0 0
      %941 = vmatprep.subr.bf16.mxu0 0
      %942 = vmatpush2.bf16.msra.mxu0 0
      %943 = vmatprep.subr.bf16.mxu0 0
      %944 = vmatpush2.bf16.msra.mxu0 0
      %945 = vmatprep.subr.bf16.mxu0 0
      %946 = vmatpush2.bf16.msra.mxu0 0
      %947 = vmatprep.subr.bf16.mxu0 0
      %948 = vmatpush2.bf16.msra.mxu0 0
      %949 = vmatprep.subr.bf16.mxu0 0
      %950 = vmatpush2.bf16.msra.mxu0 0
      %951 = vmatprep.mubr.bf16.mxu0 0
      %952 = vmatmul.mubr.bf16.gmra.mxu0 %v854
      %v953 = vpop.f32.mrf.mxu0
      %v954 = vadd.f32 0.0, %v953
      %v955 = vpop.f32.mrf.mxu0
      %v956 = vpop.f32.mrf.mxu0
      %v957 = vpop.f32.mrf.mxu0
      %958 = vdwg.mxu0
      %v959 = vpack.c.bf16 %v673, %v670
      %v960 = vpack.c.bf16 %v681, %v678
      %v961 = vpack.c.bf16 %v689, %v686
      %v962 = vpack.c.bf16 %v697, %v694
      %v963 = vpack.c.bf16 %v705, %v702
      %v964 = vpack.c.bf16 %v713, %v710
      %v965 = vpack.c.bf16 %v721, %v718
      %v966 = vpack.c.bf16 %v729, %v726
      %v967 = vpack.c.bf16 %v737, %v734
      %v968 = vpack.c.bf16 %v745, %v742
      %v969 = vpack.c.bf16 %v753, %v750
      %v970 = vpack.c.bf16 %v761, %v758
      %v971 = vpack.c.bf16 %v769, %v766
      %v972 = vpack.c.bf16 %v777, %v774
      %v973 = vpack.c.bf16 %v785, %v782
      %v974 = vpack.c.bf16 %v793, %v790
      %v975 = vld [vmem:[%s5] sm:$0xf]
      %v976 = vld [vmem:[%s5 + $0x4] sm:$0xf]
      %v977 = vld [vmem:[%s5 + $0x8] sm:$0xf]
      %v978 = vld [vmem:[%s5 + $0xc] sm:$0xf]
      %v979 = vld [vmem:[%s5 + $0x10] sm:$0xf]
      %v980 = vld [vmem:[%s5 + $0x14] sm:$0xf]
      %v981 = vld [vmem:[%s5 + $0x18] sm:$0xf]
      %v982 = vld [vmem:[%s5 + $0x1c] sm:$0xf]
      %v983 = vld [vmem:[%s5 + $0x20] sm:$0xf]
      %v984 = vld [vmem:[%s5 + $0x24] sm:$0xf]
      %v985 = vld [vmem:[%s5 + $0x28] sm:$0xf]
      %v986 = vld [vmem:[%s5 + $0x2c] sm:$0xf]
      %v987 = vld [vmem:[%s5 + $0x30] sm:$0xf]
      %v988 = vld [vmem:[%s5 + $0x34] sm:$0xf]
      %v989 = vld [vmem:[%s5 + $0x38] sm:$0xf]
      %v990 = vld [vmem:[%s5 + $0x3c] sm:$0xf]
      %v1007 = vunpack.c.l.b16 %v975
      %v1008 = vunpack.c.l.b16 %v976
      %v1009 = vunpack.c.l.b16 %v977
      %v1010 = vunpack.c.l.b16 %v978
      %v1011 = vunpack.c.l.b16 %v979
      %v1012 = vunpack.c.l.b16 %v980
      %v1013 = vunpack.c.l.b16 %v981
      %v1014 = vunpack.c.l.b16 %v982
      %v1015 = vunpack.c.l.b16 %v983
      %v1016 = vunpack.c.l.b16 %v984
      %v1017 = vunpack.c.l.b16 %v985
      %v1018 = vunpack.c.l.b16 %v986
      %v1019 = vunpack.c.l.b16 %v987
      %v1020 = vunpack.c.l.b16 %v988
      %v1021 = vunpack.c.l.b16 %v989
      %v1022 = vunpack.c.l.b16 %v990
      %v1023 = vpack.c.b16 %v1008, %v1007
      %v1024 = vpack.c.b16 %v1010, %v1009
      %v1025 = vpack.c.b16 %v1012, %v1011
      %v1026 = vpack.c.b16 %v1014, %v1013
      %v1027 = vpack.c.b16 %v1016, %v1015
      %v1028 = vpack.c.b16 %v1018, %v1017
      %v1029 = vpack.c.b16 %v1020, %v1019
      %v1030 = vpack.c.b16 %v1022, %v1021
      %1039 = vmatprep.subr.bf16.mxu0 0
      %1040 = vmatpush1.bf16.msra.mxu0 %v1030
      %1041 = vmatprep.subr.bf16.mxu0 0
      %1042 = vmatpush1.bf16.msra.mxu0 %v1029
      %1043 = vmatprep.subr.bf16.mxu0 0
      %1044 = vmatpush1.bf16.msra.mxu0 %v1028
      %1045 = vmatprep.subr.bf16.mxu0 0
      %1046 = vmatpush1.bf16.msra.mxu0 %v1027
      %1047 = vmatprep.subr.bf16.mxu0 0
      %1048 = vmatpush1.bf16.msra.mxu0 %v1026
      %1049 = vmatprep.subr.bf16.mxu0 0
      %1050 = vmatpush1.bf16.msra.mxu0 %v1025
      %1051 = vmatprep.subr.bf16.mxu0 0
      %1052 = vmatpush1.bf16.msra.mxu0 %v1024
      %1053 = vmatprep.subr.bf16.mxu0 0
      %1054 = vmatpush1.bf16.msra.mxu0 %v1023
      %1055 = vmatprep.subr.bf16.mxu0 0
      %1056 = vmatpush2.bf16.msra.mxu0 0
      %1057 = vmatprep.subr.bf16.mxu0 0
      %1058 = vmatpush2.bf16.msra.mxu0 0
      %1059 = vmatprep.subr.bf16.mxu0 0
      %1060 = vmatpush2.bf16.msra.mxu0 0
      %1061 = vmatprep.subr.bf16.mxu0 0
      %1062 = vmatpush2.bf16.msra.mxu0 0
      %1063 = vmatprep.subr.bf16.mxu0 0
      %1064 = vmatpush2.bf16.msra.mxu0 0
      %1065 = vmatprep.subr.bf16.mxu0 0
      %1066 = vmatpush2.bf16.msra.mxu0 0
      %1067 = vmatprep.subr.bf16.mxu0 0
      %1068 = vmatpush2.bf16.msra.mxu0 0
      %1069 = vmatprep.subr.bf16.mxu0 0
      %1070 = vmatpush2.bf16.msra.mxu0 0
      %1071 = vmatprep.mubr.bf16.mxu0 0
      %1072 = vmatmul.mubr.bf16.gmra.mxu0 %v959
      %v1073 = vpop.f32.mrf.mxu0
      %v1074 = vadd.f32 0.0, %v1073
      %v1075 = vpop.f32.mrf.mxu0
      %v1076 = vpop.f32.mrf.mxu0
      %v1077 = vadd.f32 0.0, %v1076
      %v1078 = vpop.f32.mrf.mxu0
      %1079 = vmatprep.mubr.bf16.mxu0 0
      %1080 = vmatmul.mubr.bf16.gmra.mxu0 %v960
      %v1081 = vpop.f32.mrf.mxu0
      %v1082 = vadd.f32 0.0, %v1081
      %v1083 = vpop.f32.mrf.mxu0
      %v1084 = vpop.f32.mrf.mxu0
      %v1085 = vadd.f32 0.0, %v1084
      %v1086 = vpop.f32.mrf.mxu0
      %1087 = vmatprep.mubr.bf16.mxu0 0
      %1088 = vmatmul.mubr.bf16.gmra.mxu0 %v961
      %v1089 = vpop.f32.mrf.mxu0
      %v1090 = vadd.f32 0.0, %v1089
      %v1091 = vpop.f32.mrf.mxu0
      %v1092 = vpop.f32.mrf.mxu0
      %v1093 = vadd.f32 0.0, %v1092
      %v1094 = vpop.f32.mrf.mxu0
      %1095 = vmatprep.mubr.bf16.mxu0 0
      %1096 = vmatmul.mubr.bf16.gmra.mxu0 %v962
      %v1097 = vpop.f32.mrf.mxu0
      %v1098 = vadd.f32 0.0, %v1097
      %v1099 = vpop.f32.mrf.mxu0
      %v1100 = vpop.f32.mrf.mxu0
      %v1101 = vadd.f32 0.0, %v1100
      %v1102 = vpop.f32.mrf.mxu0
      %1103 = vmatprep.mubr.bf16.mxu0 0
      %1104 = vmatmul.mubr.bf16.gmra.mxu0 %v963
      %v1105 = vpop.f32.mrf.mxu0
      %v1106 = vadd.f32 0.0, %v1105
      %v1107 = vpop.f32.mrf.mxu0
      %v1108 = vpop.f32.mrf.mxu0
      %v1109 = vadd.f32 0.0, %v1108
      %v1110 = vpop.f32.mrf.mxu0
      %1111 = vmatprep.mubr.bf16.mxu0 0
      %1112 = vmatmul.mubr.bf16.gmra.mxu0 %v964
      %v1113 = vpop.f32.mrf.mxu0
      %v1114 = vadd.f32 0.0, %v1113
      %v1115 = vpop.f32.mrf.mxu0
      %v1116 = vpop.f32.mrf.mxu0
      %v1117 = vadd.f32 0.0, %v1116
      %v1118 = vpop.f32.mrf.mxu0
      %1119 = vmatprep.mubr.bf16.mxu0 0
      %1120 = vmatmul.mubr.bf16.gmra.mxu0 %v965
      %v1121 = vpop.f32.mrf.mxu0
      %v1122 = vadd.f32 0.0, %v1121
      %v1123 = vpop.f32.mrf.mxu0
      %v1124 = vpop.f32.mrf.mxu0
      %v1125 = vadd.f32 0.0, %v1124
      %v1126 = vpop.f32.mrf.mxu0
      %1127 = vmatprep.mubr.bf16.mxu0 0
      %1128 = vmatmul.mubr.bf16.gmra.mxu0 %v966
      %v1129 = vpop.f32.mrf.mxu0
      %v1130 = vadd.f32 0.0, %v1129
      %v1131 = vpop.f32.mrf.mxu0
      %v1132 = vpop.f32.mrf.mxu0
      %v1133 = vadd.f32 0.0, %v1132
      %v1134 = vpop.f32.mrf.mxu0
      %1135 = vmatprep.mubr.bf16.mxu0 0
      %1136 = vmatmul.mubr.bf16.gmra.mxu0 %v967
      %v1137 = vpop.f32.mrf.mxu0
      %v1138 = vadd.f32 0.0, %v1137
      %v1139 = vpop.f32.mrf.mxu0
      %v1140 = vpop.f32.mrf.mxu0
      %v1141 = vadd.f32 0.0, %v1140
      %v1142 = vpop.f32.mrf.mxu0
      %1143 = vmatprep.mubr.bf16.mxu0 0
      %1144 = vmatmul.mubr.bf16.gmra.mxu0 %v968
      %v1145 = vpop.f32.mrf.mxu0
      %v1146 = vadd.f32 0.0, %v1145
      %v1147 = vpop.f32.mrf.mxu0
      %v1148 = vpop.f32.mrf.mxu0
      %v1149 = vadd.f32 0.0, %v1148
      %v1150 = vpop.f32.mrf.mxu0
      %1151 = vmatprep.mubr.bf16.mxu0 0
      %1152 = vmatmul.mubr.bf16.gmra.mxu0 %v969
      %v1153 = vpop.f32.mrf.mxu0
      %v1154 = vadd.f32 0.0, %v1153
      %v1155 = vpop.f32.mrf.mxu0
      %v1156 = vpop.f32.mrf.mxu0
      %v1157 = vadd.f32 0.0, %v1156
      %v1158 = vpop.f32.mrf.mxu0
      %1159 = vmatprep.mubr.bf16.mxu0 0
      %1160 = vmatmul.mubr.bf16.gmra.mxu0 %v970
      %v1161 = vpop.f32.mrf.mxu0
      %v1162 = vadd.f32 0.0, %v1161
      %v1163 = vpop.f32.mrf.mxu0
      %v1164 = vpop.f32.mrf.mxu0
      %v1165 = vadd.f32 0.0, %v1164
      %v1166 = vpop.f32.mrf.mxu0
      %1167 = vmatprep.mubr.bf16.mxu0 0
      %1168 = vmatmul.mubr.bf16.gmra.mxu0 %v971
      %v1169 = vpop.f32.mrf.mxu0
      %v1170 = vadd.f32 0.0, %v1169
      %v1171 = vpop.f32.mrf.mxu0
      %v1172 = vpop.f32.mrf.mxu0
      %v1173 = vadd.f32 0.0, %v1172
      %v1174 = vpop.f32.mrf.mxu0
      %1175 = vmatprep.mubr.bf16.mxu0 0
      %1176 = vmatmul.mubr.bf16.gmra.mxu0 %v972
      %v1177 = vpop.f32.mrf.mxu0
      %v1178 = vadd.f32 0.0, %v1177
      %v1179 = vpop.f32.mrf.mxu0
      %v1180 = vpop.f32.mrf.mxu0
      %v1181 = vadd.f32 0.0, %v1180
      %v1182 = vpop.f32.mrf.mxu0
      %1183 = vmatprep.mubr.bf16.mxu0 0
      %1184 = vmatmul.mubr.bf16.gmra.mxu0 %v973
      %v1185 = vpop.f32.mrf.mxu0
      %v1186 = vadd.f32 0.0, %v1185
      %v1187 = vpop.f32.mrf.mxu0
      %v1188 = vpop.f32.mrf.mxu0
      %v1189 = vadd.f32 0.0, %v1188
      %v1190 = vpop.f32.mrf.mxu0
      %1191 = vmatprep.mubr.bf16.mxu0 0
      %1192 = vmatmul.mubr.bf16.gmra.mxu0 %v974
      %v1193 = vpop.f32.mrf.mxu0
      %v1194 = vadd.f32 0.0, %v1193
      %v1195 = vpop.f32.mrf.mxu0
      %v1196 = vpop.f32.mrf.mxu0
      %v1197 = vadd.f32 0.0, %v1196
      %v1198 = vpop.f32.mrf.mxu0
      %1199 = vdwg.mxu0
      %v1200 = vlaneseq
      %v1201 = vshrl.u32 %v1200, 7
      %v1202 = vsub.s32 0, %v1201
      %v1203 = vrot.slane %v954, %v1202
      %v1204 = vmul.f32 %v1074, %v1203
      %v1205 = vmul.f32 %v1077, %v1203
      %v1206 = vmul.f32 %v1082, %v1203
      %v1207 = vmul.f32 %v1085, %v1203
      %v1208 = vmul.f32 %v1090, %v1203
      %v1209 = vmul.f32 %v1093, %v1203
      %v1210 = vmul.f32 %v1098, %v1203
      %v1211 = vmul.f32 %v1101, %v1203
      %v1212 = vmul.f32 %v1106, %v1203
      %v1213 = vmul.f32 %v1109, %v1203
      %v1214 = vmul.f32 %v1114, %v1203
      %v1215 = vmul.f32 %v1117, %v1203
      %v1216 = vmul.f32 %v1122, %v1203
      %v1217 = vmul.f32 %v1125, %v1203
      %v1218 = vmul.f32 %v1130, %v1203
      %v1219 = vmul.f32 %v1133, %v1203
      %v1220 = vmul.f32 %v1138, %v1203
      %v1221 = vmul.f32 %v1141, %v1203
      %v1222 = vmul.f32 %v1146, %v1203
      %v1223 = vmul.f32 %v1149, %v1203
      %v1224 = vmul.f32 %v1154, %v1203
      %v1225 = vmul.f32 %v1157, %v1203
      %v1226 = vmul.f32 %v1162, %v1203
      %v1227 = vmul.f32 %v1165, %v1203
      %v1228 = vmul.f32 %v1170, %v1203
      %v1229 = vmul.f32 %v1173, %v1203
      %v1230 = vmul.f32 %v1178, %v1203
      %v1231 = vmul.f32 %v1181, %v1203
      %v1232 = vmul.f32 %v1186, %v1203
      %v1233 = vmul.f32 %v1189, %v1203
      %v1234 = vmul.f32 %v1194, %v1203
      %v1235 = vmul.f32 %v1197, %v1203
      %v1236 = vpack.c.bf16 %v1205, %v1204
      %v1237 = vpack.c.bf16 %v1207, %v1206
      %v1238 = vpack.c.bf16 %v1209, %v1208
      %v1239 = vpack.c.bf16 %v1211, %v1210
      %v1240 = vpack.c.bf16 %v1213, %v1212
      %v1241 = vpack.c.bf16 %v1215, %v1214
      %v1242 = vpack.c.bf16 %v1217, %v1216
      %v1243 = vpack.c.bf16 %v1219, %v1218
      %v1244 = vpack.c.bf16 %v1221, %v1220
      %v1245 = vpack.c.bf16 %v1223, %v1222
      %v1246 = vpack.c.bf16 %v1225, %v1224
      %v1247 = vpack.c.bf16 %v1227, %v1226
      %v1248 = vpack.c.bf16 %v1229, %v1228
      %v1249 = vpack.c.bf16 %v1231, %v1230
      %v1250 = vpack.c.bf16 %v1233, %v1232
      %v1251 = vpack.c.bf16 %v1235, %v1234
      %v1252 = vld [vmem:[%s6] sm:$0xf]
      %v1253 = vld [vmem:[%s6 + $0x4] sm:$0xf]
      %v1254 = vld [vmem:[%s6 + $0x8] sm:$0xf]
      %v1255 = vld [vmem:[%s6 + $0xc] sm:$0xf]
      %v1256 = vld [vmem:[%s6 + $0x10] sm:$0xf]
      %v1257 = vld [vmem:[%s6 + $0x14] sm:$0xf]
      %v1258 = vld [vmem:[%s6 + $0x18] sm:$0xf]
      %v1259 = vld [vmem:[%s6 + $0x1c] sm:$0xf]
      %v1260 = vld [vmem:[%s6 + $0x20] sm:$0xf]
      %v1261 = vld [vmem:[%s6 + $0x24] sm:$0xf]
      %v1262 = vld [vmem:[%s6 + $0x28] sm:$0xf]
      %v1263 = vld [vmem:[%s6 + $0x2c] sm:$0xf]
      %v1264 = vld [vmem:[%s6 + $0x30] sm:$0xf]
      %v1265 = vld [vmem:[%s6 + $0x34] sm:$0xf]
      %v1266 = vld [vmem:[%s6 + $0x38] sm:$0xf]
      %v1267 = vld [vmem:[%s6 + $0x3c] sm:$0xf]
      %v1284 = vunpack.c.l.b16 %v1252
      %v1285 = vunpack.c.l.b16 %v1253
      %v1286 = vunpack.c.l.b16 %v1254
      %v1287 = vunpack.c.l.b16 %v1255
      %v1288 = vunpack.c.l.b16 %v1256
      %v1289 = vunpack.c.l.b16 %v1257
      %v1290 = vunpack.c.l.b16 %v1258
      %v1291 = vunpack.c.l.b16 %v1259
      %v1292 = vunpack.c.l.b16 %v1260
      %v1293 = vunpack.c.l.b16 %v1261
      %v1294 = vunpack.c.l.b16 %v1262
      %v1295 = vunpack.c.l.b16 %v1263
      %v1296 = vunpack.c.l.b16 %v1264
      %v1297 = vunpack.c.l.b16 %v1265
      %v1298 = vunpack.c.l.b16 %v1266
      %v1299 = vunpack.c.l.b16 %v1267
      %v1300 = vpack.c.b16 %v1285, %v1284
      %v1301 = vpack.c.b16 %v1287, %v1286
      %v1302 = vpack.c.b16 %v1289, %v1288
      %v1303 = vpack.c.b16 %v1291, %v1290
      %v1304 = vpack.c.b16 %v1293, %v1292
      %v1305 = vpack.c.b16 %v1295, %v1294
      %v1306 = vpack.c.b16 %v1297, %v1296
      %v1307 = vpack.c.b16 %v1299, %v1298
      %1316 = vmatprep.subr.bf16.mxu0 0
      %1317 = vmatpush1.bf16.msra.mxu0 %v1307
      %1318 = vmatprep.subr.bf16.mxu0 0
      %1319 = vmatpush1.bf16.msra.mxu0 %v1306
      %1320 = vmatprep.subr.bf16.mxu0 0
      %1321 = vmatpush1.bf16.msra.mxu0 %v1305
      %1322 = vmatprep.subr.bf16.mxu0 0
      %1323 = vmatpush1.bf16.msra.mxu0 %v1304
      %1324 = vmatprep.subr.bf16.mxu0 0
      %1325 = vmatpush1.bf16.msra.mxu0 %v1303
      %1326 = vmatprep.subr.bf16.mxu0 0
      %1327 = vmatpush1.bf16.msra.mxu0 %v1302
      %1328 = vmatprep.subr.bf16.mxu0 0
      %1329 = vmatpush1.bf16.msra.mxu0 %v1301
      %1330 = vmatprep.subr.bf16.mxu0 0
      %1331 = vmatpush1.bf16.msra.mxu0 %v1300
      %1332 = vmatprep.subr.bf16.mxu0 0
      %1333 = vmatpush2.bf16.msra.mxu0 0
      %1334 = vmatprep.subr.bf16.mxu0 0
      %1335 = vmatpush2.bf16.msra.mxu0 0
      %1336 = vmatprep.subr.bf16.mxu0 0
      %1337 = vmatpush2.bf16.msra.mxu0 0
      %1338 = vmatprep.subr.bf16.mxu0 0
      %1339 = vmatpush2.bf16.msra.mxu0 0
      %1340 = vmatprep.subr.bf16.mxu0 0
      %1341 = vmatpush2.bf16.msra.mxu0 0
      %1342 = vmatprep.subr.bf16.mxu0 0
      %1343 = vmatpush2.bf16.msra.mxu0 0
      %1344 = vmatprep.subr.bf16.mxu0 0
      %1345 = vmatpush2.bf16.msra.mxu0 0
      %1346 = vmatprep.subr.bf16.mxu0 0
      %1347 = vmatpush2.bf16.msra.mxu0 0
      %1348 = vmatprep.mubr.bf16.mxu0 0
      %1349 = vmatmul.mubr.bf16.gmra.mxu0 %v1236
      %v1350 = vpop.f32.mrf.mxu0
      %v1351 = vadd.f32 0.0, %v1350
      %v1352 = vpop.f32.mrf.mxu0
      %v1353 = vpop.f32.mrf.mxu0
      %v1354 = vadd.f32 0.0, %v1353
      %v1355 = vpop.f32.mrf.mxu0
      %1356 = vmatprep.mubr.bf16.mxu0 0
      %1357 = vmatmul.mubr.bf16.gmra.mxu0 %v1237
      %v1358 = vpop.f32.mrf.mxu0
      %v1359 = vadd.f32 0.0, %v1358
      %v1360 = vpop.f32.mrf.mxu0
      %v1361 = vpop.f32.mrf.mxu0
      %v1362 = vadd.f32 0.0, %v1361
      %v1363 = vpop.f32.mrf.mxu0
      %1364 = vmatprep.mubr.bf16.mxu0 0
      %1365 = vmatmul.mubr.bf16.gmra.mxu0 %v1238
      %v1366 = vpop.f32.mrf.mxu0
      %v1367 = vadd.f32 0.0, %v1366
      %v1368 = vpop.f32.mrf.mxu0
      %v1369 = vpop.f32.mrf.mxu0
      %v1370 = vadd.f32 0.0, %v1369
      %v1371 = vpop.f32.mrf.mxu0
      %1372 = vmatprep.mubr.bf16.mxu0 0
      %1373 = vmatmul.mubr.bf16.gmra.mxu0 %v1239
      %v1374 = vpop.f32.mrf.mxu0
      %v1375 = vadd.f32 0.0, %v1374
      %v1376 = vpop.f32.mrf.mxu0
      %v1377 = vpop.f32.mrf.mxu0
      %v1378 = vadd.f32 0.0, %v1377
      %v1379 = vpop.f32.mrf.mxu0
      %1380 = vmatprep.mubr.bf16.mxu0 0
      %1381 = vmatmul.mubr.bf16.gmra.mxu0 %v1240
      %v1382 = vpop.f32.mrf.mxu0
      %v1383 = vadd.f32 0.0, %v1382
      %v1384 = vpop.f32.mrf.mxu0
      %v1385 = vpop.f32.mrf.mxu0
      %v1386 = vadd.f32 0.0, %v1385
      %v1387 = vpop.f32.mrf.mxu0
      %1388 = vmatprep.mubr.bf16.mxu0 0
      %1389 = vmatmul.mubr.bf16.gmra.mxu0 %v1241
      %v1390 = vpop.f32.mrf.mxu0
      %v1391 = vadd.f32 0.0, %v1390
      %v1392 = vpop.f32.mrf.mxu0
      %v1393 = vpop.f32.mrf.mxu0
      %v1394 = vadd.f32 0.0, %v1393
      %v1395 = vpop.f32.mrf.mxu0
      %1396 = vmatprep.mubr.bf16.mxu0 0
      %1397 = vmatmul.mubr.bf16.gmra.mxu0 %v1242
      %v1398 = vpop.f32.mrf.mxu0
      %v1399 = vadd.f32 0.0, %v1398
      %v1400 = vpop.f32.mrf.mxu0
      %v1401 = vpop.f32.mrf.mxu0
      %v1402 = vadd.f32 0.0, %v1401
      %v1403 = vpop.f32.mrf.mxu0
      %1404 = vmatprep.mubr.bf16.mxu0 0
      %1405 = vmatmul.mubr.bf16.gmra.mxu0 %v1243
      %v1406 = vpop.f32.mrf.mxu0
      %v1407 = vadd.f32 0.0, %v1406
      %v1408 = vpop.f32.mrf.mxu0
      %v1409 = vpop.f32.mrf.mxu0
      %v1410 = vadd.f32 0.0, %v1409
      %v1411 = vpop.f32.mrf.mxu0
      %1412 = vmatprep.mubr.bf16.mxu0 0
      %1413 = vmatmul.mubr.bf16.gmra.mxu0 %v1244
      %v1414 = vpop.f32.mrf.mxu0
      %v1415 = vadd.f32 0.0, %v1414
      %v1416 = vpop.f32.mrf.mxu0
      %v1417 = vpop.f32.mrf.mxu0
      %v1418 = vadd.f32 0.0, %v1417
      %v1419 = vpop.f32.mrf.mxu0
      %1420 = vmatprep.mubr.bf16.mxu0 0
      %1421 = vmatmul.mubr.bf16.gmra.mxu0 %v1245
      %v1422 = vpop.f32.mrf.mxu0
      %v1423 = vadd.f32 0.0, %v1422
      %v1424 = vpop.f32.mrf.mxu0
      %v1425 = vpop.f32.mrf.mxu0
      %v1426 = vadd.f32 0.0, %v1425
      %v1427 = vpop.f32.mrf.mxu0
      %1428 = vmatprep.mubr.bf16.mxu0 0
      %1429 = vmatmul.mubr.bf16.gmra.mxu0 %v1246
      %v1430 = vpop.f32.mrf.mxu0
      %v1431 = vadd.f32 0.0, %v1430
      %v1432 = vpop.f32.mrf.mxu0
      %v1433 = vpop.f32.mrf.mxu0
      %v1434 = vadd.f32 0.0, %v1433
      %v1435 = vpop.f32.mrf.mxu0
      %1436 = vmatprep.mubr.bf16.mxu0 0
      %1437 = vmatmul.mubr.bf16.gmra.mxu0 %v1247
      %v1438 = vpop.f32.mrf.mxu0
      %v1439 = vadd.f32 0.0, %v1438
      %v1440 = vpop.f32.mrf.mxu0
      %v1441 = vpop.f32.mrf.mxu0
      %v1442 = vadd.f32 0.0, %v1441
      %v1443 = vpop.f32.mrf.mxu0
      %1444 = vmatprep.mubr.bf16.mxu0 0
      %1445 = vmatmul.mubr.bf16.gmra.mxu0 %v1248
      %v1446 = vpop.f32.mrf.mxu0
      %v1447 = vadd.f32 0.0, %v1446
      %v1448 = vpop.f32.mrf.mxu0
      %v1449 = vpop.f32.mrf.mxu0
      %v1450 = vadd.f32 0.0, %v1449
      %v1451 = vpop.f32.mrf.mxu0
      %1452 = vmatprep.mubr.bf16.mxu0 0
      %1453 = vmatmul.mubr.bf16.gmra.mxu0 %v1249
      %v1454 = vpop.f32.mrf.mxu0
      %v1455 = vadd.f32 0.0, %v1454
      %v1456 = vpop.f32.mrf.mxu0
      %v1457 = vpop.f32.mrf.mxu0
      %v1458 = vadd.f32 0.0, %v1457
      %v1459 = vpop.f32.mrf.mxu0
      %1460 = vmatprep.mubr.bf16.mxu0 0
      %1461 = vmatmul.mubr.bf16.gmra.mxu0 %v1250
      %v1462 = vpop.f32.mrf.mxu0
      %v1463 = vadd.f32 0.0, %v1462
      %v1464 = vpop.f32.mrf.mxu0
      %v1465 = vpop.f32.mrf.mxu0
      %v1466 = vadd.f32 0.0, %v1465
      %v1467 = vpop.f32.mrf.mxu0
      %1468 = vmatprep.mubr.bf16.mxu0 0
      %1469 = vmatmul.mubr.bf16.gmra.mxu0 %v1251
      %v1470 = vpop.f32.mrf.mxu0
      %v1471 = vadd.f32 0.0, %v1470
      %v1472 = vpop.f32.mrf.mxu0
      %v1473 = vpop.f32.mrf.mxu0
      %v1474 = vadd.f32 0.0, %v1473
      %v1475 = vpop.f32.mrf.mxu0
      %1476 = vdwg.mxu0
      %v1477 = vld [vmem:[%s7] sm:$0xff]
      %v1478 = vld [vmem:[%s7 + $0x8] sm:$0xff]
      %v1479 = vld [vmem:[%s7 + $0x10] sm:$0xff]
      %v1480 = vld [vmem:[%s7 + $0x18] sm:$0xff]
      %v1481 = vld [vmem:[%s7 + $0x20] sm:$0xff]
      %v1482 = vld [vmem:[%s7 + $0x28] sm:$0xff]
      %v1483 = vld [vmem:[%s7 + $0x30] sm:$0xff]
      %v1484 = vld [vmem:[%s7 + $0x38] sm:$0xff]
      %v1485 = vld [vmem:[%s7 + $0x40] sm:$0xff]
      %v1486 = vld [vmem:[%s7 + $0x48] sm:$0xff]
      %v1487 = vld [vmem:[%s7 + $0x50] sm:$0xff]
      %v1488 = vld [vmem:[%s7 + $0x58] sm:$0xff]
      %v1489 = vld [vmem:[%s7 + $0x60] sm:$0xff]
      %v1490 = vld [vmem:[%s7 + $0x68] sm:$0xff]
      %v1491 = vld [vmem:[%s7 + $0x70] sm:$0xff]
      %v1492 = vld [vmem:[%s7 + $0x78] sm:$0xff]
      %v1509 = vunpack.c.l.b16 %v1477
      %v1510 = vunpack.c.h.b16 %v1477
      %v1511 = vunpack.c.l.b16 %v1478
      %v1512 = vunpack.c.h.b16 %v1478
      %v1513 = vunpack.c.l.b16 %v1479
      %v1514 = vunpack.c.h.b16 %v1479
      %v1515 = vunpack.c.l.b16 %v1480
      %v1516 = vunpack.c.h.b16 %v1480
      %v1517 = vunpack.c.l.b16 %v1481
      %v1518 = vunpack.c.h.b16 %v1481
      %v1519 = vunpack.c.l.b16 %v1482
      %v1520 = vunpack.c.h.b16 %v1482
      %v1521 = vunpack.c.l.b16 %v1483
      %v1522 = vunpack.c.h.b16 %v1483
      %v1523 = vunpack.c.l.b16 %v1484
      %v1524 = vunpack.c.h.b16 %v1484
      %v1525 = vunpack.c.l.b16 %v1485
      %v1526 = vunpack.c.h.b16 %v1485
      %v1527 = vunpack.c.l.b16 %v1486
      %v1528 = vunpack.c.h.b16 %v1486
      %v1529 = vunpack.c.l.b16 %v1487
      %v1530 = vunpack.c.h.b16 %v1487
      %v1531 = vunpack.c.l.b16 %v1488
      %v1532 = vunpack.c.h.b16 %v1488
      %v1533 = vunpack.c.l.b16 %v1489
      %v1534 = vunpack.c.h.b16 %v1489
      %v1535 = vunpack.c.l.b16 %v1490
      %v1536 = vunpack.c.h.b16 %v1490
      %v1537 = vunpack.c.l.b16 %v1491
      %v1538 = vunpack.c.h.b16 %v1491
      %v1539 = vunpack.c.l.b16 %v1492
      %v1540 = vunpack.c.h.b16 %v1492
      %v1541 = vpack.c.b16 %v1511, %v1509
      %v1542 = vpack.c.b16 %v1512, %v1510
      %v1543 = vpack.c.b16 %v1515, %v1513
      %v1544 = vpack.c.b16 %v1516, %v1514
      %v1545 = vpack.c.b16 %v1519, %v1517
      %v1546 = vpack.c.b16 %v1520, %v1518
      %v1547 = vpack.c.b16 %v1523, %v1521
      %v1548 = vpack.c.b16 %v1524, %v1522
      %v1549 = vpack.c.b16 %v1527, %v1525
      %v1550 = vpack.c.b16 %v1528, %v1526
      %v1551 = vpack.c.b16 %v1531, %v1529
      %v1552 = vpack.c.b16 %v1532, %v1530
      %v1553 = vpack.c.b16 %v1535, %v1533
      %v1554 = vpack.c.b16 %v1536, %v1534
      %v1555 = vpack.c.b16 %v1539, %v1537
      %v1556 = vpack.c.b16 %v1540, %v1538
      %1573 = vmatprep.subr.bf16.mxu0 %v1556
      %1574 = vmatpush1.bf16.msra.mxu0 %v1555
      %1575 = vmatprep.subr.bf16.mxu0 %v1554
      %1576 = vmatpush1.bf16.msra.mxu0 %v1553
      %1577 = vmatprep.subr.bf16.mxu0 %v1552
      %1578 = vmatpush1.bf16.msra.mxu0 %v1551
      %1579 = vmatprep.subr.bf16.mxu0 %v1550
      %1580 = vmatpush1.bf16.msra.mxu0 %v1549
      %1581 = vmatprep.subr.bf16.mxu0 %v1548
      %1582 = vmatpush1.bf16.msra.mxu0 %v1547
      %1583 = vmatprep.subr.bf16.mxu0 %v1546
      %1584 = vmatpush1.bf16.msra.mxu0 %v1545
      %1585 = vmatprep.subr.bf16.mxu0 %v1544
      %1586 = vmatpush1.bf16.msra.mxu0 %v1543
      %1587 = vmatprep.subr.bf16.mxu0 %v1542
      %1588 = vmatpush1.bf16.msra.mxu0 %v1541
      %1589 = vmatprep.subr.bf16.mxu0 0
      %1590 = vmatpush2.bf16.msra.mxu0 0
      %1591 = vmatprep.subr.bf16.mxu0 0
      %1592 = vmatpush2.bf16.msra.mxu0 0
      %1593 = vmatprep.subr.bf16.mxu0 0
      %1594 = vmatpush2.bf16.msra.mxu0 0
      %1595 = vmatprep.subr.bf16.mxu0 0
      %1596 = vmatpush2.bf16.msra.mxu0 0
      %1597 = vmatprep.subr.bf16.mxu0 0
      %1598 = vmatpush2.bf16.msra.mxu0 0
      %1599 = vmatprep.subr.bf16.mxu0 0
      %1600 = vmatpush2.bf16.msra.mxu0 0
      %1601 = vmatprep.subr.bf16.mxu0 0
      %1602 = vmatpush2.bf16.msra.mxu0 0
      %1603 = vmatprep.subr.bf16.mxu0 0
      %1604 = vmatpush2.bf16.msra.mxu0 0
      %1605 = vmatprep.mubr.bf16.mxu0 0
      %1606 = vmatmul.mubr.bf16.gmra.mxu0 %v806
      %v1607 = vpop.f32.mrf.mxu0
      %v1608 = vadd.f32 0.0, %v1607
      %v1609 = vpop.f32.mrf.mxu0
      %v1610 = vadd.f32 0.0, %v1609
      %v1611 = vpop.f32.mrf.mxu0
      %v1612 = vadd.f32 0.0, %v1611
      %v1613 = vpop.f32.mrf.mxu0
      %v1614 = vadd.f32 0.0, %v1613
      %1615 = vdwg.mxu0
      %v1616 = vpack.c.bf16 %v1354, %v1351
      %v1617 = vpack.c.bf16 %v1362, %v1359
      %v1618 = vpack.c.bf16 %v1370, %v1367
      %v1619 = vpack.c.bf16 %v1378, %v1375
      %v1620 = vpack.c.bf16 %v1386, %v1383
      %v1621 = vpack.c.bf16 %v1394, %v1391
      %v1622 = vpack.c.bf16 %v1402, %v1399
      %v1623 = vpack.c.bf16 %v1410, %v1407
      %v1624 = vpack.c.bf16 %v1418, %v1415
      %v1625 = vpack.c.bf16 %v1426, %v1423
      %v1626 = vpack.c.bf16 %v1434, %v1431
      %v1627 = vpack.c.bf16 %v1442, %v1439
      %v1628 = vpack.c.bf16 %v1450, %v1447
      %v1629 = vpack.c.bf16 %v1458, %v1455
      %v1630 = vpack.c.bf16 %v1466, %v1463
      %v1631 = vpack.c.bf16 %v1474, %v1471
      %v1632 = vpack.c.bf16 %v1612, %v1608
      %1633 = vmatprep.subr.bf16.mxu0 0
      %1634 = vmatpush1.bf16.xpose.msra.mxu0 0
      %1635 = vmatprep.subr.bf16.mxu0 0
      %1636 = vmatpush1.bf16.xpose.msra.mxu0 0
      %1637 = vmatprep.subr.bf16.mxu0 0
      %1638 = vmatpush1.bf16.xpose.msra.mxu0 0
      %1639 = vmatprep.subr.bf16.mxu0 0
      %1640 = vmatpush1.bf16.xpose.msra.mxu0 0
      %1641 = vmatprep.subr.bf16.mxu0 0
      %1642 = vmatpush1.bf16.xpose.msra.mxu0 0
      %1643 = vmatprep.subr.bf16.mxu0 0
      %1644 = vmatpush1.bf16.xpose.msra.mxu0 0
      %1645 = vmatprep.subr.bf16.mxu0 0
      %1646 = vmatpush1.bf16.xpose.msra.mxu0 0
      %1647 = vmatprep.subr.bf16.mxu0 0
      %1648 = vmatpush1.bf16.xpose.msra.mxu0 %v1632
      %1649 = vmatprep.subr.bf16.mxu0 0
      %1650 = vmatpush2.bf16.xpose.msra.mxu0 0
      %1651 = vmatprep.subr.bf16.mxu0 0
      %1652 = vmatpush2.bf16.xpose.msra.mxu0 0
      %1653 = vmatprep.subr.bf16.mxu0 0
      %1654 = vmatpush2.bf16.xpose.msra.mxu0 0
      %1655 = vmatprep.subr.bf16.mxu0 0
      %1656 = vmatpush2.bf16.xpose.msra.mxu0 0
      %1657 = vmatprep.subr.bf16.mxu0 0
      %1658 = vmatpush2.bf16.xpose.msra.mxu0 0
      %1659 = vmatprep.subr.bf16.mxu0 0
      %1660 = vmatpush2.bf16.xpose.msra.mxu0 0
      %1661 = vmatprep.subr.bf16.mxu0 0
      %1662 = vmatpush2.bf16.xpose.msra.mxu0 0
      %1663 = vmatprep.subr.bf16.mxu0 0
      %1664 = vmatpush2.bf16.xpose.msra.mxu0 0
      %1665 = vmatprep.mubr.bf16.mxu0 0
      %1666 = vmatmul.mubr.bf16.gmra.mxu0 %v1616
      %v1667 = vpop.f32.mrf.mxu0
      %v1668 = vadd.f32 0.0, %v1667
      %v1669 = vpop.f32.mrf.mxu0
      %v1670 = vpop.f32.mrf.mxu0
      %v1671 = vadd.f32 0.0, %v1670
      %v1672 = vpop.f32.mrf.mxu0
      %1673 = vmatprep.mubr.bf16.mxu0 0
      %1674 = vmatmul.mubr.bf16.gmra.mxu0 %v1617
      %v1675 = vpop.f32.mrf.mxu0
      %v1676 = vadd.f32 0.0, %v1675
      %v1677 = vpop.f32.mrf.mxu0
      %v1678 = vpop.f32.mrf.mxu0
      %v1679 = vadd.f32 0.0, %v1678
      %v1680 = vpop.f32.mrf.mxu0
      %1681 = vmatprep.mubr.bf16.mxu0 0
      %1682 = vmatmul.mubr.bf16.gmra.mxu0 %v1618
      %v1683 = vpop.f32.mrf.mxu0
      %v1684 = vadd.f32 0.0, %v1683
      %v1685 = vpop.f32.mrf.mxu0
      %v1686 = vpop.f32.mrf.mxu0
      %v1687 = vadd.f32 0.0, %v1686
      %v1688 = vpop.f32.mrf.mxu0
      %1689 = vmatprep.mubr.bf16.mxu0 0
      %1690 = vmatmul.mubr.bf16.gmra.mxu0 %v1619
      %v1691 = vpop.f32.mrf.mxu0
      %v1692 = vadd.f32 0.0, %v1691
      %v1693 = vpop.f32.mrf.mxu0
      %v1694 = vpop.f32.mrf.mxu0
      %v1695 = vadd.f32 0.0, %v1694
      %v1696 = vpop.f32.mrf.mxu0
      %1697 = vmatprep.mubr.bf16.mxu0 0
      %1698 = vmatmul.mubr.bf16.gmra.mxu0 %v1620
      %v1699 = vpop.f32.mrf.mxu0
      %v1700 = vadd.f32 0.0, %v1699
      %v1701 = vpop.f32.mrf.mxu0
      %v1702 = vpop.f32.mrf.mxu0
      %v1703 = vadd.f32 0.0, %v1702
      %v1704 = vpop.f32.mrf.mxu0
      %1705 = vmatprep.mubr.bf16.mxu0 0
      %1706 = vmatmul.mubr.bf16.gmra.mxu0 %v1621
      %v1707 = vpop.f32.mrf.mxu0
      %v1708 = vadd.f32 0.0, %v1707
      %v1709 = vpop.f32.mrf.mxu0
      %v1710 = vpop.f32.mrf.mxu0
      %v1711 = vadd.f32 0.0, %v1710
      %v1712 = vpop.f32.mrf.mxu0
      %1713 = vmatprep.mubr.bf16.mxu0 0
      %1714 = vmatmul.mubr.bf16.gmra.mxu0 %v1622
      %v1715 = vpop.f32.mrf.mxu0
      %v1716 = vadd.f32 0.0, %v1715
      %v1717 = vpop.f32.mrf.mxu0
      %v1718 = vpop.f32.mrf.mxu0
      %v1719 = vadd.f32 0.0, %v1718
      %v1720 = vpop.f32.mrf.mxu0
      %1721 = vmatprep.mubr.bf16.mxu0 0
      %1722 = vmatmul.mubr.bf16.gmra.mxu0 %v1623
      %v1723 = vpop.f32.mrf.mxu0
      %v1724 = vadd.f32 0.0, %v1723
      %v1725 = vpop.f32.mrf.mxu0
      %v1726 = vpop.f32.mrf.mxu0
      %v1727 = vadd.f32 0.0, %v1726
      %v1728 = vpop.f32.mrf.mxu0
      %1729 = vmatprep.mubr.bf16.mxu0 0
      %1730 = vmatmul.mubr.bf16.gmra.mxu0 %v1624
      %v1731 = vpop.f32.mrf.mxu0
      %v1732 = vadd.f32 0.0, %v1731
      %v1733 = vpop.f32.mrf.mxu0
      %v1734 = vpop.f32.mrf.mxu0
      %v1735 = vadd.f32 0.0, %v1734
      %v1736 = vpop.f32.mrf.mxu0
      %1737 = vmatprep.mubr.bf16.mxu0 0
      %1738 = vmatmul.mubr.bf16.gmra.mxu0 %v1625
      %v1739 = vpop.f32.mrf.mxu0
      %v1740 = vadd.f32 0.0, %v1739
      %v1741 = vpop.f32.mrf.mxu0
      %v1742 = vpop.f32.mrf.mxu0
      %v1743 = vadd.f32 0.0, %v1742
      %v1744 = vpop.f32.mrf.mxu0
      %1745 = vmatprep.mubr.bf16.mxu0 0
      %1746 = vmatmul.mubr.bf16.gmra.mxu0 %v1626
      %v1747 = vpop.f32.mrf.mxu0
      %v1748 = vadd.f32 0.0, %v1747
      %v1749 = vpop.f32.mrf.mxu0
      %v1750 = vpop.f32.mrf.mxu0
      %v1751 = vadd.f32 0.0, %v1750
      %v1752 = vpop.f32.mrf.mxu0
      %1753 = vmatprep.mubr.bf16.mxu0 0
      %1754 = vmatmul.mubr.bf16.gmra.mxu0 %v1627
      %v1755 = vpop.f32.mrf.mxu0
      %v1756 = vadd.f32 0.0, %v1755
      %v1757 = vpop.f32.mrf.mxu0
      %v1758 = vpop.f32.mrf.mxu0
      %v1759 = vadd.f32 0.0, %v1758
      %v1760 = vpop.f32.mrf.mxu0
      %1761 = vmatprep.mubr.bf16.mxu0 0
      %1762 = vmatmul.mubr.bf16.gmra.mxu0 %v1628
      %v1763 = vpop.f32.mrf.mxu0
      %v1764 = vadd.f32 0.0, %v1763
      %v1765 = vpop.f32.mrf.mxu0
      %v1766 = vpop.f32.mrf.mxu0
      %v1767 = vadd.f32 0.0, %v1766
      %v1768 = vpop.f32.mrf.mxu0
      %1769 = vmatprep.mubr.bf16.mxu0 0
      %1770 = vmatmul.mubr.bf16.gmra.mxu0 %v1629
      %v1771 = vpop.f32.mrf.mxu0
      %v1772 = vadd.f32 0.0, %v1771
      %v1773 = vpop.f32.mrf.mxu0
      %v1774 = vpop.f32.mrf.mxu0
      %v1775 = vadd.f32 0.0, %v1774
      %v1776 = vpop.f32.mrf.mxu0
      %1777 = vmatprep.mubr.bf16.mxu0 0
      %1778 = vmatmul.mubr.bf16.gmra.mxu0 %v1630
      %v1779 = vpop.f32.mrf.mxu0
      %v1780 = vadd.f32 0.0, %v1779
      %v1781 = vpop.f32.mrf.mxu0
      %v1782 = vpop.f32.mrf.mxu0
      %v1783 = vadd.f32 0.0, %v1782
      %v1784 = vpop.f32.mrf.mxu0
      %1785 = vmatprep.mubr.bf16.mxu0 0
      %1786 = vmatmul.mubr.bf16.gmra.mxu0 %v1631
      %v1787 = vpop.f32.mrf.mxu0
      %v1788 = vadd.f32 0.0, %v1787
      %v1789 = vpop.f32.mrf.mxu0
      %v1790 = vpop.f32.mrf.mxu0
      %v1791 = vadd.f32 0.0, %v1790
      %v1792 = vpop.f32.mrf.mxu0
      %1793 = vdwg.mxu0
      %v1794 = vmul.f32 %v1668, 0.088388346
      %v1795 = vmul.f32 %v1671, 0.088388346
      %v1796 = vmul.f32 %v1676, 0.088388346
      %v1797 = vmul.f32 %v1679, 0.088388346
      %v1798 = vmul.f32 %v1684, 0.088388346
      %v1799 = vmul.f32 %v1687, 0.088388346
      %v1800 = vmul.f32 %v1692, 0.088388346
      %v1801 = vmul.f32 %v1695, 0.088388346
      %v1802 = vmul.f32 %v1700, 0.088388346
      %v1803 = vmul.f32 %v1703, 0.088388346
      %v1804 = vmul.f32 %v1708, 0.088388346
      %v1805 = vmul.f32 %v1711, 0.088388346
      %v1806 = vmul.f32 %v1716, 0.088388346
      %v1807 = vmul.f32 %v1719, 0.088388346
      %v1808 = vmul.f32 %v1724, 0.088388346
      %v1809 = vmul.f32 %v1727, 0.088388346
      %v1810 = vmul.f32 %v1732, 0.088388346
      %v1811 = vmul.f32 %v1735, 0.088388346
      %v1812 = vmul.f32 %v1740, 0.088388346
      %v1813 = vmul.f32 %v1743, 0.088388346
      %v1814 = vmul.f32 %v1748, 0.088388346
      %v1815 = vmul.f32 %v1751, 0.088388346
      %v1816 = vmul.f32 %v1756, 0.088388346
      %v1817 = vmul.f32 %v1759, 0.088388346
      %v1818 = vmul.f32 %v1764, 0.088388346
      %v1819 = vmul.f32 %v1767, 0.088388346
      %v1820 = vmul.f32 %v1772, 0.088388346
      %v1821 = vmul.f32 %v1775, 0.088388346
      %v1822 = vmul.f32 %v1780, 0.088388346
      %v1823 = vmul.f32 %v1783, 0.088388346
      %v1824 = vmul.f32 %v1788, 0.088388346
      %v1825 = vmul.f32 %v1791, 0.088388346
      %vm1826 = vcmp.gt.f32.partialorder %v481, 0.0
      %v1827 = vsel %vm1826, 1, 0
      %v1828 = vlaneseq
      %v1829 = vshrl.u32 %v1828, 7
      %v1830 = vsub.s32 0, %v1829
      %v1831 = vrot.slane %v1827, %v1830
      %vm1832 = vcmp.eq.s32.totalorder %v1831, 1
      %v1833 = vsel %vm1832, %v1794, -1e+09
      %v1834 = vsel %vm1832, %v1795, -1e+09
      %v1835 = vsel %vm1832, %v1796, -1e+09
      %v1836 = vsel %vm1832, %v1797, -1e+09
      %v1837 = vsel %vm1832, %v1798, -1e+09
      %v1838 = vsel %vm1832, %v1799, -1e+09
      %v1839 = vsel %vm1832, %v1800, -1e+09
      %v1840 = vsel %vm1832, %v1801, -1e+09
      %v1841 = vsel %vm1832, %v1802, -1e+09
      %v1842 = vsel %vm1832, %v1803, -1e+09
      %v1843 = vsel %vm1832, %v1804, -1e+09
      %v1844 = vsel %vm1832, %v1805, -1e+09
      %v1845 = vsel %vm1832, %v1806, -1e+09
      %v1846 = vsel %vm1832, %v1807, -1e+09
      %v1847 = vsel %vm1832, %v1808, -1e+09
      %v1848 = vsel %vm1832, %v1809, -1e+09
      %v1849 = vsel %vm1832, %v1810, -1e+09
      %v1850 = vsel %vm1832, %v1811, -1e+09
      %v1851 = vsel %vm1832, %v1812, -1e+09
      %v1852 = vsel %vm1832, %v1813, -1e+09
      %v1853 = vsel %vm1832, %v1814, -1e+09
      %v1854 = vsel %vm1832, %v1815, -1e+09
      %v1855 = vsel %vm1832, %v1816, -1e+09
      %v1856 = vsel %vm1832, %v1817, -1e+09
      %v1857 = vsel %vm1832, %v1818, -1e+09
      %v1858 = vsel %vm1832, %v1819, -1e+09
      %v1859 = vsel %vm1832, %v1820, -1e+09
      %v1860 = vsel %vm1832, %v1821, -1e+09
      %v1861 = vsel %vm1832, %v1822, -1e+09
      %v1862 = vsel %vm1832, %v1823, -1e+09
      %v1863 = vsel %vm1832, %v1824, -1e+09
      %v1864 = vsel %vm1832, %v1825, -1e+09
      %v1865 = vsel %vm808, %v1833, -inf
      %1866 = vmax.xlane.f32.xlu0 %v1865
      %v1867 = vpop.xlane.xlu0 %1866
      %v1868 = vsel %vm808, %v1834, -inf
      %1869 = vmax.xlane.f32.xlu0 %v1868
      %v1870 = vpop.xlane.xlu0 %1869
      %v1871 = vsel %vm808, %v1835, -inf
      %1872 = vmax.xlane.f32.xlu0 %v1871
      %v1873 = vpop.xlane.xlu0 %1872
      %v1874 = vsel %vm808, %v1836, -inf
      %1875 = vmax.xlane.f32.xlu0 %v1874
      %v1876 = vpop.xlane.xlu0 %1875
      %v1877 = vsel %vm808, %v1837, -inf
      %1878 = vmax.xlane.f32.xlu0 %v1877
      %v1879 = vpop.xlane.xlu0 %1878
      %v1880 = vsel %vm808, %v1838, -inf
      %1881 = vmax.xlane.f32.xlu0 %v1880
      %v1882 = vpop.xlane.xlu0 %1881
      %v1883 = vsel %vm808, %v1839, -inf
      %1884 = vmax.xlane.f32.xlu0 %v1883
      %v1885 = vpop.xlane.xlu0 %1884
      %v1886 = vsel %vm808, %v1840, -inf
      %1887 = vmax.xlane.f32.xlu0 %v1886
      %v1888 = vpop.xlane.xlu0 %1887
      %v1889 = vsel %vm808, %v1841, -inf
      %1890 = vmax.xlane.f32.xlu0 %v1889
      %v1891 = vpop.xlane.xlu0 %1890
      %v1892 = vsel %vm808, %v1842, -inf
      %1893 = vmax.xlane.f32.xlu0 %v1892
      %v1894 = vpop.xlane.xlu0 %1893
      %v1895 = vsel %vm808, %v1843, -inf
      %1896 = vmax.xlane.f32.xlu0 %v1895
      %v1897 = vpop.xlane.xlu0 %1896
      %v1898 = vsel %vm808, %v1844, -inf
      %1899 = vmax.xlane.f32.xlu0 %v1898
      %v1900 = vpop.xlane.xlu0 %1899
      %v1901 = vsel %vm808, %v1845, -inf
      %1902 = vmax.xlane.f32.xlu0 %v1901
      %v1903 = vpop.xlane.xlu0 %1902
      %v1904 = vsel %vm808, %v1846, -inf
      %1905 = vmax.xlane.f32.xlu0 %v1904
      %v1906 = vpop.xlane.xlu0 %1905
      %v1907 = vsel %vm808, %v1847, -inf
      %1908 = vmax.xlane.f32.xlu0 %v1907
      %v1909 = vpop.xlane.xlu0 %1908
      %v1910 = vsel %vm808, %v1848, -inf
      %1911 = vmax.xlane.f32.xlu0 %v1910
      %v1912 = vpop.xlane.xlu0 %1911
      %v1913 = vsel %vm808, %v1849, -inf
      %1914 = vmax.xlane.f32.xlu0 %v1913
      %v1915 = vpop.xlane.xlu0 %1914
      %v1916 = vsel %vm808, %v1850, -inf
      %1917 = vmax.xlane.f32.xlu0 %v1916
      %v1918 = vpop.xlane.xlu0 %1917
      %v1919 = vsel %vm808, %v1851, -inf
      %1920 = vmax.xlane.f32.xlu0 %v1919
      %v1921 = vpop.xlane.xlu0 %1920
      %v1922 = vsel %vm808, %v1852, -inf
      %1923 = vmax.xlane.f32.xlu0 %v1922
      %v1924 = vpop.xlane.xlu0 %1923
      %v1925 = vsel %vm808, %v1853, -inf
      %1926 = vmax.xlane.f32.xlu0 %v1925
      %v1927 = vpop.xlane.xlu0 %1926
      %v1928 = vsel %vm808, %v1854, -inf
      %1929 = vmax.xlane.f32.xlu0 %v1928
      %v1930 = vpop.xlane.xlu0 %1929
      %v1931 = vsel %vm808, %v1855, -inf
      %1932 = vmax.xlane.f32.xlu0 %v1931
      %v1933 = vpop.xlane.xlu0 %1932
      %v1934 = vsel %vm808, %v1856, -inf
      %1935 = vmax.xlane.f32.xlu0 %v1934
      %v1936 = vpop.xlane.xlu0 %1935
      %v1937 = vsel %vm808, %v1857, -inf
      %1938 = vmax.xlane.f32.xlu0 %v1937
      %v1939 = vpop.xlane.xlu0 %1938
      %v1940 = vsel %vm808, %v1858, -inf
      %1941 = vmax.xlane.f32.xlu0 %v1940
      %v1942 = vpop.xlane.xlu0 %1941
      %v1943 = vsel %vm808, %v1859, -inf
      %1944 = vmax.xlane.f32.xlu0 %v1943
      %v1945 = vpop.xlane.xlu0 %1944
      %v1946 = vsel %vm808, %v1860, -inf
      %1947 = vmax.xlane.f32.xlu0 %v1946
      %v1948 = vpop.xlane.xlu0 %1947
      %v1949 = vsel %vm808, %v1861, -inf
      %1950 = vmax.xlane.f32.xlu0 %v1949
      %v1951 = vpop.xlane.xlu0 %1950
      %v1952 = vsel %vm808, %v1862, -inf
      %1953 = vmax.xlane.f32.xlu0 %v1952
      %v1954 = vpop.xlane.xlu0 %1953
      %v1955 = vsel %vm808, %v1863, -inf
      %1956 = vmax.xlane.f32.xlu0 %v1955
      %v1957 = vpop.xlane.xlu0 %1956
      %v1958 = vsel %vm808, %v1864, -inf
      %1959 = vmax.xlane.f32.xlu0 %v1958
      %v1960 = vpop.xlane.xlu0 %1959
      %v1961 = vsub.f32 %v1833, %v1867
      %v1962 = vsub.f32 %v1834, %v1870
      %v1963 = vsub.f32 %v1835, %v1873
      %v1964 = vsub.f32 %v1836, %v1876
      %v1965 = vsub.f32 %v1837, %v1879
      %v1966 = vsub.f32 %v1838, %v1882
      %v1967 = vsub.f32 %v1839, %v1885
      %v1968 = vsub.f32 %v1840, %v1888
      %v1969 = vsub.f32 %v1841, %v1891
      %v1970 = vsub.f32 %v1842, %v1894
      %v1971 = vsub.f32 %v1843, %v1897
      %v1972 = vsub.f32 %v1844, %v1900
      %v1973 = vsub.f32 %v1845, %v1903
      %v1974 = vsub.f32 %v1846, %v1906
      %v1975 = vsub.f32 %v1847, %v1909
      %v1976 = vsub.f32 %v1848, %v1912
      %v1977 = vsub.f32 %v1849, %v1915
      %v1978 = vsub.f32 %v1850, %v1918
      %v1979 = vsub.f32 %v1851, %v1921
      %v1980 = vsub.f32 %v1852, %v1924
      %v1981 = vsub.f32 %v1853, %v1927
      %v1982 = vsub.f32 %v1854, %v1930
      %v1983 = vsub.f32 %v1855, %v1933
      %v1984 = vsub.f32 %v1856, %v1936
      %v1985 = vsub.f32 %v1857, %v1939
      %v1986 = vsub.f32 %v1858, %v1942
      %v1987 = vsub.f32 %v1859, %v1945
      %v1988 = vsub.f32 %v1860, %v1948
      %v1989 = vsub.f32 %v1861, %v1951
      %v1990 = vsub.f32 %v1862, %v1954
      %v1991 = vsub.f32 %v1863, %v1957
      %v1992 = vsub.f32 %v1864, %v1960
      %v1993 = vmul.f32 %v1961, 1.442695
      %v1994 = vpow.pop %v1993
      %v1995 = vmul.f32 %v1962, 1.442695
      %v1996 = vpow.pop %v1995
      %v1997 = vmul.f32 %v1963, 1.442695
      %v1998 = vpow.pop %v1997
      %v1999 = vmul.f32 %v1964, 1.442695
      %v2000 = vpow.pop %v1999
      %v2001 = vmul.f32 %v1965, 1.442695
      %v2002 = vpow.pop %v2001
      %v2003 = vmul.f32 %v1966, 1.442695
      %v2004 = vpow.pop %v2003
      %v2005 = vmul.f32 %v1967, 1.442695
      %v2006 = vpow.pop %v2005
      %v2007 = vmul.f32 %v1968, 1.442695
      %v2008 = vpow.pop %v2007
      %v2009 = vmul.f32 %v1969, 1.442695
      %v2010 = vpow.pop %v2009
      %v2011 = vmul.f32 %v1970, 1.442695
      %v2012 = vpow.pop %v2011
      %v2013 = vmul.f32 %v1971, 1.442695
      %v2014 = vpow.pop %v2013
      %v2015 = vmul.f32 %v1972, 1.442695
      %v2016 = vpow.pop %v2015
      %v2017 = vmul.f32 %v1973, 1.442695
      %v2018 = vpow.pop %v2017
      %v2019 = vmul.f32 %v1974, 1.442695
      %v2020 = vpow.pop %v2019
      %v2021 = vmul.f32 %v1975, 1.442695
      %v2022 = vpow.pop %v2021
      %v2023 = vmul.f32 %v1976, 1.442695
      %v2024 = vpow.pop %v2023
      %v2025 = vmul.f32 %v1977, 1.442695
      %v2026 = vpow.pop %v2025
      %v2027 = vmul.f32 %v1978, 1.442695
      %v2028 = vpow.pop %v2027
      %v2029 = vmul.f32 %v1979, 1.442695
      %v2030 = vpow.pop %v2029
      %v2031 = vmul.f32 %v1980, 1.442695
      %v2032 = vpow.pop %v2031
      %v2033 = vmul.f32 %v1981, 1.442695
      %v2034 = vpow.pop %v2033
      %v2035 = vmul.f32 %v1982, 1.442695
      %v2036 = vpow.pop %v2035
      %v2037 = vmul.f32 %v1983, 1.442695
      %v2038 = vpow.pop %v2037
      %v2039 = vmul.f32 %v1984, 1.442695
      %v2040 = vpow.pop %v2039
      %v2041 = vmul.f32 %v1985, 1.442695
      %v2042 = vpow.pop %v2041
      %v2043 = vmul.f32 %v1986, 1.442695
      %v2044 = vpow.pop %v2043
      %v2045 = vmul.f32 %v1987, 1.442695
      %v2046 = vpow.pop %v2045
      %v2047 = vmul.f32 %v1988, 1.442695
      %v2048 = vpow.pop %v2047
      %v2049 = vmul.f32 %v1989, 1.442695
      %v2050 = vpow.pop %v2049
      %v2051 = vmul.f32 %v1990, 1.442695
      %v2052 = vpow.pop %v2051
      %v2053 = vmul.f32 %v1991, 1.442695
      %v2054 = vpow.pop %v2053
      %v2055 = vmul.f32 %v1992, 1.442695
      %v2056 = vpow.pop %v2055
      %v2058 = vlaneseq
      %v2059 = vshrl.u32 %v2058, 7
      %v2060 = vsub.s32 0, %v2059
      %v2061 = vrot.slane %v481, %v2060
      %v2063 = vmul.f32 %v1994, %v2061
      %v2064 = vmul.f32 %v1996, %v2061
      %v2065 = vmul.f32 %v1998, %v2061
      %v2066 = vmul.f32 %v2000, %v2061
      %v2067 = vmul.f32 %v2002, %v2061
      %v2068 = vmul.f32 %v2004, %v2061
      %v2069 = vmul.f32 %v2006, %v2061
      %v2070 = vmul.f32 %v2008, %v2061
      %v2071 = vmul.f32 %v2010, %v2061
      %v2072 = vmul.f32 %v2012, %v2061
      %v2073 = vmul.f32 %v2014, %v2061
      %v2074 = vmul.f32 %v2016, %v2061
      %v2075 = vmul.f32 %v2018, %v2061
      %v2076 = vmul.f32 %v2020, %v2061
      %v2077 = vmul.f32 %v2022, %v2061
      %v2078 = vmul.f32 %v2024, %v2061
      %v2079 = vmul.f32 %v2026, %v2061
      %v2080 = vmul.f32 %v2028, %v2061
      %v2081 = vmul.f32 %v2030, %v2061
      %v2082 = vmul.f32 %v2032, %v2061
      %v2083 = vmul.f32 %v2034, %v2061
      %v2084 = vmul.f32 %v2036, %v2061
      %v2085 = vmul.f32 %v2038, %v2061
      %v2086 = vmul.f32 %v2040, %v2061
      %v2087 = vmul.f32 %v2042, %v2061
      %v2088 = vmul.f32 %v2044, %v2061
      %v2089 = vmul.f32 %v2046, %v2061
      %v2090 = vmul.f32 %v2048, %v2061
      %v2091 = vmul.f32 %v2050, %v2061
      %v2092 = vmul.f32 %v2052, %v2061
      %v2093 = vmul.f32 %v2054, %v2061
      %v2094 = vmul.f32 %v2056, %v2061
      %v2095 = vsel %vm808, %v2063, 0.0
      %2096 = vadd.xlane.f32.xlu0 %v2095
      %v2097 = vpop.xlane.xlu0 %2096
      %v2098 = vsel %vm808, %v2064, 0.0
      %2099 = vadd.xlane.f32.xlu0 %v2098
      %v2100 = vpop.xlane.xlu0 %2099
      %v2101 = vsel %vm808, %v2065, 0.0
      %2102 = vadd.xlane.f32.xlu0 %v2101
      %v2103 = vpop.xlane.xlu0 %2102
      %v2104 = vsel %vm808, %v2066, 0.0
      %2105 = vadd.xlane.f32.xlu0 %v2104
      %v2106 = vpop.xlane.xlu0 %2105
      %v2107 = vsel %vm808, %v2067, 0.0
      %2108 = vadd.xlane.f32.xlu0 %v2107
      %v2109 = vpop.xlane.xlu0 %2108
      %v2110 = vsel %vm808, %v2068, 0.0
      %2111 = vadd.xlane.f32.xlu0 %v2110
      %v2112 = vpop.xlane.xlu0 %2111
      %v2113 = vsel %vm808, %v2069, 0.0
      %2114 = vadd.xlane.f32.xlu0 %v2113
      %v2115 = vpop.xlane.xlu0 %2114
      %v2116 = vsel %vm808, %v2070, 0.0
      %2117 = vadd.xlane.f32.xlu0 %v2116
      %v2118 = vpop.xlane.xlu0 %2117
      %v2119 = vsel %vm808, %v2071, 0.0
      %2120 = vadd.xlane.f32.xlu0 %v2119
      %v2121 = vpop.xlane.xlu0 %2120
      %v2122 = vsel %vm808, %v2072, 0.0
      %2123 = vadd.xlane.f32.xlu0 %v2122
      %v2124 = vpop.xlane.xlu0 %2123
      %v2125 = vsel %vm808, %v2073, 0.0
      %2126 = vadd.xlane.f32.xlu0 %v2125
      %v2127 = vpop.xlane.xlu0 %2126
      %v2128 = vsel %vm808, %v2074, 0.0
      %2129 = vadd.xlane.f32.xlu0 %v2128
      %v2130 = vpop.xlane.xlu0 %2129
      %v2131 = vsel %vm808, %v2075, 0.0
      %2132 = vadd.xlane.f32.xlu0 %v2131
      %v2133 = vpop.xlane.xlu0 %2132
      %v2134 = vsel %vm808, %v2076, 0.0
      %2135 = vadd.xlane.f32.xlu0 %v2134
      %v2136 = vpop.xlane.xlu0 %2135
      %v2137 = vsel %vm808, %v2077, 0.0
      %2138 = vadd.xlane.f32.xlu0 %v2137
      %v2139 = vpop.xlane.xlu0 %2138
      %v2140 = vsel %vm808, %v2078, 0.0
      %2141 = vadd.xlane.f32.xlu0 %v2140
      %v2142 = vpop.xlane.xlu0 %2141
      %v2143 = vsel %vm808, %v2079, 0.0
      %2144 = vadd.xlane.f32.xlu0 %v2143
      %v2145 = vpop.xlane.xlu0 %2144
      %v2146 = vsel %vm808, %v2080, 0.0
      %2147 = vadd.xlane.f32.xlu0 %v2146
      %v2148 = vpop.xlane.xlu0 %2147
      %v2149 = vsel %vm808, %v2081, 0.0
      %2150 = vadd.xlane.f32.xlu0 %v2149
      %v2151 = vpop.xlane.xlu0 %2150
      %v2152 = vsel %vm808, %v2082, 0.0
      %2153 = vadd.xlane.f32.xlu0 %v2152
      %v2154 = vpop.xlane.xlu0 %2153
      %v2155 = vsel %vm808, %v2083, 0.0
      %2156 = vadd.xlane.f32.xlu0 %v2155
      %v2157 = vpop.xlane.xlu0 %2156
      %v2158 = vsel %vm808, %v2084, 0.0
      %2159 = vadd.xlane.f32.xlu0 %v2158
      %v2160 = vpop.xlane.xlu0 %2159
      %v2161 = vsel %vm808, %v2085, 0.0
      %2162 = vadd.xlane.f32.xlu0 %v2161
      %v2163 = vpop.xlane.xlu0 %2162
      %v2164 = vsel %vm808, %v2086, 0.0
      %2165 = vadd.xlane.f32.xlu0 %v2164
      %v2166 = vpop.xlane.xlu0 %2165
      %v2167 = vsel %vm808, %v2087, 0.0
      %2168 = vadd.xlane.f32.xlu0 %v2167
      %v2169 = vpop.xlane.xlu0 %2168
      %v2170 = vsel %vm808, %v2088, 0.0
      %2171 = vadd.xlane.f32.xlu0 %v2170
      %v2172 = vpop.xlane.xlu0 %2171
      %v2173 = vsel %vm808, %v2089, 0.0
      %2174 = vadd.xlane.f32.xlu0 %v2173
      %v2175 = vpop.xlane.xlu0 %2174
      %v2176 = vsel %vm808, %v2090, 0.0
      %2177 = vadd.xlane.f32.xlu0 %v2176
      %v2178 = vpop.xlane.xlu0 %2177
      %v2179 = vsel %vm808, %v2091, 0.0
      %2180 = vadd.xlane.f32.xlu0 %v2179
      %v2181 = vpop.xlane.xlu0 %2180
      %v2182 = vsel %vm808, %v2092, 0.0
      %2183 = vadd.xlane.f32.xlu0 %v2182
      %v2184 = vpop.xlane.xlu0 %2183
      %v2185 = vsel %vm808, %v2093, 0.0
      %2186 = vadd.xlane.f32.xlu0 %v2185
      %v2187 = vpop.xlane.xlu0 %2186
      %v2188 = vsel %vm808, %v2094, 0.0
      %2189 = vadd.xlane.f32.xlu0 %v2188
      %v2190 = vpop.xlane.xlu0 %2189
      %v2191 = vmax.f32 %v2097, 1e-06
      %v2192 = vmax.f32 %v2100, 1e-06
      %v2193 = vmax.f32 %v2103, 1e-06
      %v2194 = vmax.f32 %v2106, 1e-06
      %v2195 = vmax.f32 %v2109, 1e-06
      %v2196 = vmax.f32 %v2112, 1e-06
      %v2197 = vmax.f32 %v2115, 1e-06
      %v2198 = vmax.f32 %v2118, 1e-06
      %v2199 = vmax.f32 %v2121, 1e-06
      %v2200 = vmax.f32 %v2124, 1e-06
      %v2201 = vmax.f32 %v2127, 1e-06
      %v2202 = vmax.f32 %v2130, 1e-06
      %v2203 = vmax.f32 %v2133, 1e-06
      %v2204 = vmax.f32 %v2136, 1e-06
      %v2205 = vmax.f32 %v2139, 1e-06
      %v2206 = vmax.f32 %v2142, 1e-06
      %v2207 = vmax.f32 %v2145, 1e-06
      %v2208 = vmax.f32 %v2148, 1e-06
      %v2209 = vmax.f32 %v2151, 1e-06
      %v2210 = vmax.f32 %v2154, 1e-06
      %v2211 = vmax.f32 %v2157, 1e-06
      %v2212 = vmax.f32 %v2160, 1e-06
      %v2213 = vmax.f32 %v2163, 1e-06
      %v2214 = vmax.f32 %v2166, 1e-06
      %v2215 = vmax.f32 %v2169, 1e-06
      %v2216 = vmax.f32 %v2172, 1e-06
      %v2217 = vmax.f32 %v2175, 1e-06
      %v2218 = vmax.f32 %v2178, 1e-06
      %v2219 = vmax.f32 %v2181, 1e-06
      %v2220 = vmax.f32 %v2184, 1e-06
      %v2221 = vmax.f32 %v2187, 1e-06
      %v2222 = vmax.f32 %v2190, 1e-06
      %v2223 = vrcp.pop %v2191
      %v2224 = vrcp.pop %v2192
      %v2225 = vrcp.pop %v2193
      %v2226 = vrcp.pop %v2194
      %v2227 = vrcp.pop %v2195
      %v2228 = vrcp.pop %v2196
      %v2229 = vrcp.pop %v2197
      %v2230 = vrcp.pop %v2198
      %v2231 = vrcp.pop %v2199
      %v2232 = vrcp.pop %v2200
      %v2233 = vrcp.pop %v2201
      %v2234 = vrcp.pop %v2202
      %v2235 = vrcp.pop %v2203
      %v2236 = vrcp.pop %v2204
      %v2237 = vrcp.pop %v2205
      %v2238 = vrcp.pop %v2206
      %v2239 = vrcp.pop %v2207
      %v2240 = vrcp.pop %v2208
      %v2241 = vrcp.pop %v2209
      %v2242 = vrcp.pop %v2210
      %v2243 = vrcp.pop %v2211
      %v2244 = vrcp.pop %v2212
      %v2245 = vrcp.pop %v2213
      %v2246 = vrcp.pop %v2214
      %v2247 = vrcp.pop %v2215
      %v2248 = vrcp.pop %v2216
      %v2249 = vrcp.pop %v2217
      %v2250 = vrcp.pop %v2218
      %v2251 = vrcp.pop %v2219
      %v2252 = vrcp.pop %v2220
      %v2253 = vrcp.pop %v2221
      %v2254 = vrcp.pop %v2222
      %v2255 = vmul.f32 %v2063, %v2223
      %v2256 = vmul.f32 %v2064, %v2224
      %v2257 = vmul.f32 %v2065, %v2225
      %v2258 = vmul.f32 %v2066, %v2226
      %v2259 = vmul.f32 %v2067, %v2227
      %v2260 = vmul.f32 %v2068, %v2228
      %v2261 = vmul.f32 %v2069, %v2229
      %v2262 = vmul.f32 %v2070, %v2230
      %v2263 = vmul.f32 %v2071, %v2231
      %v2264 = vmul.f32 %v2072, %v2232
      %v2265 = vmul.f32 %v2073, %v2233
      %v2266 = vmul.f32 %v2074, %v2234
      %v2267 = vmul.f32 %v2075, %v2235
      %v2268 = vmul.f32 %v2076, %v2236
      %v2269 = vmul.f32 %v2077, %v2237
      %v2270 = vmul.f32 %v2078, %v2238
      %v2271 = vmul.f32 %v2079, %v2239
      %v2272 = vmul.f32 %v2080, %v2240
      %v2273 = vmul.f32 %v2081, %v2241
      %v2274 = vmul.f32 %v2082, %v2242
      %v2275 = vmul.f32 %v2083, %v2243
      %v2276 = vmul.f32 %v2084, %v2244
      %v2277 = vmul.f32 %v2085, %v2245
      %v2278 = vmul.f32 %v2086, %v2246
      %v2279 = vmul.f32 %v2087, %v2247
      %v2280 = vmul.f32 %v2088, %v2248
      %v2281 = vmul.f32 %v2089, %v2249
      %v2282 = vmul.f32 %v2090, %v2250
      %v2283 = vmul.f32 %v2091, %v2251
      %v2284 = vmul.f32 %v2092, %v2252
      %v2285 = vmul.f32 %v2093, %v2253
      %v2286 = vmul.f32 %v2094, %v2254
      %v2287 = vpack.c.bf16 %v2256, %v2255
      %v2288 = vpack.c.bf16 %v2258, %v2257
      %v2289 = vpack.c.bf16 %v2260, %v2259
      %v2290 = vpack.c.bf16 %v2262, %v2261
      %v2291 = vpack.c.bf16 %v2264, %v2263
      %v2292 = vpack.c.bf16 %v2266, %v2265
      %v2293 = vpack.c.bf16 %v2268, %v2267
      %v2294 = vpack.c.bf16 %v2270, %v2269
      %v2295 = vpack.c.bf16 %v2272, %v2271
      %v2296 = vpack.c.bf16 %v2274, %v2273
      %v2297 = vpack.c.bf16 %v2276, %v2275
      %v2298 = vpack.c.bf16 %v2278, %v2277
      %v2299 = vpack.c.bf16 %v2280, %v2279
      %v2300 = vpack.c.bf16 %v2282, %v2281
      %v2301 = vpack.c.bf16 %v2284, %v2283
      %v2302 = vpack.c.bf16 %v2286, %v2285
      %v2303 = vpack.c.bf16 %v1614, %v1610
      %v2305 = vsel %vm808, %v2287, 0
      %v2308 = vsel %vm808, %v2288, 0
      %v2311 = vsel %vm808, %v2289, 0
      %v2314 = vsel %vm808, %v2290, 0
      %v2317 = vsel %vm808, %v2291, 0
      %v2320 = vsel %vm808, %v2292, 0
      %v2323 = vsel %vm808, %v2293, 0
      %v2326 = vsel %vm808, %v2294, 0
      %v2329 = vsel %vm808, %v2295, 0
      %v2332 = vsel %vm808, %v2296, 0
      %v2335 = vsel %vm808, %v2297, 0
      %v2338 = vsel %vm808, %v2298, 0
      %v2341 = vsel %vm808, %v2299, 0
      %v2344 = vsel %vm808, %v2300, 0
      %v2347 = vsel %vm808, %v2301, 0
      %v2350 = vsel %vm808, %v2302, 0
      %2352 = vmatprep.subr.bf16.mxu0 0
      %2353 = vmatpush1.bf16.msra.mxu0 0
      %2354 = vmatprep.subr.bf16.mxu0 0
      %2355 = vmatpush1.bf16.msra.mxu0 0
      %2356 = vmatprep.subr.bf16.mxu0 0
      %2357 = vmatpush1.bf16.msra.mxu0 0
      %2358 = vmatprep.subr.bf16.mxu0 0
      %2359 = vmatpush1.bf16.msra.mxu0 0
      %2360 = vmatprep.subr.bf16.mxu0 0
      %2361 = vmatpush1.bf16.msra.mxu0 0
      %2362 = vmatprep.subr.bf16.mxu0 0
      %2363 = vmatpush1.bf16.msra.mxu0 0
      %2364 = vmatprep.subr.bf16.mxu0 0
      %2365 = vmatpush1.bf16.msra.mxu0 0
      %2366 = vmatprep.subr.bf16.mxu0 0
      %2367 = vmatpush1.bf16.msra.mxu0 %v2303
      %2368 = vmatprep.subr.bf16.mxu0 0
      %2369 = vmatpush2.bf16.msra.mxu0 0
      %2370 = vmatprep.subr.bf16.mxu0 0
      %2371 = vmatpush2.bf16.msra.mxu0 0
      %2372 = vmatprep.subr.bf16.mxu0 0
      %2373 = vmatpush2.bf16.msra.mxu0 0
      %2374 = vmatprep.subr.bf16.mxu0 0
      %2375 = vmatpush2.bf16.msra.mxu0 0
      %2376 = vmatprep.subr.bf16.mxu0 0
      %2377 = vmatpush2.bf16.msra.mxu0 0
      %2378 = vmatprep.subr.bf16.mxu0 0
      %2379 = vmatpush2.bf16.msra.mxu0 0
      %2380 = vmatprep.subr.bf16.mxu0 0
      %2381 = vmatpush2.bf16.msra.mxu0 0
      %2382 = vmatprep.subr.bf16.mxu0 0
      %2383 = vmatpush2.bf16.msra.mxu0 0
      %2384 = vmatprep.mubr.bf16.mxu0 0
      %2385 = vmatmul.mubr.bf16.gmra.mxu0 %v2305
      %v2386 = vpop.f32.mrf.mxu0
      %v2387 = vadd.f32 0.0, %v2386
      %v2388 = vpop.f32.mrf.mxu0
      %v2389 = vpop.f32.mrf.mxu0
      %v2390 = vadd.f32 0.0, %v2389
      %v2391 = vpop.f32.mrf.mxu0
      %2392 = vmatprep.mubr.bf16.mxu0 0
      %2393 = vmatmul.mubr.bf16.gmra.mxu0 %v2308
      %v2394 = vpop.f32.mrf.mxu0
      %v2395 = vadd.f32 0.0, %v2394
      %v2396 = vpop.f32.mrf.mxu0
      %v2397 = vpop.f32.mrf.mxu0
      %v2398 = vadd.f32 0.0, %v2397
      %v2399 = vpop.f32.mrf.mxu0
      %2400 = vmatprep.mubr.bf16.mxu0 0
      %2401 = vmatmul.mubr.bf16.gmra.mxu0 %v2311
      %v2402 = vpop.f32.mrf.mxu0
      %v2403 = vadd.f32 0.0, %v2402
      %v2404 = vpop.f32.mrf.mxu0
      %v2405 = vpop.f32.mrf.mxu0
      %v2406 = vadd.f32 0.0, %v2405
      %v2407 = vpop.f32.mrf.mxu0
      %2408 = vmatprep.mubr.bf16.mxu0 0
      %2409 = vmatmul.mubr.bf16.gmra.mxu0 %v2314
      %v2410 = vpop.f32.mrf.mxu0
      %v2411 = vadd.f32 0.0, %v2410
      %v2412 = vpop.f32.mrf.mxu0
      %v2413 = vpop.f32.mrf.mxu0
      %v2414 = vadd.f32 0.0, %v2413
      %v2415 = vpop.f32.mrf.mxu0
      %2416 = vmatprep.mubr.bf16.mxu0 0
      %2417 = vmatmul.mubr.bf16.gmra.mxu0 %v2317
      %v2418 = vpop.f32.mrf.mxu0
      %v2419 = vadd.f32 0.0, %v2418
      %v2420 = vpop.f32.mrf.mxu0
      %v2421 = vpop.f32.mrf.mxu0
      %v2422 = vadd.f32 0.0, %v2421
      %v2423 = vpop.f32.mrf.mxu0
      %2424 = vmatprep.mubr.bf16.mxu0 0
      %2425 = vmatmul.mubr.bf16.gmra.mxu0 %v2320
      %v2426 = vpop.f32.mrf.mxu0
      %v2427 = vadd.f32 0.0, %v2426
      %v2428 = vpop.f32.mrf.mxu0
      %v2429 = vpop.f32.mrf.mxu0
      %v2430 = vadd.f32 0.0, %v2429
      %v2431 = vpop.f32.mrf.mxu0
      %2432 = vmatprep.mubr.bf16.mxu0 0
      %2433 = vmatmul.mubr.bf16.gmra.mxu0 %v2323
      %v2434 = vpop.f32.mrf.mxu0
      %v2435 = vadd.f32 0.0, %v2434
      %v2436 = vpop.f32.mrf.mxu0
      %v2437 = vpop.f32.mrf.mxu0
      %v2438 = vadd.f32 0.0, %v2437
      %v2439 = vpop.f32.mrf.mxu0
      %2440 = vmatprep.mubr.bf16.mxu0 0
      %2441 = vmatmul.mubr.bf16.gmra.mxu0 %v2326
      %v2442 = vpop.f32.mrf.mxu0
      %v2443 = vadd.f32 0.0, %v2442
      %v2444 = vpop.f32.mrf.mxu0
      %v2445 = vpop.f32.mrf.mxu0
      %v2446 = vadd.f32 0.0, %v2445
      %v2447 = vpop.f32.mrf.mxu0
      %2448 = vmatprep.mubr.bf16.mxu0 0
      %2449 = vmatmul.mubr.bf16.gmra.mxu0 %v2329
      %v2450 = vpop.f32.mrf.mxu0
      %v2451 = vadd.f32 0.0, %v2450
      %v2452 = vpop.f32.mrf.mxu0
      %v2453 = vpop.f32.mrf.mxu0
      %v2454 = vadd.f32 0.0, %v2453
      %v2455 = vpop.f32.mrf.mxu0
      %2456 = vmatprep.mubr.bf16.mxu0 0
      %2457 = vmatmul.mubr.bf16.gmra.mxu0 %v2332
      %v2458 = vpop.f32.mrf.mxu0
      %v2459 = vadd.f32 0.0, %v2458
      %v2460 = vpop.f32.mrf.mxu0
      %v2461 = vpop.f32.mrf.mxu0
      %v2462 = vadd.f32 0.0, %v2461
      %v2463 = vpop.f32.mrf.mxu0
      %2464 = vmatprep.mubr.bf16.mxu0 0
      %2465 = vmatmul.mubr.bf16.gmra.mxu0 %v2335
      %v2466 = vpop.f32.mrf.mxu0
      %v2467 = vadd.f32 0.0, %v2466
      %v2468 = vpop.f32.mrf.mxu0
      %v2469 = vpop.f32.mrf.mxu0
      %v2470 = vadd.f32 0.0, %v2469
      %v2471 = vpop.f32.mrf.mxu0
      %2472 = vmatprep.mubr.bf16.mxu0 0
      %2473 = vmatmul.mubr.bf16.gmra.mxu0 %v2338
      %v2474 = vpop.f32.mrf.mxu0
      %v2475 = vadd.f32 0.0, %v2474
      %v2476 = vpop.f32.mrf.mxu0
      %v2477 = vpop.f32.mrf.mxu0
      %v2478 = vadd.f32 0.0, %v2477
      %v2479 = vpop.f32.mrf.mxu0
      %2480 = vmatprep.mubr.bf16.mxu0 0
      %2481 = vmatmul.mubr.bf16.gmra.mxu0 %v2341
      %v2482 = vpop.f32.mrf.mxu0
      %v2483 = vadd.f32 0.0, %v2482
      %v2484 = vpop.f32.mrf.mxu0
      %v2485 = vpop.f32.mrf.mxu0
      %v2486 = vadd.f32 0.0, %v2485
      %v2487 = vpop.f32.mrf.mxu0
      %2488 = vmatprep.mubr.bf16.mxu0 0
      %2489 = vmatmul.mubr.bf16.gmra.mxu0 %v2344
      %v2490 = vpop.f32.mrf.mxu0
      %v2491 = vadd.f32 0.0, %v2490
      %v2492 = vpop.f32.mrf.mxu0
      %v2493 = vpop.f32.mrf.mxu0
      %v2494 = vadd.f32 0.0, %v2493
      %v2495 = vpop.f32.mrf.mxu0
      %2496 = vmatprep.mubr.bf16.mxu0 0
      %2497 = vmatmul.mubr.bf16.gmra.mxu0 %v2347
      %v2498 = vpop.f32.mrf.mxu0
      %v2499 = vadd.f32 0.0, %v2498
      %v2500 = vpop.f32.mrf.mxu0
      %v2501 = vpop.f32.mrf.mxu0
      %v2502 = vadd.f32 0.0, %v2501
      %v2503 = vpop.f32.mrf.mxu0
      %2504 = vmatprep.mubr.bf16.mxu0 0
      %2505 = vmatmul.mubr.bf16.gmra.mxu0 %v2350
      %v2506 = vpop.f32.mrf.mxu0
      %v2507 = vadd.f32 0.0, %v2506
      %v2508 = vpop.f32.mrf.mxu0
      %v2509 = vpop.f32.mrf.mxu0
      %v2510 = vadd.f32 0.0, %v2509
      %v2511 = vpop.f32.mrf.mxu0
      %2512 = vdwg.mxu0
      %v2513 = vpack.c.bf16 %v2390, %v2387
      %v2514 = vpack.c.bf16 %v2398, %v2395
      %v2515 = vpack.c.bf16 %v2406, %v2403
      %v2516 = vpack.c.bf16 %v2414, %v2411
      %v2517 = vpack.c.bf16 %v2422, %v2419
      %v2518 = vpack.c.bf16 %v2430, %v2427
      %v2519 = vpack.c.bf16 %v2438, %v2435
      %v2520 = vpack.c.bf16 %v2446, %v2443
      %v2521 = vpack.c.bf16 %v2454, %v2451
      %v2522 = vpack.c.bf16 %v2462, %v2459
      %v2523 = vpack.c.bf16 %v2470, %v2467
      %v2524 = vpack.c.bf16 %v2478, %v2475
      %v2525 = vpack.c.bf16 %v2486, %v2483
      %v2526 = vpack.c.bf16 %v2494, %v2491
      %v2527 = vpack.c.bf16 %v2502, %v2499
      %v2528 = vpack.c.bf16 %v2510, %v2507
      %v2529 = vld [vmem:[%s8] sm:$0xf]
      %v2530 = vld [vmem:[%s8 + $0x4] sm:$0xf]
      %v2531 = vld [vmem:[%s8 + $0x8] sm:$0xf]
      %v2532 = vld [vmem:[%s8 + $0xc] sm:$0xf]
      %v2533 = vld [vmem:[%s8 + $0x10] sm:$0xf]
      %v2534 = vld [vmem:[%s8 + $0x14] sm:$0xf]
      %v2535 = vld [vmem:[%s8 + $0x18] sm:$0xf]
      %v2536 = vld [vmem:[%s8 + $0x1c] sm:$0xf]
      %v2537 = vld [vmem:[%s8 + $0x20] sm:$0xf]
      %v2538 = vld [vmem:[%s8 + $0x24] sm:$0xf]
      %v2539 = vld [vmem:[%s8 + $0x28] sm:$0xf]
      %v2540 = vld [vmem:[%s8 + $0x2c] sm:$0xf]
      %v2541 = vld [vmem:[%s8 + $0x30] sm:$0xf]
      %v2542 = vld [vmem:[%s8 + $0x34] sm:$0xf]
      %v2543 = vld [vmem:[%s8 + $0x38] sm:$0xf]
      %v2544 = vld [vmem:[%s8 + $0x3c] sm:$0xf]
      %v2561 = vunpack.c.l.b16 %v2529
      %v2562 = vunpack.c.l.b16 %v2530
      %v2563 = vunpack.c.l.b16 %v2531
      %v2564 = vunpack.c.l.b16 %v2532
      %v2565 = vunpack.c.l.b16 %v2533
      %v2566 = vunpack.c.l.b16 %v2534
      %v2567 = vunpack.c.l.b16 %v2535
      %v2568 = vunpack.c.l.b16 %v2536
      %v2569 = vunpack.c.l.b16 %v2537
      %v2570 = vunpack.c.l.b16 %v2538
      %v2571 = vunpack.c.l.b16 %v2539
      %v2572 = vunpack.c.l.b16 %v2540
      %v2573 = vunpack.c.l.b16 %v2541
      %v2574 = vunpack.c.l.b16 %v2542
      %v2575 = vunpack.c.l.b16 %v2543
      %v2576 = vunpack.c.l.b16 %v2544
      %v2577 = vpack.c.b16 %v2562, %v2561
      %v2578 = vpack.c.b16 %v2564, %v2563
      %v2579 = vpack.c.b16 %v2566, %v2565
      %v2580 = vpack.c.b16 %v2568, %v2567
      %v2581 = vpack.c.b16 %v2570, %v2569
      %v2582 = vpack.c.b16 %v2572, %v2571
      %v2583 = vpack.c.b16 %v2574, %v2573
      %v2584 = vpack.c.b16 %v2576, %v2575
      %2593 = vmatprep.subr.bf16.mxu0 0
      %2594 = vmatpush1.bf16.msra.mxu0 %v2584
      %2595 = vmatprep.subr.bf16.mxu0 0
      %2596 = vmatpush1.bf16.msra.mxu0 %v2583
      %2597 = vmatprep.subr.bf16.mxu0 0
      %2598 = vmatpush1.bf16.msra.mxu0 %v2582
      %2599 = vmatprep.subr.bf16.mxu0 0
      %2600 = vmatpush1.bf16.msra.mxu0 %v2581
      %2601 = vmatprep.subr.bf16.mxu0 0
      %2602 = vmatpush1.bf16.msra.mxu0 %v2580
      %2603 = vmatprep.subr.bf16.mxu0 0
      %2604 = vmatpush1.bf16.msra.mxu0 %v2579
      %2605 = vmatprep.subr.bf16.mxu0 0
      %2606 = vmatpush1.bf16.msra.mxu0 %v2578
      %2607 = vmatprep.subr.bf16.mxu0 0
      %2608 = vmatpush1.bf16.msra.mxu0 %v2577
      %2609 = vmatprep.subr.bf16.mxu0 0
      %2610 = vmatpush2.bf16.msra.mxu0 0
      %2611 = vmatprep.subr.bf16.mxu0 0
      %2612 = vmatpush2.bf16.msra.mxu0 0
      %2613 = vmatprep.subr.bf16.mxu0 0
      %2614 = vmatpush2.bf16.msra.mxu0 0
      %2615 = vmatprep.subr.bf16.mxu0 0
      %2616 = vmatpush2.bf16.msra.mxu0 0
      %2617 = vmatprep.subr.bf16.mxu0 0
      %2618 = vmatpush2.bf16.msra.mxu0 0
      %2619 = vmatprep.subr.bf16.mxu0 0
      %2620 = vmatpush2.bf16.msra.mxu0 0
      %2621 = vmatprep.subr.bf16.mxu0 0
      %2622 = vmatpush2.bf16.msra.mxu0 0
      %2623 = vmatprep.subr.bf16.mxu0 0
      %2624 = vmatpush2.bf16.msra.mxu0 0
      %2625 = vmatprep.mubr.bf16.mxu0 0
      %2626 = vmatmul.mubr.bf16.gmra.mxu0 %v2513
      %v2627 = vpop.f32.mrf.mxu0
      %v2628 = vadd.f32 0.0, %v2627
      %v2629 = vpop.f32.mrf.mxu0
      %v2630 = vpop.f32.mrf.mxu0
      %v2631 = vadd.f32 0.0, %v2630
      %v2632 = vpop.f32.mrf.mxu0
      %2633 = vmatprep.mubr.bf16.mxu0 0
      %2634 = vmatmul.mubr.bf16.gmra.mxu0 %v2514
      %v2635 = vpop.f32.mrf.mxu0
      %v2636 = vadd.f32 0.0, %v2635
      %v2637 = vpop.f32.mrf.mxu0
      %v2638 = vpop.f32.mrf.mxu0
      %v2639 = vadd.f32 0.0, %v2638
      %v2640 = vpop.f32.mrf.mxu0
      %2641 = vmatprep.mubr.bf16.mxu0 0
      %2642 = vmatmul.mubr.bf16.gmra.mxu0 %v2515
      %v2643 = vpop.f32.mrf.mxu0
      %v2644 = vadd.f32 0.0, %v2643
      %v2645 = vpop.f32.mrf.mxu0
      %v2646 = vpop.f32.mrf.mxu0
      %v2647 = vadd.f32 0.0, %v2646
      %v2648 = vpop.f32.mrf.mxu0
      %2649 = vmatprep.mubr.bf16.mxu0 0
      %2650 = vmatmul.mubr.bf16.gmra.mxu0 %v2516
      %v2651 = vpop.f32.mrf.mxu0
      %v2652 = vadd.f32 0.0, %v2651
      %v2653 = vpop.f32.mrf.mxu0
      %v2654 = vpop.f32.mrf.mxu0
      %v2655 = vadd.f32 0.0, %v2654
      %v2656 = vpop.f32.mrf.mxu0
      %2657 = vmatprep.mubr.bf16.mxu0 0
      %2658 = vmatmul.mubr.bf16.gmra.mxu0 %v2517
      %v2659 = vpop.f32.mrf.mxu0
      %v2660 = vadd.f32 0.0, %v2659
      %v2661 = vpop.f32.mrf.mxu0
      %v2662 = vpop.f32.mrf.mxu0
      %v2663 = vadd.f32 0.0, %v2662
      %v2664 = vpop.f32.mrf.mxu0
      %2665 = vmatprep.mubr.bf16.mxu0 0
      %2666 = vmatmul.mubr.bf16.gmra.mxu0 %v2518
      %v2667 = vpop.f32.mrf.mxu0
      %v2668 = vadd.f32 0.0, %v2667
      %v2669 = vpop.f32.mrf.mxu0
      %v2670 = vpop.f32.mrf.mxu0
      %v2671 = vadd.f32 0.0, %v2670
      %v2672 = vpop.f32.mrf.mxu0
      %2673 = vmatprep.mubr.bf16.mxu0 0
      %2674 = vmatmul.mubr.bf16.gmra.mxu0 %v2519
      %v2675 = vpop.f32.mrf.mxu0
      %v2676 = vadd.f32 0.0, %v2675
      %v2677 = vpop.f32.mrf.mxu0
      %v2678 = vpop.f32.mrf.mxu0
      %v2679 = vadd.f32 0.0, %v2678
      %v2680 = vpop.f32.mrf.mxu0
      %2681 = vmatprep.mubr.bf16.mxu0 0
      %2682 = vmatmul.mubr.bf16.gmra.mxu0 %v2520
      %v2683 = vpop.f32.mrf.mxu0
      %v2684 = vadd.f32 0.0, %v2683
      %v2685 = vpop.f32.mrf.mxu0
      %v2686 = vpop.f32.mrf.mxu0
      %v2687 = vadd.f32 0.0, %v2686
      %v2688 = vpop.f32.mrf.mxu0
      %2689 = vmatprep.mubr.bf16.mxu0 0
      %2690 = vmatmul.mubr.bf16.gmra.mxu0 %v2521
      %v2691 = vpop.f32.mrf.mxu0
      %v2692 = vadd.f32 0.0, %v2691
      %v2693 = vpop.f32.mrf.mxu0
      %v2694 = vpop.f32.mrf.mxu0
      %v2695 = vadd.f32 0.0, %v2694
      %v2696 = vpop.f32.mrf.mxu0
      %2697 = vmatprep.mubr.bf16.mxu0 0
      %2698 = vmatmul.mubr.bf16.gmra.mxu0 %v2522
      %v2699 = vpop.f32.mrf.mxu0
      %v2700 = vadd.f32 0.0, %v2699
      %v2701 = vpop.f32.mrf.mxu0
      %v2702 = vpop.f32.mrf.mxu0
      %v2703 = vadd.f32 0.0, %v2702
      %v2704 = vpop.f32.mrf.mxu0
      %2705 = vmatprep.mubr.bf16.mxu0 0
      %2706 = vmatmul.mubr.bf16.gmra.mxu0 %v2523
      %v2707 = vpop.f32.mrf.mxu0
      %v2708 = vadd.f32 0.0, %v2707
      %v2709 = vpop.f32.mrf.mxu0
      %v2710 = vpop.f32.mrf.mxu0
      %v2711 = vadd.f32 0.0, %v2710
      %v2712 = vpop.f32.mrf.mxu0
      %2713 = vmatprep.mubr.bf16.mxu0 0
      %2714 = vmatmul.mubr.bf16.gmra.mxu0 %v2524
      %v2715 = vpop.f32.mrf.mxu0
      %v2716 = vadd.f32 0.0, %v2715
      %v2717 = vpop.f32.mrf.mxu0
      %v2718 = vpop.f32.mrf.mxu0
      %v2719 = vadd.f32 0.0, %v2718
      %v2720 = vpop.f32.mrf.mxu0
      %2721 = vmatprep.mubr.bf16.mxu0 0
      %2722 = vmatmul.mubr.bf16.gmra.mxu0 %v2525
      %v2723 = vpop.f32.mrf.mxu0
      %v2724 = vadd.f32 0.0, %v2723
      %v2725 = vpop.f32.mrf.mxu0
      %v2726 = vpop.f32.mrf.mxu0
      %v2727 = vadd.f32 0.0, %v2726
      %v2728 = vpop.f32.mrf.mxu0
      %2729 = vmatprep.mubr.bf16.mxu0 0
      %2730 = vmatmul.mubr.bf16.gmra.mxu0 %v2526
      %v2731 = vpop.f32.mrf.mxu0
      %v2732 = vadd.f32 0.0, %v2731
      %v2733 = vpop.f32.mrf.mxu0
      %v2734 = vpop.f32.mrf.mxu0
      %v2735 = vadd.f32 0.0, %v2734
      %v2736 = vpop.f32.mrf.mxu0
      %2737 = vmatprep.mubr.bf16.mxu0 0
      %2738 = vmatmul.mubr.bf16.gmra.mxu0 %v2527
      %v2739 = vpop.f32.mrf.mxu0
      %v2740 = vadd.f32 0.0, %v2739
      %v2741 = vpop.f32.mrf.mxu0
      %v2742 = vpop.f32.mrf.mxu0
      %v2743 = vadd.f32 0.0, %v2742
      %v2744 = vpop.f32.mrf.mxu0
      %2745 = vmatprep.mubr.bf16.mxu0 0
      %2746 = vmatmul.mubr.bf16.gmra.mxu0 %v2528
      %v2747 = vpop.f32.mrf.mxu0
      %v2748 = vadd.f32 0.0, %v2747
      %v2749 = vpop.f32.mrf.mxu0
      %v2750 = vpop.f32.mrf.mxu0
      %v2751 = vadd.f32 0.0, %v2750
      %v2752 = vpop.f32.mrf.mxu0
      %2753 = vdwg.mxu0
      %v2754 = vadd.f32 %v1204, %v2628
      %v2755 = vadd.f32 %v1205, %v2631
      %v2756 = vadd.f32 %v1206, %v2636
      %v2757 = vadd.f32 %v1207, %v2639
      %v2758 = vadd.f32 %v1208, %v2644
      %v2759 = vadd.f32 %v1209, %v2647
      %v2760 = vadd.f32 %v1210, %v2652
      %v2761 = vadd.f32 %v1211, %v2655
      %v2762 = vadd.f32 %v1212, %v2660
      %v2763 = vadd.f32 %v1213, %v2663
      %v2764 = vadd.f32 %v1214, %v2668
      %v2765 = vadd.f32 %v1215, %v2671
      %v2766 = vadd.f32 %v1216, %v2676
      %v2767 = vadd.f32 %v1217, %v2679
      %v2768 = vadd.f32 %v1218, %v2684
      %v2769 = vadd.f32 %v1219, %v2687
      %v2770 = vadd.f32 %v1220, %v2692
      %v2771 = vadd.f32 %v1221, %v2695
      %v2772 = vadd.f32 %v1222, %v2700
      %v2773 = vadd.f32 %v1223, %v2703
      %v2774 = vadd.f32 %v1224, %v2708
      %v2775 = vadd.f32 %v1225, %v2711
      %v2776 = vadd.f32 %v1226, %v2716
      %v2777 = vadd.f32 %v1227, %v2719
      %v2778 = vadd.f32 %v1228, %v2724
      %v2779 = vadd.f32 %v1229, %v2727
      %v2780 = vadd.f32 %v1230, %v2732
      %v2781 = vadd.f32 %v1231, %v2735
      %v2782 = vadd.f32 %v1232, %v2740
      %v2783 = vadd.f32 %v1233, %v2743
      %v2784 = vadd.f32 %v1234, %v2748
      %v2785 = vadd.f32 %v1235, %v2751
      %2786 = vadd.xlane.f32.xlu0 %v2754
      %v2787 = vpop.xlane.xlu0 %2786
      %2788 = vadd.xlane.f32.xlu0 %v2755
      %v2789 = vpop.xlane.xlu0 %2788
      %2790 = vadd.xlane.f32.xlu0 %v2756
      %v2791 = vpop.xlane.xlu0 %2790
      %2792 = vadd.xlane.f32.xlu0 %v2757
      %v2793 = vpop.xlane.xlu0 %2792
      %2794 = vadd.xlane.f32.xlu0 %v2758
      %v2795 = vpop.xlane.xlu0 %2794
      %2796 = vadd.xlane.f32.xlu0 %v2759
      %v2797 = vpop.xlane.xlu0 %2796
      %2798 = vadd.xlane.f32.xlu0 %v2760
      %v2799 = vpop.xlane.xlu0 %2798
      %2800 = vadd.xlane.f32.xlu0 %v2761
      %v2801 = vpop.xlane.xlu0 %2800
      %2802 = vadd.xlane.f32.xlu0 %v2762
      %v2803 = vpop.xlane.xlu0 %2802
      %2804 = vadd.xlane.f32.xlu0 %v2763
      %v2805 = vpop.xlane.xlu0 %2804
      %2806 = vadd.xlane.f32.xlu0 %v2764
      %v2807 = vpop.xlane.xlu0 %2806
      %2808 = vadd.xlane.f32.xlu0 %v2765
      %v2809 = vpop.xlane.xlu0 %2808
      %2810 = vadd.xlane.f32.xlu0 %v2766
      %v2811 = vpop.xlane.xlu0 %2810
      %2812 = vadd.xlane.f32.xlu0 %v2767
      %v2813 = vpop.xlane.xlu0 %2812
      %2814 = vadd.xlane.f32.xlu0 %v2768
      %v2815 = vpop.xlane.xlu0 %2814
      %2816 = vadd.xlane.f32.xlu0 %v2769
      %v2817 = vpop.xlane.xlu0 %2816
      %2818 = vadd.xlane.f32.xlu0 %v2770
      %v2819 = vpop.xlane.xlu0 %2818
      %2820 = vadd.xlane.f32.xlu0 %v2771
      %v2821 = vpop.xlane.xlu0 %2820
      %2822 = vadd.xlane.f32.xlu0 %v2772
      %v2823 = vpop.xlane.xlu0 %2822
      %2824 = vadd.xlane.f32.xlu0 %v2773
      %v2825 = vpop.xlane.xlu0 %2824
      %2826 = vadd.xlane.f32.xlu0 %v2774
      %v2827 = vpop.xlane.xlu0 %2826
      %2828 = vadd.xlane.f32.xlu0 %v2775
      %v2829 = vpop.xlane.xlu0 %2828
      %2830 = vadd.xlane.f32.xlu0 %v2776
      %v2831 = vpop.xlane.xlu0 %2830
      %2832 = vadd.xlane.f32.xlu0 %v2777
      %v2833 = vpop.xlane.xlu0 %2832
      %2834 = vadd.xlane.f32.xlu0 %v2778
      %v2835 = vpop.xlane.xlu0 %2834
      %2836 = vadd.xlane.f32.xlu0 %v2779
      %v2837 = vpop.xlane.xlu0 %2836
      %2838 = vadd.xlane.f32.xlu0 %v2780
      %v2839 = vpop.xlane.xlu0 %2838
      %2840 = vadd.xlane.f32.xlu0 %v2781
      %v2841 = vpop.xlane.xlu0 %2840
      %2842 = vadd.xlane.f32.xlu0 %v2782
      %v2843 = vpop.xlane.xlu0 %2842
      %2844 = vadd.xlane.f32.xlu0 %v2783
      %v2845 = vpop.xlane.xlu0 %2844
      %2846 = vadd.xlane.f32.xlu0 %v2784
      %v2847 = vpop.xlane.xlu0 %2846
      %2848 = vadd.xlane.f32.xlu0 %v2785
      %v2849 = vpop.xlane.xlu0 %2848
      %v2850 = vrcp.pop 128.0
      %v2851 = vmul.f32 %v2787, %v2850
      %v2852 = vmul.f32 %v2789, %v2850
      %v2853 = vmul.f32 %v2791, %v2850
      %v2854 = vmul.f32 %v2793, %v2850
      %v2855 = vmul.f32 %v2795, %v2850
      %v2856 = vmul.f32 %v2797, %v2850
      %v2857 = vmul.f32 %v2799, %v2850
      %v2858 = vmul.f32 %v2801, %v2850
      %v2859 = vmul.f32 %v2803, %v2850
      %v2860 = vmul.f32 %v2805, %v2850
      %v2861 = vmul.f32 %v2807, %v2850
      %v2862 = vmul.f32 %v2809, %v2850
      %v2863 = vmul.f32 %v2811, %v2850
      %v2864 = vmul.f32 %v2813, %v2850
      %v2865 = vmul.f32 %v2815, %v2850
      %v2866 = vmul.f32 %v2817, %v2850
      %v2867 = vmul.f32 %v2819, %v2850
      %v2868 = vmul.f32 %v2821, %v2850
      %v2869 = vmul.f32 %v2823, %v2850
      %v2870 = vmul.f32 %v2825, %v2850
      %v2871 = vmul.f32 %v2827, %v2850
      %v2872 = vmul.f32 %v2829, %v2850
      %v2873 = vmul.f32 %v2831, %v2850
      %v2874 = vmul.f32 %v2833, %v2850
      %v2875 = vmul.f32 %v2835, %v2850
      %v2876 = vmul.f32 %v2837, %v2850
      %v2877 = vmul.f32 %v2839, %v2850
      %v2878 = vmul.f32 %v2841, %v2850
      %v2879 = vmul.f32 %v2843, %v2850
      %v2880 = vmul.f32 %v2845, %v2850
      %v2881 = vmul.f32 %v2847, %v2850
      %v2882 = vmul.f32 %v2849, %v2850
      %v2883 = vsub.f32 %v2754, %v2851
      %v2884 = vsub.f32 %v2755, %v2852
      %v2885 = vsub.f32 %v2756, %v2853
      %v2886 = vsub.f32 %v2757, %v2854
      %v2887 = vsub.f32 %v2758, %v2855
      %v2888 = vsub.f32 %v2759, %v2856
      %v2889 = vsub.f32 %v2760, %v2857
      %v2890 = vsub.f32 %v2761, %v2858
      %v2891 = vsub.f32 %v2762, %v2859
      %v2892 = vsub.f32 %v2763, %v2860
      %v2893 = vsub.f32 %v2764, %v2861
      %v2894 = vsub.f32 %v2765, %v2862
      %v2895 = vsub.f32 %v2766, %v2863
      %v2896 = vsub.f32 %v2767, %v2864
      %v2897 = vsub.f32 %v2768, %v2865
      %v2898 = vsub.f32 %v2769, %v2866
      %v2899 = vsub.f32 %v2770, %v2867
      %v2900 = vsub.f32 %v2771, %v2868
      %v2901 = vsub.f32 %v2772, %v2869
      %v2902 = vsub.f32 %v2773, %v2870
      %v2903 = vsub.f32 %v2774, %v2871
      %v2904 = vsub.f32 %v2775, %v2872
      %v2905 = vsub.f32 %v2776, %v2873
      %v2906 = vsub.f32 %v2777, %v2874
      %v2907 = vsub.f32 %v2778, %v2875
      %v2908 = vsub.f32 %v2779, %v2876
      %v2909 = vsub.f32 %v2780, %v2877
      %v2910 = vsub.f32 %v2781, %v2878
      %v2911 = vsub.f32 %v2782, %v2879
      %v2912 = vsub.f32 %v2783, %v2880
      %v2913 = vsub.f32 %v2784, %v2881
      %v2914 = vsub.f32 %v2785, %v2882
      %v2915 = vmul.f32 %v2883, %v2883
      %v2916 = vmul.f32 %v2884, %v2884
      %v2917 = vmul.f32 %v2885, %v2885
      %v2918 = vmul.f32 %v2886, %v2886
      %v2919 = vmul.f32 %v2887, %v2887
      %v2920 = vmul.f32 %v2888, %v2888
      %v2921 = vmul.f32 %v2889, %v2889
      %v2922 = vmul.f32 %v2890, %v2890
      %v2923 = vmul.f32 %v2891, %v2891
      %v2924 = vmul.f32 %v2892, %v2892
      %v2925 = vmul.f32 %v2893, %v2893
      %v2926 = vmul.f32 %v2894, %v2894
      %v2927 = vmul.f32 %v2895, %v2895
      %v2928 = vmul.f32 %v2896, %v2896
      %v2929 = vmul.f32 %v2897, %v2897
      %v2930 = vmul.f32 %v2898, %v2898
      %v2931 = vmul.f32 %v2899, %v2899
      %v2932 = vmul.f32 %v2900, %v2900
      %v2933 = vmul.f32 %v2901, %v2901
      %v2934 = vmul.f32 %v2902, %v2902
      %v2935 = vmul.f32 %v2903, %v2903
      %v2936 = vmul.f32 %v2904, %v2904
      %v2937 = vmul.f32 %v2905, %v2905
      %v2938 = vmul.f32 %v2906, %v2906
      %v2939 = vmul.f32 %v2907, %v2907
      %v2940 = vmul.f32 %v2908, %v2908
      %v2941 = vmul.f32 %v2909, %v2909
      %v2942 = vmul.f32 %v2910, %v2910
      %v2943 = vmul.f32 %v2911, %v2911
      %v2944 = vmul.f32 %v2912, %v2912
      %v2945 = vmul.f32 %v2913, %v2913
      %v2946 = vmul.f32 %v2914, %v2914
      %2947 = vadd.xlane.f32.xlu0 %v2915
      %v2948 = vpop.xlane.xlu0 %2947
      %2949 = vadd.xlane.f32.xlu0 %v2916
      %v2950 = vpop.xlane.xlu0 %2949
      %2951 = vadd.xlane.f32.xlu0 %v2917
      %v2952 = vpop.xlane.xlu0 %2951
      %2953 = vadd.xlane.f32.xlu0 %v2918
      %v2954 = vpop.xlane.xlu0 %2953
      %2955 = vadd.xlane.f32.xlu0 %v2919
      %v2956 = vpop.xlane.xlu0 %2955
      %2957 = vadd.xlane.f32.xlu0 %v2920
      %v2958 = vpop.xlane.xlu0 %2957
      %2959 = vadd.xlane.f32.xlu0 %v2921
      %v2960 = vpop.xlane.xlu0 %2959
      %2961 = vadd.xlane.f32.xlu0 %v2922
      %v2962 = vpop.xlane.xlu0 %2961
      %2963 = vadd.xlane.f32.xlu0 %v2923
      %v2964 = vpop.xlane.xlu0 %2963
      %2965 = vadd.xlane.f32.xlu0 %v2924
      %v2966 = vpop.xlane.xlu0 %2965
      %2967 = vadd.xlane.f32.xlu0 %v2925
      %v2968 = vpop.xlane.xlu0 %2967
      %2969 = vadd.xlane.f32.xlu0 %v2926
      %v2970 = vpop.xlane.xlu0 %2969
      %2971 = vadd.xlane.f32.xlu0 %v2927
      %v2972 = vpop.xlane.xlu0 %2971
      %2973 = vadd.xlane.f32.xlu0 %v2928
      %v2974 = vpop.xlane.xlu0 %2973
      %2975 = vadd.xlane.f32.xlu0 %v2929
      %v2976 = vpop.xlane.xlu0 %2975
      %2977 = vadd.xlane.f32.xlu0 %v2930
      %v2978 = vpop.xlane.xlu0 %2977
      %2979 = vadd.xlane.f32.xlu0 %v2931
      %v2980 = vpop.xlane.xlu0 %2979
      %2981 = vadd.xlane.f32.xlu0 %v2932
      %v2982 = vpop.xlane.xlu0 %2981
      %2983 = vadd.xlane.f32.xlu0 %v2933
      %v2984 = vpop.xlane.xlu0 %2983
      %2985 = vadd.xlane.f32.xlu0 %v2934
      %v2986 = vpop.xlane.xlu0 %2985
      %2987 = vadd.xlane.f32.xlu0 %v2935
      %v2988 = vpop.xlane.xlu0 %2987
      %2989 = vadd.xlane.f32.xlu0 %v2936
      %v2990 = vpop.xlane.xlu0 %2989
      %2991 = vadd.xlane.f32.xlu0 %v2937
      %v2992 = vpop.xlane.xlu0 %2991
      %2993 = vadd.xlane.f32.xlu0 %v2938
      %v2994 = vpop.xlane.xlu0 %2993
      %2995 = vadd.xlane.f32.xlu0 %v2939
      %v2996 = vpop.xlane.xlu0 %2995
      %2997 = vadd.xlane.f32.xlu0 %v2940
      %v2998 = vpop.xlane.xlu0 %2997
      %2999 = vadd.xlane.f32.xlu0 %v2941
      %v3000 = vpop.xlane.xlu0 %2999
      %3001 = vadd.xlane.f32.xlu0 %v2942
      %v3002 = vpop.xlane.xlu0 %3001
      %3003 = vadd.xlane.f32.xlu0 %v2943
      %v3004 = vpop.xlane.xlu0 %3003
      %3005 = vadd.xlane.f32.xlu0 %v2944
      %v3006 = vpop.xlane.xlu0 %3005
      %3007 = vadd.xlane.f32.xlu0 %v2945
      %v3008 = vpop.xlane.xlu0 %3007
      %3009 = vadd.xlane.f32.xlu0 %v2946
      %v3010 = vpop.xlane.xlu0 %3009
      %v3011 = vmul.f32 %v2948, %v2850
      %v3012 = vmul.f32 %v2950, %v2850
      %v3013 = vmul.f32 %v2952, %v2850
      %v3014 = vmul.f32 %v2954, %v2850
      %v3015 = vmul.f32 %v2956, %v2850
      %v3016 = vmul.f32 %v2958, %v2850
      %v3017 = vmul.f32 %v2960, %v2850
      %v3018 = vmul.f32 %v2962, %v2850
      %v3019 = vmul.f32 %v2964, %v2850
      %v3020 = vmul.f32 %v2966, %v2850
      %v3021 = vmul.f32 %v2968, %v2850
      %v3022 = vmul.f32 %v2970, %v2850
      %v3023 = vmul.f32 %v2972, %v2850
      %v3024 = vmul.f32 %v2974, %v2850
      %v3025 = vmul.f32 %v2976, %v2850
      %v3026 = vmul.f32 %v2978, %v2850
      %v3027 = vmul.f32 %v2980, %v2850
      %v3028 = vmul.f32 %v2982, %v2850
      %v3029 = vmul.f32 %v2984, %v2850
      %v3030 = vmul.f32 %v2986, %v2850
      %v3031 = vmul.f32 %v2988, %v2850
      %v3032 = vmul.f32 %v2990, %v2850
      %v3033 = vmul.f32 %v2992, %v2850
      %v3034 = vmul.f32 %v2994, %v2850
      %v3035 = vmul.f32 %v2996, %v2850
      %v3036 = vmul.f32 %v2998, %v2850
      %v3037 = vmul.f32 %v3000, %v2850
      %v3038 = vmul.f32 %v3002, %v2850
      %v3039 = vmul.f32 %v3004, %v2850
      %v3040 = vmul.f32 %v3006, %v2850
      %v3041 = vmul.f32 %v3008, %v2850
      %v3042 = vmul.f32 %v3010, %v2850
      %v3043 = vadd.f32 %v3011, 1e-05
      %v3044 = vadd.f32 %v3012, 1e-05
      %v3045 = vadd.f32 %v3013, 1e-05
      %v3046 = vadd.f32 %v3014, 1e-05
      %v3047 = vadd.f32 %v3015, 1e-05
      %v3048 = vadd.f32 %v3016, 1e-05
      %v3049 = vadd.f32 %v3017, 1e-05
      %v3050 = vadd.f32 %v3018, 1e-05
      %v3051 = vadd.f32 %v3019, 1e-05
      %v3052 = vadd.f32 %v3020, 1e-05
      %v3053 = vadd.f32 %v3021, 1e-05
      %v3054 = vadd.f32 %v3022, 1e-05
      %v3055 = vadd.f32 %v3023, 1e-05
      %v3056 = vadd.f32 %v3024, 1e-05
      %v3057 = vadd.f32 %v3025, 1e-05
      %v3058 = vadd.f32 %v3026, 1e-05
      %v3059 = vadd.f32 %v3027, 1e-05
      %v3060 = vadd.f32 %v3028, 1e-05
      %v3061 = vadd.f32 %v3029, 1e-05
      %v3062 = vadd.f32 %v3030, 1e-05
      %v3063 = vadd.f32 %v3031, 1e-05
      %v3064 = vadd.f32 %v3032, 1e-05
      %v3065 = vadd.f32 %v3033, 1e-05
      %v3066 = vadd.f32 %v3034, 1e-05
      %v3067 = vadd.f32 %v3035, 1e-05
      %v3068 = vadd.f32 %v3036, 1e-05
      %v3069 = vadd.f32 %v3037, 1e-05
      %v3070 = vadd.f32 %v3038, 1e-05
      %v3071 = vadd.f32 %v3039, 1e-05
      %v3072 = vadd.f32 %v3040, 1e-05
      %v3073 = vadd.f32 %v3041, 1e-05
      %v3074 = vadd.f32 %v3042, 1e-05
      %v3075 = vrsqrt.pop %v3043
      %v3076 = vrsqrt.pop %v3044
      %v3077 = vrsqrt.pop %v3045
      %v3078 = vrsqrt.pop %v3046
      %v3079 = vrsqrt.pop %v3047
      %v3080 = vrsqrt.pop %v3048
      %v3081 = vrsqrt.pop %v3049
      %v3082 = vrsqrt.pop %v3050
      %v3083 = vrsqrt.pop %v3051
      %v3084 = vrsqrt.pop %v3052
      %v3085 = vrsqrt.pop %v3053
      %v3086 = vrsqrt.pop %v3054
      %v3087 = vrsqrt.pop %v3055
      %v3088 = vrsqrt.pop %v3056
      %v3089 = vrsqrt.pop %v3057
      %v3090 = vrsqrt.pop %v3058
      %v3091 = vrsqrt.pop %v3059
      %v3092 = vrsqrt.pop %v3060
      %v3093 = vrsqrt.pop %v3061
      %v3094 = vrsqrt.pop %v3062
      %v3095 = vrsqrt.pop %v3063
      %v3096 = vrsqrt.pop %v3064
      %v3097 = vrsqrt.pop %v3065
      %v3098 = vrsqrt.pop %v3066
      %v3099 = vrsqrt.pop %v3067
      %v3100 = vrsqrt.pop %v3068
      %v3101 = vrsqrt.pop %v3069
      %v3102 = vrsqrt.pop %v3070
      %v3103 = vrsqrt.pop %v3071
      %v3104 = vrsqrt.pop %v3072
      %v3105 = vrsqrt.pop %v3073
      %v3106 = vrsqrt.pop %v3074
      %v3107 = vmul.f32 %v2883, %v3075
      %v3108 = vmul.f32 %v2884, %v3076
      %v3109 = vmul.f32 %v2885, %v3077
      %v3110 = vmul.f32 %v2886, %v3078
      %v3111 = vmul.f32 %v2887, %v3079
      %v3112 = vmul.f32 %v2888, %v3080
      %v3113 = vmul.f32 %v2889, %v3081
      %v3114 = vmul.f32 %v2890, %v3082
      %v3115 = vmul.f32 %v2891, %v3083
      %v3116 = vmul.f32 %v2892, %v3084
      %v3117 = vmul.f32 %v2893, %v3085
      %v3118 = vmul.f32 %v2894, %v3086
      %v3119 = vmul.f32 %v2895, %v3087
      %v3120 = vmul.f32 %v2896, %v3088
      %v3121 = vmul.f32 %v2897, %v3089
      %v3122 = vmul.f32 %v2898, %v3090
      %v3123 = vmul.f32 %v2899, %v3091
      %v3124 = vmul.f32 %v2900, %v3092
      %v3125 = vmul.f32 %v2901, %v3093
      %v3126 = vmul.f32 %v2902, %v3094
      %v3127 = vmul.f32 %v2903, %v3095
      %v3128 = vmul.f32 %v2904, %v3096
      %v3129 = vmul.f32 %v2905, %v3097
      %v3130 = vmul.f32 %v2906, %v3098
      %v3131 = vmul.f32 %v2907, %v3099
      %v3132 = vmul.f32 %v2908, %v3100
      %v3133 = vmul.f32 %v2909, %v3101
      %v3134 = vmul.f32 %v2910, %v3102
      %v3135 = vmul.f32 %v2911, %v3103
      %v3136 = vmul.f32 %v2912, %v3104
      %v3137 = vmul.f32 %v2913, %v3105
      %v3138 = vmul.f32 %v2914, %v3106
      %v3139 = vpack.c.bf16 %v3108, %v3107
      %v3140 = vpack.c.bf16 %v3110, %v3109
      %v3141 = vpack.c.bf16 %v3112, %v3111
      %v3142 = vpack.c.bf16 %v3114, %v3113
      %v3143 = vpack.c.bf16 %v3116, %v3115
      %v3144 = vpack.c.bf16 %v3118, %v3117
      %v3145 = vpack.c.bf16 %v3120, %v3119
      %v3146 = vpack.c.bf16 %v3122, %v3121
      %v3147 = vpack.c.bf16 %v3124, %v3123
      %v3148 = vpack.c.bf16 %v3126, %v3125
      %v3149 = vpack.c.bf16 %v3128, %v3127
      %v3150 = vpack.c.bf16 %v3130, %v3129
      %v3151 = vpack.c.bf16 %v3132, %v3131
      %v3152 = vpack.c.bf16 %v3134, %v3133
      %v3153 = vpack.c.bf16 %v3136, %v3135
      %v3154 = vpack.c.bf16 %v3138, %v3137
      %v3155 = vld [vmem:[%s9] sm:$0xff]
      %v3156 = vld [vmem:[%s9 + $0x8] sm:$0xff]
      %v3157 = vld [vmem:[%s9 + $0x10] sm:$0xff]
      %v3158 = vld [vmem:[%s9 + $0x18] sm:$0xff]
      %v3159 = vld [vmem:[%s9 + $0x20] sm:$0xff]
      %v3160 = vld [vmem:[%s9 + $0x28] sm:$0xff]
      %v3161 = vld [vmem:[%s9 + $0x30] sm:$0xff]
      %v3162 = vld [vmem:[%s9 + $0x38] sm:$0xff]
      %v3163 = vld [vmem:[%s9 + $0x40] sm:$0xff]
      %v3164 = vld [vmem:[%s9 + $0x48] sm:$0xff]
      %v3165 = vld [vmem:[%s9 + $0x50] sm:$0xff]
      %v3166 = vld [vmem:[%s9 + $0x58] sm:$0xff]
      %v3167 = vld [vmem:[%s9 + $0x60] sm:$0xff]
      %v3168 = vld [vmem:[%s9 + $0x68] sm:$0xff]
      %v3169 = vld [vmem:[%s9 + $0x70] sm:$0xff]
      %v3170 = vld [vmem:[%s9 + $0x78] sm:$0xff]
      %v3187 = vunpack.c.l.b16 %v3155
      %v3188 = vunpack.c.h.b16 %v3155
      %v3189 = vunpack.c.l.b16 %v3156
      %v3190 = vunpack.c.h.b16 %v3156
      %v3191 = vunpack.c.l.b16 %v3157
      %v3192 = vunpack.c.h.b16 %v3157
      %v3193 = vunpack.c.l.b16 %v3158
      %v3194 = vunpack.c.h.b16 %v3158
      %v3195 = vunpack.c.l.b16 %v3159
      %v3196 = vunpack.c.h.b16 %v3159
      %v3197 = vunpack.c.l.b16 %v3160
      %v3198 = vunpack.c.h.b16 %v3160
      %v3199 = vunpack.c.l.b16 %v3161
      %v3200 = vunpack.c.h.b16 %v3161
      %v3201 = vunpack.c.l.b16 %v3162
      %v3202 = vunpack.c.h.b16 %v3162
      %v3203 = vunpack.c.l.b16 %v3163
      %v3204 = vunpack.c.h.b16 %v3163
      %v3205 = vunpack.c.l.b16 %v3164
      %v3206 = vunpack.c.h.b16 %v3164
      %v3207 = vunpack.c.l.b16 %v3165
      %v3208 = vunpack.c.h.b16 %v3165
      %v3209 = vunpack.c.l.b16 %v3166
      %v3210 = vunpack.c.h.b16 %v3166
      %v3211 = vunpack.c.l.b16 %v3167
      %v3212 = vunpack.c.h.b16 %v3167
      %v3213 = vunpack.c.l.b16 %v3168
      %v3214 = vunpack.c.h.b16 %v3168
      %v3215 = vunpack.c.l.b16 %v3169
      %v3216 = vunpack.c.h.b16 %v3169
      %v3217 = vunpack.c.l.b16 %v3170
      %v3218 = vunpack.c.h.b16 %v3170
      %v3219 = vpack.c.b16 %v3189, %v3187
      %v3220 = vpack.c.b16 %v3190, %v3188
      %v3221 = vpack.c.b16 %v3193, %v3191
      %v3222 = vpack.c.b16 %v3194, %v3192
      %v3223 = vpack.c.b16 %v3197, %v3195
      %v3224 = vpack.c.b16 %v3198, %v3196
      %v3225 = vpack.c.b16 %v3201, %v3199
      %v3226 = vpack.c.b16 %v3202, %v3200
      %v3227 = vpack.c.b16 %v3205, %v3203
      %v3228 = vpack.c.b16 %v3206, %v3204
      %v3229 = vpack.c.b16 %v3209, %v3207
      %v3230 = vpack.c.b16 %v3210, %v3208
      %v3231 = vpack.c.b16 %v3213, %v3211
      %v3232 = vpack.c.b16 %v3214, %v3212
      %v3233 = vpack.c.b16 %v3217, %v3215
      %v3234 = vpack.c.b16 %v3218, %v3216
      %3251 = vmatprep.subr.bf16.mxu0 %v3234
      %3252 = vmatpush1.bf16.msra.mxu0 %v3233
      %3253 = vmatprep.subr.bf16.mxu0 %v3232
      %3254 = vmatpush1.bf16.msra.mxu0 %v3231
      %3255 = vmatprep.subr.bf16.mxu0 %v3230
      %3256 = vmatpush1.bf16.msra.mxu0 %v3229
      %3257 = vmatprep.subr.bf16.mxu0 %v3228
      %3258 = vmatpush1.bf16.msra.mxu0 %v3227
      %3259 = vmatprep.subr.bf16.mxu0 %v3226
      %3260 = vmatpush1.bf16.msra.mxu0 %v3225
      %3261 = vmatprep.subr.bf16.mxu0 %v3224
      %3262 = vmatpush1.bf16.msra.mxu0 %v3223
      %3263 = vmatprep.subr.bf16.mxu0 %v3222
      %3264 = vmatpush1.bf16.msra.mxu0 %v3221
      %3265 = vmatprep.subr.bf16.mxu0 %v3220
      %3266 = vmatpush1.bf16.msra.mxu0 %v3219
      %3267 = vmatprep.subr.bf16.mxu0 0
      %3268 = vmatpush2.bf16.msra.mxu0 0
      %3269 = vmatprep.subr.bf16.mxu0 0
      %3270 = vmatpush2.bf16.msra.mxu0 0
      %3271 = vmatprep.subr.bf16.mxu0 0
      %3272 = vmatpush2.bf16.msra.mxu0 0
      %3273 = vmatprep.subr.bf16.mxu0 0
      %3274 = vmatpush2.bf16.msra.mxu0 0
      %3275 = vmatprep.subr.bf16.mxu0 0
      %3276 = vmatpush2.bf16.msra.mxu0 0
      %3277 = vmatprep.subr.bf16.mxu0 0
      %3278 = vmatpush2.bf16.msra.mxu0 0
      %3279 = vmatprep.subr.bf16.mxu0 0
      %3280 = vmatpush2.bf16.msra.mxu0 0
      %3281 = vmatprep.subr.bf16.mxu0 0
      %3282 = vmatpush2.bf16.msra.mxu0 0
      %3283 = vmatprep.mubr.bf16.mxu0 0
      %3284 = vmatmul.mubr.bf16.gmra.mxu0 %v3139
      %v3285 = vpop.f32.mrf.mxu0
      %v3286 = vadd.f32 0.0, %v3285
      %v3287 = vpop.f32.mrf.mxu0
      %v3288 = vadd.f32 0.0, %v3287
      %v3289 = vpop.f32.mrf.mxu0
      %v3290 = vadd.f32 0.0, %v3289
      %v3291 = vpop.f32.mrf.mxu0
      %v3292 = vadd.f32 0.0, %v3291
      %3293 = vmatprep.mubr.bf16.mxu0 0
      %3294 = vmatmul.mubr.bf16.gmra.mxu0 %v3140
      %v3295 = vpop.f32.mrf.mxu0
      %v3296 = vadd.f32 0.0, %v3295
      %v3297 = vpop.f32.mrf.mxu0
      %v3298 = vadd.f32 0.0, %v3297
      %v3299 = vpop.f32.mrf.mxu0
      %v3300 = vadd.f32 0.0, %v3299
      %v3301 = vpop.f32.mrf.mxu0
      %v3302 = vadd.f32 0.0, %v3301
      %3303 = vmatprep.mubr.bf16.mxu0 0
      %3304 = vmatmul.mubr.bf16.gmra.mxu0 %v3141
      %v3305 = vpop.f32.mrf.mxu0
      %v3306 = vadd.f32 0.0, %v3305
      %v3307 = vpop.f32.mrf.mxu0
      %v3308 = vadd.f32 0.0, %v3307
      %v3309 = vpop.f32.mrf.mxu0
      %v3310 = vadd.f32 0.0, %v3309
      %v3311 = vpop.f32.mrf.mxu0
      %v3312 = vadd.f32 0.0, %v3311
      %3313 = vmatprep.mubr.bf16.mxu0 0
      %3314 = vmatmul.mubr.bf16.gmra.mxu0 %v3142
      %v3315 = vpop.f32.mrf.mxu0
      %v3316 = vadd.f32 0.0, %v3315
      %v3317 = vpop.f32.mrf.mxu0
      %v3318 = vadd.f32 0.0, %v3317
      %v3319 = vpop.f32.mrf.mxu0
      %v3320 = vadd.f32 0.0, %v3319
      %v3321 = vpop.f32.mrf.mxu0
      %v3322 = vadd.f32 0.0, %v3321
      %3323 = vmatprep.mubr.bf16.mxu0 0
      %3324 = vmatmul.mubr.bf16.gmra.mxu0 %v3143
      %v3325 = vpop.f32.mrf.mxu0
      %v3326 = vadd.f32 0.0, %v3325
      %v3327 = vpop.f32.mrf.mxu0
      %v3328 = vadd.f32 0.0, %v3327
      %v3329 = vpop.f32.mrf.mxu0
      %v3330 = vadd.f32 0.0, %v3329
      %v3331 = vpop.f32.mrf.mxu0
      %v3332 = vadd.f32 0.0, %v3331
      %3333 = vmatprep.mubr.bf16.mxu0 0
      %3334 = vmatmul.mubr.bf16.gmra.mxu0 %v3144
      %v3335 = vpop.f32.mrf.mxu0
      %v3336 = vadd.f32 0.0, %v3335
      %v3337 = vpop.f32.mrf.mxu0
      %v3338 = vadd.f32 0.0, %v3337
      %v3339 = vpop.f32.mrf.mxu0
      %v3340 = vadd.f32 0.0, %v3339
      %v3341 = vpop.f32.mrf.mxu0
      %v3342 = vadd.f32 0.0, %v3341
      %3343 = vmatprep.mubr.bf16.mxu0 0
      %3344 = vmatmul.mubr.bf16.gmra.mxu0 %v3145
      %v3345 = vpop.f32.mrf.mxu0
      %v3346 = vadd.f32 0.0, %v3345
      %v3347 = vpop.f32.mrf.mxu0
      %v3348 = vadd.f32 0.0, %v3347
      %v3349 = vpop.f32.mrf.mxu0
      %v3350 = vadd.f32 0.0, %v3349
      %v3351 = vpop.f32.mrf.mxu0
      %v3352 = vadd.f32 0.0, %v3351
      %3353 = vmatprep.mubr.bf16.mxu0 0
      %3354 = vmatmul.mubr.bf16.gmra.mxu0 %v3146
      %v3355 = vpop.f32.mrf.mxu0
      %v3356 = vadd.f32 0.0, %v3355
      %v3357 = vpop.f32.mrf.mxu0
      %v3358 = vadd.f32 0.0, %v3357
      %v3359 = vpop.f32.mrf.mxu0
      %v3360 = vadd.f32 0.0, %v3359
      %v3361 = vpop.f32.mrf.mxu0
      %v3362 = vadd.f32 0.0, %v3361
      %3363 = vmatprep.mubr.bf16.mxu0 0
      %3364 = vmatmul.mubr.bf16.gmra.mxu0 %v3147
      %v3365 = vpop.f32.mrf.mxu0
      %v3366 = vadd.f32 0.0, %v3365
      %v3367 = vpop.f32.mrf.mxu0
      %v3368 = vadd.f32 0.0, %v3367
      %v3369 = vpop.f32.mrf.mxu0
      %v3370 = vadd.f32 0.0, %v3369
      %v3371 = vpop.f32.mrf.mxu0
      %v3372 = vadd.f32 0.0, %v3371
      %3373 = vmatprep.mubr.bf16.mxu0 0
      %3374 = vmatmul.mubr.bf16.gmra.mxu0 %v3148
      %v3375 = vpop.f32.mrf.mxu0
      %v3376 = vadd.f32 0.0, %v3375
      %v3377 = vpop.f32.mrf.mxu0
      %v3378 = vadd.f32 0.0, %v3377
      %v3379 = vpop.f32.mrf.mxu0
      %v3380 = vadd.f32 0.0, %v3379
      %v3381 = vpop.f32.mrf.mxu0
      %v3382 = vadd.f32 0.0, %v3381
      %3383 = vmatprep.mubr.bf16.mxu0 0
      %3384 = vmatmul.mubr.bf16.gmra.mxu0 %v3149
      %v3385 = vpop.f32.mrf.mxu0
      %v3386 = vadd.f32 0.0, %v3385
      %v3387 = vpop.f32.mrf.mxu0
      %v3388 = vadd.f32 0.0, %v3387
      %v3389 = vpop.f32.mrf.mxu0
      %v3390 = vadd.f32 0.0, %v3389
      %v3391 = vpop.f32.mrf.mxu0
      %v3392 = vadd.f32 0.0, %v3391
      %3393 = vmatprep.mubr.bf16.mxu0 0
      %3394 = vmatmul.mubr.bf16.gmra.mxu0 %v3150
      %v3395 = vpop.f32.mrf.mxu0
      %v3396 = vadd.f32 0.0, %v3395
      %v3397 = vpop.f32.mrf.mxu0
      %v3398 = vadd.f32 0.0, %v3397
      %v3399 = vpop.f32.mrf.mxu0
      %v3400 = vadd.f32 0.0, %v3399
      %v3401 = vpop.f32.mrf.mxu0
      %v3402 = vadd.f32 0.0, %v3401
      %3403 = vmatprep.mubr.bf16.mxu0 0
      %3404 = vmatmul.mubr.bf16.gmra.mxu0 %v3151
      %v3405 = vpop.f32.mrf.mxu0
      %v3406 = vadd.f32 0.0, %v3405
      %v3407 = vpop.f32.mrf.mxu0
      %v3408 = vadd.f32 0.0, %v3407
      %v3409 = vpop.f32.mrf.mxu0
      %v3410 = vadd.f32 0.0, %v3409
      %v3411 = vpop.f32.mrf.mxu0
      %v3412 = vadd.f32 0.0, %v3411
      %3413 = vmatprep.mubr.bf16.mxu0 0
      %3414 = vmatmul.mubr.bf16.gmra.mxu0 %v3152
      %v3415 = vpop.f32.mrf.mxu0
      %v3416 = vadd.f32 0.0, %v3415
      %v3417 = vpop.f32.mrf.mxu0
      %v3418 = vadd.f32 0.0, %v3417
      %v3419 = vpop.f32.mrf.mxu0
      %v3420 = vadd.f32 0.0, %v3419
      %v3421 = vpop.f32.mrf.mxu0
      %v3422 = vadd.f32 0.0, %v3421
      %3423 = vmatprep.mubr.bf16.mxu0 0
      %3424 = vmatmul.mubr.bf16.gmra.mxu0 %v3153
      %v3425 = vpop.f32.mrf.mxu0
      %v3426 = vadd.f32 0.0, %v3425
      %v3427 = vpop.f32.mrf.mxu0
      %v3428 = vadd.f32 0.0, %v3427
      %v3429 = vpop.f32.mrf.mxu0
      %v3430 = vadd.f32 0.0, %v3429
      %v3431 = vpop.f32.mrf.mxu0
      %v3432 = vadd.f32 0.0, %v3431
      %3433 = vmatprep.mubr.bf16.mxu0 0
      %3434 = vmatmul.mubr.bf16.gmra.mxu0 %v3154
      %v3435 = vpop.f32.mrf.mxu0
      %v3436 = vadd.f32 0.0, %v3435
      %v3437 = vpop.f32.mrf.mxu0
      %v3438 = vadd.f32 0.0, %v3437
      %v3439 = vpop.f32.mrf.mxu0
      %v3440 = vadd.f32 0.0, %v3439
      %v3441 = vpop.f32.mrf.mxu0
      %v3442 = vadd.f32 0.0, %v3441
      %3443 = vdwg.mxu0
      %v3444 = vmax.f32 %v3286, 0.0
      %v3445 = vmax.f32 %v3288, 0.0
      %v3446 = vmax.f32 %v3290, 0.0
      %v3447 = vmax.f32 %v3292, 0.0
      %v3448 = vmax.f32 %v3296, 0.0
      %v3449 = vmax.f32 %v3298, 0.0
      %v3450 = vmax.f32 %v3300, 0.0
      %v3451 = vmax.f32 %v3302, 0.0
      %v3452 = vmax.f32 %v3306, 0.0
      %v3453 = vmax.f32 %v3308, 0.0
      %v3454 = vmax.f32 %v3310, 0.0
      %v3455 = vmax.f32 %v3312, 0.0
      %v3456 = vmax.f32 %v3316, 0.0
      %v3457 = vmax.f32 %v3318, 0.0
      %v3458 = vmax.f32 %v3320, 0.0
      %v3459 = vmax.f32 %v3322, 0.0
      %v3460 = vmax.f32 %v3326, 0.0
      %v3461 = vmax.f32 %v3328, 0.0
      %v3462 = vmax.f32 %v3330, 0.0
      %v3463 = vmax.f32 %v3332, 0.0
      %v3464 = vmax.f32 %v3336, 0.0
      %v3465 = vmax.f32 %v3338, 0.0
      %v3466 = vmax.f32 %v3340, 0.0
      %v3467 = vmax.f32 %v3342, 0.0
      %v3468 = vmax.f32 %v3346, 0.0
      %v3469 = vmax.f32 %v3348, 0.0
      %v3470 = vmax.f32 %v3350, 0.0
      %v3471 = vmax.f32 %v3352, 0.0
      %v3472 = vmax.f32 %v3356, 0.0
      %v3473 = vmax.f32 %v3358, 0.0
      %v3474 = vmax.f32 %v3360, 0.0
      %v3475 = vmax.f32 %v3362, 0.0
      %v3476 = vmax.f32 %v3366, 0.0
      %v3477 = vmax.f32 %v3368, 0.0
      %v3478 = vmax.f32 %v3370, 0.0
      %v3479 = vmax.f32 %v3372, 0.0
      %v3480 = vmax.f32 %v3376, 0.0
      %v3481 = vmax.f32 %v3378, 0.0
      %v3482 = vmax.f32 %v3380, 0.0
      %v3483 = vmax.f32 %v3382, 0.0
      %v3484 = vmax.f32 %v3386, 0.0
      %v3485 = vmax.f32 %v3388, 0.0
      %v3486 = vmax.f32 %v3390, 0.0
      %v3487 = vmax.f32 %v3392, 0.0
      %v3488 = vmax.f32 %v3396, 0.0
      %v3489 = vmax.f32 %v3398, 0.0
      %v3490 = vmax.f32 %v3400, 0.0
      %v3491 = vmax.f32 %v3402, 0.0
      %v3492 = vmax.f32 %v3406, 0.0
      %v3493 = vmax.f32 %v3408, 0.0
      %v3494 = vmax.f32 %v3410, 0.0
      %v3495 = vmax.f32 %v3412, 0.0
      %v3496 = vmax.f32 %v3416, 0.0
      %v3497 = vmax.f32 %v3418, 0.0
      %v3498 = vmax.f32 %v3420, 0.0
      %v3499 = vmax.f32 %v3422, 0.0
      %v3500 = vmax.f32 %v3426, 0.0
      %v3501 = vmax.f32 %v3428, 0.0
      %v3502 = vmax.f32 %v3430, 0.0
      %v3503 = vmax.f32 %v3432, 0.0
      %v3504 = vmax.f32 %v3436, 0.0
      %v3505 = vmax.f32 %v3438, 0.0
      %v3506 = vmax.f32 %v3440, 0.0
      %v3507 = vmax.f32 %v3442, 0.0
      %v3508 = vpack.c.bf16 %v3446, %v3444
      %v3509 = vpack.c.bf16 %v3447, %v3445
      %v3510 = vpack.c.bf16 %v3450, %v3448
      %v3511 = vpack.c.bf16 %v3451, %v3449
      %v3512 = vpack.c.bf16 %v3454, %v3452
      %v3513 = vpack.c.bf16 %v3455, %v3453
      %v3514 = vpack.c.bf16 %v3458, %v3456
      %v3515 = vpack.c.bf16 %v3459, %v3457
      %v3516 = vpack.c.bf16 %v3462, %v3460
      %v3517 = vpack.c.bf16 %v3463, %v3461
      %v3518 = vpack.c.bf16 %v3466, %v3464
      %v3519 = vpack.c.bf16 %v3467, %v3465
      %v3520 = vpack.c.bf16 %v3470, %v3468
      %v3521 = vpack.c.bf16 %v3471, %v3469
      %v3522 = vpack.c.bf16 %v3474, %v3472
      %v3523 = vpack.c.bf16 %v3475, %v3473
      %v3524 = vpack.c.bf16 %v3478, %v3476
      %v3525 = vpack.c.bf16 %v3479, %v3477
      %v3526 = vpack.c.bf16 %v3482, %v3480
      %v3527 = vpack.c.bf16 %v3483, %v3481
      %v3528 = vpack.c.bf16 %v3486, %v3484
      %v3529 = vpack.c.bf16 %v3487, %v3485
      %v3530 = vpack.c.bf16 %v3490, %v3488
      %v3531 = vpack.c.bf16 %v3491, %v3489
      %v3532 = vpack.c.bf16 %v3494, %v3492
      %v3533 = vpack.c.bf16 %v3495, %v3493
      %v3534 = vpack.c.bf16 %v3498, %v3496
      %v3535 = vpack.c.bf16 %v3499, %v3497
      %v3536 = vpack.c.bf16 %v3502, %v3500
      %v3537 = vpack.c.bf16 %v3503, %v3501
      %v3538 = vpack.c.bf16 %v3506, %v3504
      %v3539 = vpack.c.bf16 %v3507, %v3505
      %v3540 = vld [vmem:[%s10] sm:$0xf]
      %v3541 = vld [vmem:[%s10 + $0x4] sm:$0xf]
      %v3542 = vld [vmem:[%s10 + $0x8] sm:$0xf]
      %v3543 = vld [vmem:[%s10 + $0xc] sm:$0xf]
      %v3544 = vld [vmem:[%s10 + $0x10] sm:$0xf]
      %v3545 = vld [vmem:[%s10 + $0x14] sm:$0xf]
      %v3546 = vld [vmem:[%s10 + $0x18] sm:$0xf]
      %v3547 = vld [vmem:[%s10 + $0x1c] sm:$0xf]
      %v3548 = vld [vmem:[%s10 + $0x20] sm:$0xf]
      %v3549 = vld [vmem:[%s10 + $0x24] sm:$0xf]
      %v3550 = vld [vmem:[%s10 + $0x28] sm:$0xf]
      %v3551 = vld [vmem:[%s10 + $0x2c] sm:$0xf]
      %v3552 = vld [vmem:[%s10 + $0x30] sm:$0xf]
      %v3553 = vld [vmem:[%s10 + $0x34] sm:$0xf]
      %v3554 = vld [vmem:[%s10 + $0x38] sm:$0xf]
      %v3555 = vld [vmem:[%s10 + $0x3c] sm:$0xf]
      %v3556 = vld [vmem:[%s10 + $0x40] sm:$0xf]
      %v3557 = vld [vmem:[%s10 + $0x44] sm:$0xf]
      %v3558 = vld [vmem:[%s10 + $0x48] sm:$0xf]
      %v3559 = vld [vmem:[%s10 + $0x4c] sm:$0xf]
      %v3560 = vld [vmem:[%s10 + $0x50] sm:$0xf]
      %v3561 = vld [vmem:[%s10 + $0x54] sm:$0xf]
      %v3562 = vld [vmem:[%s10 + $0x58] sm:$0xf]
      %v3563 = vld [vmem:[%s10 + $0x5c] sm:$0xf]
      %v3564 = vld [vmem:[%s10 + $0x60] sm:$0xf]
      %v3565 = vld [vmem:[%s10 + $0x64] sm:$0xf]
      %v3566 = vld [vmem:[%s10 + $0x68] sm:$0xf]
      %v3567 = vld [vmem:[%s10 + $0x6c] sm:$0xf]
      %v3568 = vld [vmem:[%s10 + $0x70] sm:$0xf]
      %v3569 = vld [vmem:[%s10 + $0x74] sm:$0xf]
      %v3570 = vld [vmem:[%s10 + $0x78] sm:$0xf]
      %v3571 = vld [vmem:[%s10 + $0x7c] sm:$0xf]
      %v3604 = vunpack.c.l.b16 %v3540
      %v3605 = vunpack.c.l.b16 %v3541
      %v3606 = vunpack.c.l.b16 %v3542
      %v3607 = vunpack.c.l.b16 %v3543
      %v3608 = vunpack.c.l.b16 %v3544
      %v3609 = vunpack.c.l.b16 %v3545
      %v3610 = vunpack.c.l.b16 %v3546
      %v3611 = vunpack.c.l.b16 %v3547
      %v3612 = vunpack.c.l.b16 %v3548
      %v3613 = vunpack.c.l.b16 %v3549
      %v3614 = vunpack.c.l.b16 %v3550
      %v3615 = vunpack.c.l.b16 %v3551
      %v3616 = vunpack.c.l.b16 %v3552
      %v3617 = vunpack.c.l.b16 %v3553
      %v3618 = vunpack.c.l.b16 %v3554
      %v3619 = vunpack.c.l.b16 %v3555
      %v3620 = vunpack.c.l.b16 %v3556
      %v3621 = vunpack.c.l.b16 %v3557
      %v3622 = vunpack.c.l.b16 %v3558
      %v3623 = vunpack.c.l.b16 %v3559
      %v3624 = vunpack.c.l.b16 %v3560
      %v3625 = vunpack.c.l.b16 %v3561
      %v3626 = vunpack.c.l.b16 %v3562
      %v3627 = vunpack.c.l.b16 %v3563
      %v3628 = vunpack.c.l.b16 %v3564
      %v3629 = vunpack.c.l.b16 %v3565
      %v3630 = vunpack.c.l.b16 %v3566
      %v3631 = vunpack.c.l.b16 %v3567
      %v3632 = vunpack.c.l.b16 %v3568
      %v3633 = vunpack.c.l.b16 %v3569
      %v3634 = vunpack.c.l.b16 %v3570
      %v3635 = vunpack.c.l.b16 %v3571
      %v3636 = vpack.c.b16 %v3605, %v3604
      %v3637 = vpack.c.b16 %v3607, %v3606
      %v3638 = vpack.c.b16 %v3609, %v3608
      %v3639 = vpack.c.b16 %v3611, %v3610
      %v3640 = vpack.c.b16 %v3613, %v3612
      %v3641 = vpack.c.b16 %v3615, %v3614
      %v3642 = vpack.c.b16 %v3617, %v3616
      %v3643 = vpack.c.b16 %v3619, %v3618
      %v3644 = vpack.c.b16 %v3621, %v3620
      %v3645 = vpack.c.b16 %v3623, %v3622
      %v3646 = vpack.c.b16 %v3625, %v3624
      %v3647 = vpack.c.b16 %v3627, %v3626
      %v3648 = vpack.c.b16 %v3629, %v3628
      %v3649 = vpack.c.b16 %v3631, %v3630
      %v3650 = vpack.c.b16 %v3633, %v3632
      %v3651 = vpack.c.b16 %v3635, %v3634
      %3668 = vmatprep.subr.bf16.mxu0 0
      %3669 = vmatpush1.bf16.msra.mxu0 %v3643
      %3670 = vmatprep.subr.bf16.mxu0 0
      %3671 = vmatpush1.bf16.msra.mxu0 %v3642
      %3672 = vmatprep.subr.bf16.mxu0 0
      %3673 = vmatpush1.bf16.msra.mxu0 %v3641
      %3674 = vmatprep.subr.bf16.mxu0 0
      %3675 = vmatpush1.bf16.msra.mxu0 %v3640
      %3676 = vmatprep.subr.bf16.mxu0 0
      %3677 = vmatpush1.bf16.msra.mxu0 %v3639
      %3678 = vmatprep.subr.bf16.mxu0 0
      %3679 = vmatpush1.bf16.msra.mxu0 %v3638
      %3680 = vmatprep.subr.bf16.mxu0 0
      %3681 = vmatpush1.bf16.msra.mxu0 %v3637
      %3682 = vmatprep.subr.bf16.mxu0 0
      %3683 = vmatpush1.bf16.msra.mxu0 %v3636
      %3684 = vmatprep.subr.bf16.mxu0 0
      %3685 = vmatpush2.bf16.msra.mxu0 %v3651
      %3686 = vmatprep.subr.bf16.mxu0 0
      %3687 = vmatpush2.bf16.msra.mxu0 %v3650
      %3688 = vmatprep.subr.bf16.mxu0 0
      %3689 = vmatpush2.bf16.msra.mxu0 %v3649
      %3690 = vmatprep.subr.bf16.mxu0 0
      %3691 = vmatpush2.bf16.msra.mxu0 %v3648
      %3692 = vmatprep.subr.bf16.mxu0 0
      %3693 = vmatpush2.bf16.msra.mxu0 %v3647
      %3694 = vmatprep.subr.bf16.mxu0 0
      %3695 = vmatpush2.bf16.msra.mxu0 %v3646
      %3696 = vmatprep.subr.bf16.mxu0 0
      %3697 = vmatpush2.bf16.msra.mxu0 %v3645
      %3698 = vmatprep.subr.bf16.mxu0 0
      %3699 = vmatpush2.bf16.msra.mxu0 %v3644
      %3700 = vmatprep.mubr.bf16.mxu0 %v3509
      %3701 = vmatmul.mubr.bf16.gmra.mxu0 %v3508
      %v3702 = vpop.f32.mrf.mxu0
      %v3703 = vadd.f32 0.0, %v3702
      %v3704 = vpop.f32.mrf.mxu0
      %v3705 = vpop.f32.mrf.mxu0
      %v3706 = vadd.f32 0.0, %v3705
      %v3707 = vpop.f32.mrf.mxu0
      %3708 = vmatprep.mubr.bf16.mxu0 %v3511
      %3709 = vmatmul.mubr.bf16.gmra.mxu0 %v3510
      %v3710 = vpop.f32.mrf.mxu0
      %v3711 = vadd.f32 0.0, %v3710
      %v3712 = vpop.f32.mrf.mxu0
      %v3713 = vpop.f32.mrf.mxu0
      %v3714 = vadd.f32 0.0, %v3713
      %v3715 = vpop.f32.mrf.mxu0
      %3716 = vmatprep.mubr.bf16.mxu0 %v3513
      %3717 = vmatmul.mubr.bf16.gmra.mxu0 %v3512
      %v3718 = vpop.f32.mrf.mxu0
      %v3719 = vadd.f32 0.0, %v3718
      %v3720 = vpop.f32.mrf.mxu0
      %v3721 = vpop.f32.mrf.mxu0
      %v3722 = vadd.f32 0.0, %v3721
      %v3723 = vpop.f32.mrf.mxu0
      %3724 = vmatprep.mubr.bf16.mxu0 %v3515
      %3725 = vmatmul.mubr.bf16.gmra.mxu0 %v3514
      %v3726 = vpop.f32.mrf.mxu0
      %v3727 = vadd.f32 0.0, %v3726
      %v3728 = vpop.f32.mrf.mxu0
      %v3729 = vpop.f32.mrf.mxu0
      %v3730 = vadd.f32 0.0, %v3729
      %v3731 = vpop.f32.mrf.mxu0
      %3732 = vmatprep.mubr.bf16.mxu0 %v3517
      %3733 = vmatmul.mubr.bf16.gmra.mxu0 %v3516
      %v3734 = vpop.f32.mrf.mxu0
      %v3735 = vadd.f32 0.0, %v3734
      %v3736 = vpop.f32.mrf.mxu0
      %v3737 = vpop.f32.mrf.mxu0
      %v3738 = vadd.f32 0.0, %v3737
      %v3739 = vpop.f32.mrf.mxu0
      %3740 = vmatprep.mubr.bf16.mxu0 %v3519
      %3741 = vmatmul.mubr.bf16.gmra.mxu0 %v3518
      %v3742 = vpop.f32.mrf.mxu0
      %v3743 = vadd.f32 0.0, %v3742
      %v3744 = vpop.f32.mrf.mxu0
      %v3745 = vpop.f32.mrf.mxu0
      %v3746 = vadd.f32 0.0, %v3745
      %v3747 = vpop.f32.mrf.mxu0
      %3748 = vmatprep.mubr.bf16.mxu0 %v3521
      %3749 = vmatmul.mubr.bf16.gmra.mxu0 %v3520
      %v3750 = vpop.f32.mrf.mxu0
      %v3751 = vadd.f32 0.0, %v3750
      %v3752 = vpop.f32.mrf.mxu0
      %v3753 = vpop.f32.mrf.mxu0
      %v3754 = vadd.f32 0.0, %v3753
      %v3755 = vpop.f32.mrf.mxu0
      %3756 = vmatprep.mubr.bf16.mxu0 %v3523
      %3757 = vmatmul.mubr.bf16.gmra.mxu0 %v3522
      %v3758 = vpop.f32.mrf.mxu0
      %v3759 = vadd.f32 0.0, %v3758
      %v3760 = vpop.f32.mrf.mxu0
      %v3761 = vpop.f32.mrf.mxu0
      %v3762 = vadd.f32 0.0, %v3761
      %v3763 = vpop.f32.mrf.mxu0
      %3764 = vmatprep.mubr.bf16.mxu0 %v3525
      %3765 = vmatmul.mubr.bf16.gmra.mxu0 %v3524
      %v3766 = vpop.f32.mrf.mxu0
      %v3767 = vadd.f32 0.0, %v3766
      %v3768 = vpop.f32.mrf.mxu0
      %v3769 = vpop.f32.mrf.mxu0
      %v3770 = vadd.f32 0.0, %v3769
      %v3771 = vpop.f32.mrf.mxu0
      %3772 = vmatprep.mubr.bf16.mxu0 %v3527
      %3773 = vmatmul.mubr.bf16.gmra.mxu0 %v3526
      %v3774 = vpop.f32.mrf.mxu0
      %v3775 = vadd.f32 0.0, %v3774
      %v3776 = vpop.f32.mrf.mxu0
      %v3777 = vpop.f32.mrf.mxu0
      %v3778 = vadd.f32 0.0, %v3777
      %v3779 = vpop.f32.mrf.mxu0
      %3780 = vmatprep.mubr.bf16.mxu0 %v3529
      %3781 = vmatmul.mubr.bf16.gmra.mxu0 %v3528
      %v3782 = vpop.f32.mrf.mxu0
      %v3783 = vadd.f32 0.0, %v3782
      %v3784 = vpop.f32.mrf.mxu0
      %v3785 = vpop.f32.mrf.mxu0
      %v3786 = vadd.f32 0.0, %v3785
      %v3787 = vpop.f32.mrf.mxu0
      %3788 = vmatprep.mubr.bf16.mxu0 %v3531
      %3789 = vmatmul.mubr.bf16.gmra.mxu0 %v3530
      %v3790 = vpop.f32.mrf.mxu0
      %v3791 = vadd.f32 0.0, %v3790
      %v3792 = vpop.f32.mrf.mxu0
      %v3793 = vpop.f32.mrf.mxu0
      %v3794 = vadd.f32 0.0, %v3793
      %v3795 = vpop.f32.mrf.mxu0
      %3796 = vmatprep.mubr.bf16.mxu0 %v3533
      %3797 = vmatmul.mubr.bf16.gmra.mxu0 %v3532
      %v3798 = vpop.f32.mrf.mxu0
      %v3799 = vadd.f32 0.0, %v3798
      %v3800 = vpop.f32.mrf.mxu0
      %v3801 = vpop.f32.mrf.mxu0
      %v3802 = vadd.f32 0.0, %v3801
      %v3803 = vpop.f32.mrf.mxu0
      %3804 = vmatprep.mubr.bf16.mxu0 %v3535
      %3805 = vmatmul.mubr.bf16.gmra.mxu0 %v3534
      %v3806 = vpop.f32.mrf.mxu0
      %v3807 = vadd.f32 0.0, %v3806
      %v3808 = vpop.f32.mrf.mxu0
      %v3809 = vpop.f32.mrf.mxu0
      %v3810 = vadd.f32 0.0, %v3809
      %v3811 = vpop.f32.mrf.mxu0
      %3812 = vmatprep.mubr.bf16.mxu0 %v3537
      %3813 = vmatmul.mubr.bf16.gmra.mxu0 %v3536
      %v3814 = vpop.f32.mrf.mxu0
      %v3815 = vadd.f32 0.0, %v3814
      %v3816 = vpop.f32.mrf.mxu0
      %v3817 = vpop.f32.mrf.mxu0
      %v3818 = vadd.f32 0.0, %v3817
      %v3819 = vpop.f32.mrf.mxu0
      %3820 = vmatprep.mubr.bf16.mxu0 %v3539
      %3821 = vmatmul.mubr.bf16.gmra.mxu0 %v3538
      %v3822 = vpop.f32.mrf.mxu0
      %v3823 = vadd.f32 0.0, %v3822
      %v3824 = vpop.f32.mrf.mxu0
      %v3825 = vpop.f32.mrf.mxu0
      %v3826 = vadd.f32 0.0, %v3825
      %v3827 = vpop.f32.mrf.mxu0
      %3828 = vdwg.mxu0
      %v3829 = vadd.f32 %v3107, %v3703
      %v3830 = vadd.f32 %v3108, %v3706
      %v3831 = vadd.f32 %v3109, %v3711
      %v3832 = vadd.f32 %v3110, %v3714
      %v3833 = vadd.f32 %v3111, %v3719
      %v3834 = vadd.f32 %v3112, %v3722
      %v3835 = vadd.f32 %v3113, %v3727
      %v3836 = vadd.f32 %v3114, %v3730
      %v3837 = vadd.f32 %v3115, %v3735
      %v3838 = vadd.f32 %v3116, %v3738
      %v3839 = vadd.f32 %v3117, %v3743
      %v3840 = vadd.f32 %v3118, %v3746
      %v3841 = vadd.f32 %v3119, %v3751
      %v3842 = vadd.f32 %v3120, %v3754
      %v3843 = vadd.f32 %v3121, %v3759
      %v3844 = vadd.f32 %v3122, %v3762
      %v3845 = vadd.f32 %v3123, %v3767
      %v3846 = vadd.f32 %v3124, %v3770
      %v3847 = vadd.f32 %v3125, %v3775
      %v3848 = vadd.f32 %v3126, %v3778
      %v3849 = vadd.f32 %v3127, %v3783
      %v3850 = vadd.f32 %v3128, %v3786
      %v3851 = vadd.f32 %v3129, %v3791
      %v3852 = vadd.f32 %v3130, %v3794
      %v3853 = vadd.f32 %v3131, %v3799
      %v3854 = vadd.f32 %v3132, %v3802
      %v3855 = vadd.f32 %v3133, %v3807
      %v3856 = vadd.f32 %v3134, %v3810
      %v3857 = vadd.f32 %v3135, %v3815
      %v3858 = vadd.f32 %v3136, %v3818
      %v3859 = vadd.f32 %v3137, %v3823
      %v3860 = vadd.f32 %v3138, %v3826
      %3861 = vadd.xlane.f32.xlu0 %v3829
      %v3862 = vpop.xlane.xlu0 %3861
      %3863 = vadd.xlane.f32.xlu0 %v3830
      %v3864 = vpop.xlane.xlu0 %3863
      %3865 = vadd.xlane.f32.xlu0 %v3831
      %v3866 = vpop.xlane.xlu0 %3865
      %3867 = vadd.xlane.f32.xlu0 %v3832
      %v3868 = vpop.xlane.xlu0 %3867
      %3869 = vadd.xlane.f32.xlu0 %v3833
      %v3870 = vpop.xlane.xlu0 %3869
      %3871 = vadd.xlane.f32.xlu0 %v3834
      %v3872 = vpop.xlane.xlu0 %3871
      %3873 = vadd.xlane.f32.xlu0 %v3835
      %v3874 = vpop.xlane.xlu0 %3873
      %3875 = vadd.xlane.f32.xlu0 %v3836
      %v3876 = vpop.xlane.xlu0 %3875
      %3877 = vadd.xlane.f32.xlu0 %v3837
      %v3878 = vpop.xlane.xlu0 %3877
      %3879 = vadd.xlane.f32.xlu0 %v3838
      %v3880 = vpop.xlane.xlu0 %3879
      %3881 = vadd.xlane.f32.xlu0 %v3839
      %v3882 = vpop.xlane.xlu0 %3881
      %3883 = vadd.xlane.f32.xlu0 %v3840
      %v3884 = vpop.xlane.xlu0 %3883
      %3885 = vadd.xlane.f32.xlu0 %v3841
      %v3886 = vpop.xlane.xlu0 %3885
      %3887 = vadd.xlane.f32.xlu0 %v3842
      %v3888 = vpop.xlane.xlu0 %3887
      %3889 = vadd.xlane.f32.xlu0 %v3843
      %v3890 = vpop.xlane.xlu0 %3889
      %3891 = vadd.xlane.f32.xlu0 %v3844
      %v3892 = vpop.xlane.xlu0 %3891
      %3893 = vadd.xlane.f32.xlu0 %v3845
      %v3894 = vpop.xlane.xlu0 %3893
      %3895 = vadd.xlane.f32.xlu0 %v3846
      %v3896 = vpop.xlane.xlu0 %3895
      %3897 = vadd.xlane.f32.xlu0 %v3847
      %v3898 = vpop.xlane.xlu0 %3897
      %3899 = vadd.xlane.f32.xlu0 %v3848
      %v3900 = vpop.xlane.xlu0 %3899
      %3901 = vadd.xlane.f32.xlu0 %v3849
      %v3902 = vpop.xlane.xlu0 %3901
      %3903 = vadd.xlane.f32.xlu0 %v3850
      %v3904 = vpop.xlane.xlu0 %3903
      %3905 = vadd.xlane.f32.xlu0 %v3851
      %v3906 = vpop.xlane.xlu0 %3905
      %3907 = vadd.xlane.f32.xlu0 %v3852
      %v3908 = vpop.xlane.xlu0 %3907
      %3909 = vadd.xlane.f32.xlu0 %v3853
      %v3910 = vpop.xlane.xlu0 %3909
      %3911 = vadd.xlane.f32.xlu0 %v3854
      %v3912 = vpop.xlane.xlu0 %3911
      %3913 = vadd.xlane.f32.xlu0 %v3855
      %v3914 = vpop.xlane.xlu0 %3913
      %3915 = vadd.xlane.f32.xlu0 %v3856
      %v3916 = vpop.xlane.xlu0 %3915
      %3917 = vadd.xlane.f32.xlu0 %v3857
      %v3918 = vpop.xlane.xlu0 %3917
      %3919 = vadd.xlane.f32.xlu0 %v3858
      %v3920 = vpop.xlane.xlu0 %3919
      %3921 = vadd.xlane.f32.xlu0 %v3859
      %v3922 = vpop.xlane.xlu0 %3921
      %3923 = vadd.xlane.f32.xlu0 %v3860
      %v3924 = vpop.xlane.xlu0 %3923
      %v3925 = vmul.f32 %v3862, %v2850
      %v3926 = vmul.f32 %v3864, %v2850
      %v3927 = vmul.f32 %v3866, %v2850
      %v3928 = vmul.f32 %v3868, %v2850
      %v3929 = vmul.f32 %v3870, %v2850
      %v3930 = vmul.f32 %v3872, %v2850
      %v3931 = vmul.f32 %v3874, %v2850
      %v3932 = vmul.f32 %v3876, %v2850
      %v3933 = vmul.f32 %v3878, %v2850
      %v3934 = vmul.f32 %v3880, %v2850
      %v3935 = vmul.f32 %v3882, %v2850
      %v3936 = vmul.f32 %v3884, %v2850
      %v3937 = vmul.f32 %v3886, %v2850
      %v3938 = vmul.f32 %v3888, %v2850
      %v3939 = vmul.f32 %v3890, %v2850
      %v3940 = vmul.f32 %v3892, %v2850
      %v3941 = vmul.f32 %v3894, %v2850
      %v3942 = vmul.f32 %v3896, %v2850
      %v3943 = vmul.f32 %v3898, %v2850
      %v3944 = vmul.f32 %v3900, %v2850
      %v3945 = vmul.f32 %v3902, %v2850
      %v3946 = vmul.f32 %v3904, %v2850
      %v3947 = vmul.f32 %v3906, %v2850
      %v3948 = vmul.f32 %v3908, %v2850
      %v3949 = vmul.f32 %v3910, %v2850
      %v3950 = vmul.f32 %v3912, %v2850
      %v3951 = vmul.f32 %v3914, %v2850
      %v3952 = vmul.f32 %v3916, %v2850
      %v3953 = vmul.f32 %v3918, %v2850
      %v3954 = vmul.f32 %v3920, %v2850
      %v3955 = vmul.f32 %v3922, %v2850
      %v3956 = vmul.f32 %v3924, %v2850
      %v3957 = vsub.f32 %v3829, %v3925
      %v3958 = vsub.f32 %v3830, %v3926
      %v3959 = vsub.f32 %v3831, %v3927
      %v3960 = vsub.f32 %v3832, %v3928
      %v3961 = vsub.f32 %v3833, %v3929
      %v3962 = vsub.f32 %v3834, %v3930
      %v3963 = vsub.f32 %v3835, %v3931
      %v3964 = vsub.f32 %v3836, %v3932
      %v3965 = vsub.f32 %v3837, %v3933
      %v3966 = vsub.f32 %v3838, %v3934
      %v3967 = vsub.f32 %v3839, %v3935
      %v3968 = vsub.f32 %v3840, %v3936
      %v3969 = vsub.f32 %v3841, %v3937
      %v3970 = vsub.f32 %v3842, %v3938
      %v3971 = vsub.f32 %v3843, %v3939
      %v3972 = vsub.f32 %v3844, %v3940
      %v3973 = vsub.f32 %v3845, %v3941
      %v3974 = vsub.f32 %v3846, %v3942
      %v3975 = vsub.f32 %v3847, %v3943
      %v3976 = vsub.f32 %v3848, %v3944
      %v3977 = vsub.f32 %v3849, %v3945
      %v3978 = vsub.f32 %v3850, %v3946
      %v3979 = vsub.f32 %v3851, %v3947
      %v3980 = vsub.f32 %v3852, %v3948
      %v3981 = vsub.f32 %v3853, %v3949
      %v3982 = vsub.f32 %v3854, %v3950
      %v3983 = vsub.f32 %v3855, %v3951
      %v3984 = vsub.f32 %v3856, %v3952
      %v3985 = vsub.f32 %v3857, %v3953
      %v3986 = vsub.f32 %v3858, %v3954
      %v3987 = vsub.f32 %v3859, %v3955
      %v3988 = vsub.f32 %v3860, %v3956
      %v3989 = vmul.f32 %v3957, %v3957
      %v3990 = vmul.f32 %v3958, %v3958
      %v3991 = vmul.f32 %v3959, %v3959
      %v3992 = vmul.f32 %v3960, %v3960
      %v3993 = vmul.f32 %v3961, %v3961
      %v3994 = vmul.f32 %v3962, %v3962
      %v3995 = vmul.f32 %v3963, %v3963
      %v3996 = vmul.f32 %v3964, %v3964
      %v3997 = vmul.f32 %v3965, %v3965
      %v3998 = vmul.f32 %v3966, %v3966
      %v3999 = vmul.f32 %v3967, %v3967
      %v4000 = vmul.f32 %v3968, %v3968
      %v4001 = vmul.f32 %v3969, %v3969
      %v4002 = vmul.f32 %v3970, %v3970
      %v4003 = vmul.f32 %v3971, %v3971
      %v4004 = vmul.f32 %v3972, %v3972
      %v4005 = vmul.f32 %v3973, %v3973
      %v4006 = vmul.f32 %v3974, %v3974
      %v4007 = vmul.f32 %v3975, %v3975
      %v4008 = vmul.f32 %v3976, %v3976
      %v4009 = vmul.f32 %v3977, %v3977
      %v4010 = vmul.f32 %v3978, %v3978
      %v4011 = vmul.f32 %v3979, %v3979
      %v4012 = vmul.f32 %v3980, %v3980
      %v4013 = vmul.f32 %v3981, %v3981
      %v4014 = vmul.f32 %v3982, %v3982
      %v4015 = vmul.f32 %v3983, %v3983
      %v4016 = vmul.f32 %v3984, %v3984
      %v4017 = vmul.f32 %v3985, %v3985
      %v4018 = vmul.f32 %v3986, %v3986
      %v4019 = vmul.f32 %v3987, %v3987
      %v4020 = vmul.f32 %v3988, %v3988
      %4021 = vadd.xlane.f32.xlu0 %v3989
      %v4022 = vpop.xlane.xlu0 %4021
      %4023 = vadd.xlane.f32.xlu0 %v3990
      %v4024 = vpop.xlane.xlu0 %4023
      %4025 = vadd.xlane.f32.xlu0 %v3991
      %v4026 = vpop.xlane.xlu0 %4025
      %4027 = vadd.xlane.f32.xlu0 %v3992
      %v4028 = vpop.xlane.xlu0 %4027
      %4029 = vadd.xlane.f32.xlu0 %v3993
      %v4030 = vpop.xlane.xlu0 %4029
      %4031 = vadd.xlane.f32.xlu0 %v3994
      %v4032 = vpop.xlane.xlu0 %4031
      %4033 = vadd.xlane.f32.xlu0 %v3995
      %v4034 = vpop.xlane.xlu0 %4033
      %4035 = vadd.xlane.f32.xlu0 %v3996
      %v4036 = vpop.xlane.xlu0 %4035
      %4037 = vadd.xlane.f32.xlu0 %v3997
      %v4038 = vpop.xlane.xlu0 %4037
      %4039 = vadd.xlane.f32.xlu0 %v3998
      %v4040 = vpop.xlane.xlu0 %4039
      %4041 = vadd.xlane.f32.xlu0 %v3999
      %v4042 = vpop.xlane.xlu0 %4041
      %4043 = vadd.xlane.f32.xlu0 %v4000
      %v4044 = vpop.xlane.xlu0 %4043
      %4045 = vadd.xlane.f32.xlu0 %v4001
      %v4046 = vpop.xlane.xlu0 %4045
      %4047 = vadd.xlane.f32.xlu0 %v4002
      %v4048 = vpop.xlane.xlu0 %4047
      %4049 = vadd.xlane.f32.xlu0 %v4003
      %v4050 = vpop.xlane.xlu0 %4049
      %4051 = vadd.xlane.f32.xlu0 %v4004
      %v4052 = vpop.xlane.xlu0 %4051
      %4053 = vadd.xlane.f32.xlu0 %v4005
      %v4054 = vpop.xlane.xlu0 %4053
      %4055 = vadd.xlane.f32.xlu0 %v4006
      %v4056 = vpop.xlane.xlu0 %4055
      %4057 = vadd.xlane.f32.xlu0 %v4007
      %v4058 = vpop.xlane.xlu0 %4057
      %4059 = vadd.xlane.f32.xlu0 %v4008
      %v4060 = vpop.xlane.xlu0 %4059
      %4061 = vadd.xlane.f32.xlu0 %v4009
      %v4062 = vpop.xlane.xlu0 %4061
      %4063 = vadd.xlane.f32.xlu0 %v4010
      %v4064 = vpop.xlane.xlu0 %4063
      %4065 = vadd.xlane.f32.xlu0 %v4011
      %v4066 = vpop.xlane.xlu0 %4065
      %4067 = vadd.xlane.f32.xlu0 %v4012
      %v4068 = vpop.xlane.xlu0 %4067
      %4069 = vadd.xlane.f32.xlu0 %v4013
      %v4070 = vpop.xlane.xlu0 %4069
      %4071 = vadd.xlane.f32.xlu0 %v4014
      %v4072 = vpop.xlane.xlu0 %4071
      %4073 = vadd.xlane.f32.xlu0 %v4015
      %v4074 = vpop.xlane.xlu0 %4073
      %4075 = vadd.xlane.f32.xlu0 %v4016
      %v4076 = vpop.xlane.xlu0 %4075
      %4077 = vadd.xlane.f32.xlu0 %v4017
      %v4078 = vpop.xlane.xlu0 %4077
      %4079 = vadd.xlane.f32.xlu0 %v4018
      %v4080 = vpop.xlane.xlu0 %4079
      %4081 = vadd.xlane.f32.xlu0 %v4019
      %v4082 = vpop.xlane.xlu0 %4081
      %4083 = vadd.xlane.f32.xlu0 %v4020
      %v4084 = vpop.xlane.xlu0 %4083
      %v4085 = vmul.f32 %v4022, %v2850
      %v4086 = vmul.f32 %v4024, %v2850
      %v4087 = vmul.f32 %v4026, %v2850
      %v4088 = vmul.f32 %v4028, %v2850
      %v4089 = vmul.f32 %v4030, %v2850
      %v4090 = vmul.f32 %v4032, %v2850
      %v4091 = vmul.f32 %v4034, %v2850
      %v4092 = vmul.f32 %v4036, %v2850
      %v4093 = vmul.f32 %v4038, %v2850
      %v4094 = vmul.f32 %v4040, %v2850
      %v4095 = vmul.f32 %v4042, %v2850
      %v4096 = vmul.f32 %v4044, %v2850
      %v4097 = vmul.f32 %v4046, %v2850
      %v4098 = vmul.f32 %v4048, %v2850
      %v4099 = vmul.f32 %v4050, %v2850
      %v4100 = vmul.f32 %v4052, %v2850
      %v4101 = vmul.f32 %v4054, %v2850
      %v4102 = vmul.f32 %v4056, %v2850
      %v4103 = vmul.f32 %v4058, %v2850
      %v4104 = vmul.f32 %v4060, %v2850
      %v4105 = vmul.f32 %v4062, %v2850
      %v4106 = vmul.f32 %v4064, %v2850
      %v4107 = vmul.f32 %v4066, %v2850
      %v4108 = vmul.f32 %v4068, %v2850
      %v4109 = vmul.f32 %v4070, %v2850
      %v4110 = vmul.f32 %v4072, %v2850
      %v4111 = vmul.f32 %v4074, %v2850
      %v4112 = vmul.f32 %v4076, %v2850
      %v4113 = vmul.f32 %v4078, %v2850
      %v4114 = vmul.f32 %v4080, %v2850
      %v4115 = vmul.f32 %v4082, %v2850
      %v4116 = vmul.f32 %v4084, %v2850
      %v4117 = vadd.f32 %v4085, 1e-05
      %v4118 = vadd.f32 %v4086, 1e-05
      %v4119 = vadd.f32 %v4087, 1e-05
      %v4120 = vadd.f32 %v4088, 1e-05
      %v4121 = vadd.f32 %v4089, 1e-05
      %v4122 = vadd.f32 %v4090, 1e-05
      %v4123 = vadd.f32 %v4091, 1e-05
      %v4124 = vadd.f32 %v4092, 1e-05
      %v4125 = vadd.f32 %v4093, 1e-05
      %v4126 = vadd.f32 %v4094, 1e-05
      %v4127 = vadd.f32 %v4095, 1e-05
      %v4128 = vadd.f32 %v4096, 1e-05
      %v4129 = vadd.f32 %v4097, 1e-05
      %v4130 = vadd.f32 %v4098, 1e-05
      %v4131 = vadd.f32 %v4099, 1e-05
      %v4132 = vadd.f32 %v4100, 1e-05
      %v4133 = vadd.f32 %v4101, 1e-05
      %v4134 = vadd.f32 %v4102, 1e-05
      %v4135 = vadd.f32 %v4103, 1e-05
      %v4136 = vadd.f32 %v4104, 1e-05
      %v4137 = vadd.f32 %v4105, 1e-05
      %v4138 = vadd.f32 %v4106, 1e-05
      %v4139 = vadd.f32 %v4107, 1e-05
      %v4140 = vadd.f32 %v4108, 1e-05
      %v4141 = vadd.f32 %v4109, 1e-05
      %v4142 = vadd.f32 %v4110, 1e-05
      %v4143 = vadd.f32 %v4111, 1e-05
      %v4144 = vadd.f32 %v4112, 1e-05
      %v4145 = vadd.f32 %v4113, 1e-05
      %v4146 = vadd.f32 %v4114, 1e-05
      %v4147 = vadd.f32 %v4115, 1e-05
      %v4148 = vadd.f32 %v4116, 1e-05
      %v4149 = vrsqrt.pop %v4117
      %v4150 = vrsqrt.pop %v4118
      %v4151 = vrsqrt.pop %v4119
      %v4152 = vrsqrt.pop %v4120
      %v4153 = vrsqrt.pop %v4121
      %v4154 = vrsqrt.pop %v4122
      %v4155 = vrsqrt.pop %v4123
      %v4156 = vrsqrt.pop %v4124
      %v4157 = vrsqrt.pop %v4125
      %v4158 = vrsqrt.pop %v4126
      %v4159 = vrsqrt.pop %v4127
      %v4160 = vrsqrt.pop %v4128
      %v4161 = vrsqrt.pop %v4129
      %v4162 = vrsqrt.pop %v4130
      %v4163 = vrsqrt.pop %v4131
      %v4164 = vrsqrt.pop %v4132
      %v4165 = vrsqrt.pop %v4133
      %v4166 = vrsqrt.pop %v4134
      %v4167 = vrsqrt.pop %v4135
      %v4168 = vrsqrt.pop %v4136
      %v4169 = vrsqrt.pop %v4137
      %v4170 = vrsqrt.pop %v4138
      %v4171 = vrsqrt.pop %v4139
      %v4172 = vrsqrt.pop %v4140
      %v4173 = vrsqrt.pop %v4141
      %v4174 = vrsqrt.pop %v4142
      %v4175 = vrsqrt.pop %v4143
      %v4176 = vrsqrt.pop %v4144
      %v4177 = vrsqrt.pop %v4145
      %v4178 = vrsqrt.pop %v4146
      %v4179 = vrsqrt.pop %v4147
      %v4180 = vrsqrt.pop %v4148
      %v4181 = vmul.f32 %v3957, %v4149
      %v4182 = vmul.f32 %v3958, %v4150
      %v4183 = vmul.f32 %v3959, %v4151
      %v4184 = vmul.f32 %v3960, %v4152
      %v4185 = vmul.f32 %v3961, %v4153
      %v4186 = vmul.f32 %v3962, %v4154
      %v4187 = vmul.f32 %v3963, %v4155
      %v4188 = vmul.f32 %v3964, %v4156
      %v4189 = vmul.f32 %v3965, %v4157
      %v4190 = vmul.f32 %v3966, %v4158
      %v4191 = vmul.f32 %v3967, %v4159
      %v4192 = vmul.f32 %v3968, %v4160
      %v4193 = vmul.f32 %v3969, %v4161
      %v4194 = vmul.f32 %v3970, %v4162
      %v4195 = vmul.f32 %v3971, %v4163
      %v4196 = vmul.f32 %v3972, %v4164
      %v4197 = vmul.f32 %v3973, %v4165
      %v4198 = vmul.f32 %v3974, %v4166
      %v4199 = vmul.f32 %v3975, %v4167
      %v4200 = vmul.f32 %v3976, %v4168
      %v4201 = vmul.f32 %v3977, %v4169
      %v4202 = vmul.f32 %v3978, %v4170
      %v4203 = vmul.f32 %v3979, %v4171
      %v4204 = vmul.f32 %v3980, %v4172
      %v4205 = vmul.f32 %v3981, %v4173
      %v4206 = vmul.f32 %v3982, %v4174
      %v4207 = vmul.f32 %v3983, %v4175
      %v4208 = vmul.f32 %v3984, %v4176
      %v4209 = vmul.f32 %v3985, %v4177
      %v4210 = vmul.f32 %v3986, %v4178
      %v4211 = vmul.f32 %v3987, %v4179
      %v4212 = vmul.f32 %v3988, %v4180
      %v4213 = vpack.c.bf16 %v954, %v954
      %v4214 = vld [vmem:[%s11] sm:$0xf]
      %v4215 = vld [vmem:[%s11 + $0x4] sm:$0xf]
      %v4216 = vld [vmem:[%s11 + $0x8] sm:$0xf]
      %v4217 = vld [vmem:[%s11 + $0xc] sm:$0xf]
      %v4218 = vld [vmem:[%s11 + $0x10] sm:$0xf]
      %v4219 = vld [vmem:[%s11 + $0x14] sm:$0xf]
      %v4220 = vld [vmem:[%s11 + $0x18] sm:$0xf]
      %v4221 = vld [vmem:[%s11 + $0x1c] sm:$0xf]
      %v4222 = vld [vmem:[%s11 + $0x20] sm:$0xf]
      %v4223 = vld [vmem:[%s11 + $0x24] sm:$0xf]
      %v4224 = vld [vmem:[%s11 + $0x28] sm:$0xf]
      %v4225 = vld [vmem:[%s11 + $0x2c] sm:$0xf]
      %v4226 = vld [vmem:[%s11 + $0x30] sm:$0xf]
      %v4227 = vld [vmem:[%s11 + $0x34] sm:$0xf]
      %v4228 = vld [vmem:[%s11 + $0x38] sm:$0xf]
      %v4229 = vld [vmem:[%s11 + $0x3c] sm:$0xf]
      %v4246 = vunpack.c.l.b16 %v4214
      %v4247 = vunpack.c.l.b16 %v4215
      %v4248 = vunpack.c.l.b16 %v4216
      %v4249 = vunpack.c.l.b16 %v4217
      %v4250 = vunpack.c.l.b16 %v4218
      %v4251 = vunpack.c.l.b16 %v4219
      %v4252 = vunpack.c.l.b16 %v4220
      %v4253 = vunpack.c.l.b16 %v4221
      %v4254 = vunpack.c.l.b16 %v4222
      %v4255 = vunpack.c.l.b16 %v4223
      %v4256 = vunpack.c.l.b16 %v4224
      %v4257 = vunpack.c.l.b16 %v4225
      %v4258 = vunpack.c.l.b16 %v4226
      %v4259 = vunpack.c.l.b16 %v4227
      %v4260 = vunpack.c.l.b16 %v4228
      %v4261 = vunpack.c.l.b16 %v4229
      %v4262 = vpack.c.b16 %v4247, %v4246
      %v4263 = vpack.c.b16 %v4249, %v4248
      %v4264 = vpack.c.b16 %v4251, %v4250
      %v4265 = vpack.c.b16 %v4253, %v4252
      %v4266 = vpack.c.b16 %v4255, %v4254
      %v4267 = vpack.c.b16 %v4257, %v4256
      %v4268 = vpack.c.b16 %v4259, %v4258
      %v4269 = vpack.c.b16 %v4261, %v4260
      %4278 = vmatprep.subr.bf16.mxu0 0
      %4279 = vmatpush1.bf16.msra.mxu0 %v4269
      %4280 = vmatprep.subr.bf16.mxu0 0
      %4281 = vmatpush1.bf16.msra.mxu0 %v4268
      %4282 = vmatprep.subr.bf16.mxu0 0
      %4283 = vmatpush1.bf16.msra.mxu0 %v4267
      %4284 = vmatprep.subr.bf16.mxu0 0
      %4285 = vmatpush1.bf16.msra.mxu0 %v4266
      %4286 = vmatprep.subr.bf16.mxu0 0
      %4287 = vmatpush1.bf16.msra.mxu0 %v4265
      %4288 = vmatprep.subr.bf16.mxu0 0
      %4289 = vmatpush1.bf16.msra.mxu0 %v4264
      %4290 = vmatprep.subr.bf16.mxu0 0
      %4291 = vmatpush1.bf16.msra.mxu0 %v4263
      %4292 = vmatprep.subr.bf16.mxu0 0
      %4293 = vmatpush1.bf16.msra.mxu0 %v4262
      %4294 = vmatprep.subr.bf16.mxu0 0
      %4295 = vmatpush2.bf16.msra.mxu0 0
      %4296 = vmatprep.subr.bf16.mxu0 0
      %4297 = vmatpush2.bf16.msra.mxu0 0
      %4298 = vmatprep.subr.bf16.mxu0 0
      %4299 = vmatpush2.bf16.msra.mxu0 0
      %4300 = vmatprep.subr.bf16.mxu0 0
      %4301 = vmatpush2.bf16.msra.mxu0 0
      %4302 = vmatprep.subr.bf16.mxu0 0
      %4303 = vmatpush2.bf16.msra.mxu0 0
      %4304 = vmatprep.subr.bf16.mxu0 0
      %4305 = vmatpush2.bf16.msra.mxu0 0
      %4306 = vmatprep.subr.bf16.mxu0 0
      %4307 = vmatpush2.bf16.msra.mxu0 0
      %4308 = vmatprep.subr.bf16.mxu0 0
      %4309 = vmatpush2.bf16.msra.mxu0 0
      %4310 = vmatprep.mubr.bf16.mxu0 0
      %4311 = vmatmul.mubr.bf16.gmra.mxu0 %v4213
      %v4312 = vpop.f32.mrf.mxu0
      %v4313 = vadd.f32 0.0, %v4312
      %v4314 = vpop.f32.mrf.mxu0
      %v4315 = vpop.f32.mrf.mxu0
      %v4316 = vpop.f32.mrf.mxu0
      %4317 = vdwg.mxu0
      %v4318 = vpack.c.bf16 %v4313, %v4313
      %v4319 = vpack.c.bf16 %v4182, %v4181
      %v4320 = vpack.c.bf16 %v4184, %v4183
      %v4321 = vpack.c.bf16 %v4186, %v4185
      %v4322 = vpack.c.bf16 %v4188, %v4187
      %v4323 = vpack.c.bf16 %v4190, %v4189
      %v4324 = vpack.c.bf16 %v4192, %v4191
      %v4325 = vpack.c.bf16 %v4194, %v4193
      %v4326 = vpack.c.bf16 %v4196, %v4195
      %v4327 = vpack.c.bf16 %v4198, %v4197
      %v4328 = vpack.c.bf16 %v4200, %v4199
      %v4329 = vpack.c.bf16 %v4202, %v4201
      %v4330 = vpack.c.bf16 %v4204, %v4203
      %v4331 = vpack.c.bf16 %v4206, %v4205
      %v4332 = vpack.c.bf16 %v4208, %v4207
      %v4333 = vpack.c.bf16 %v4210, %v4209
      %v4334 = vpack.c.bf16 %v4212, %v4211
      %4335 = vmatprep.subr.bf16.mxu0 0
      %4336 = vmatpush1.bf16.xpose.msra.mxu0 %v4326
      %4337 = vmatprep.subr.bf16.mxu0 0
      %4338 = vmatpush1.bf16.xpose.msra.mxu0 %v4325
      %4339 = vmatprep.subr.bf16.mxu0 0
      %4340 = vmatpush1.bf16.xpose.msra.mxu0 %v4324
      %4341 = vmatprep.subr.bf16.mxu0 0
      %4342 = vmatpush1.bf16.xpose.msra.mxu0 %v4323
      %4343 = vmatprep.subr.bf16.mxu0 0
      %4344 = vmatpush1.bf16.xpose.msra.mxu0 %v4322
      %4345 = vmatprep.subr.bf16.mxu0 0
      %4346 = vmatpush1.bf16.xpose.msra.mxu0 %v4321
      %4347 = vmatprep.subr.bf16.mxu0 0
      %4348 = vmatpush1.bf16.xpose.msra.mxu0 %v4320
      %4349 = vmatprep.subr.bf16.mxu0 0
      %4350 = vmatpush1.bf16.xpose.msra.mxu0 %v4319
      %4351 = vmatprep.subr.bf16.mxu0 0
      %4352 = vmatpush2.bf16.xpose.msra.mxu0 %v4334
      %4353 = vmatprep.subr.bf16.mxu0 0
      %4354 = vmatpush2.bf16.xpose.msra.mxu0 %v4333
      %4355 = vmatprep.subr.bf16.mxu0 0
      %4356 = vmatpush2.bf16.xpose.msra.mxu0 %v4332
      %4357 = vmatprep.subr.bf16.mxu0 0
      %4358 = vmatpush2.bf16.xpose.msra.mxu0 %v4331
      %4359 = vmatprep.subr.bf16.mxu0 0
      %4360 = vmatpush2.bf16.xpose.msra.mxu0 %v4330
      %4361 = vmatprep.subr.bf16.mxu0 0
      %4362 = vmatpush2.bf16.xpose.msra.mxu0 %v4329
      %4363 = vmatprep.subr.bf16.mxu0 0
      %4364 = vmatpush2.bf16.xpose.msra.mxu0 %v4328
      %4365 = vmatprep.subr.bf16.mxu0 0
      %4366 = vmatpush2.bf16.xpose.msra.mxu0 %v4327
      %4367 = vmatprep.mubr.bf16.mxu0 0
      %4368 = vmatmul.mubr.bf16.gmra.mxu0 %v4318
      %v4369 = vpop.f32.mrf.mxu0
      %v4370 = vadd.f32 0.0, %v4369
      %v4371 = vpop.f32.mrf.mxu0
      %v4372 = vadd.f32 0.0, %v4371
      %v4373 = vpop.f32.mrf.mxu0
      %v4374 = vpop.f32.mrf.mxu0
      %4375 = vdwg.mxu0
      %v4378 = vcombine.low %v4370, %v4372
      %v4380 = vunpack.c.l.s4 1966171168
      %v4381 = vunpack.c.0.s8 %v4380
      %v4382 = vlaneseq
      %v4383 = vshrl.u32 %v4382, 7
      %v4384 = vsub.s32 %v4381, %v4383
      %v4385 = vrot.slane %v4378, %v4384
      %v4387 = vunpack.c.l.s4 1966171168
      %v4388 = vunpack.c.0.s8 %v4387
      %v4389 = vlaneseq
      %v4390 = vshrl.u32 %v4389, 7
      %v4391 = vsub.s32 %v4388, %v4390
      %v4392 = vrot.slane %v4385, %v4391
      %v4394 = vlaneseq
      %vm4395 = vcmp.ge.s32.totalorder %v4394, 0
      %vm4396 = vcmp.lt.s32.totalorder %v4394, 256
      %vm4397 = vmand %vm4395, %vm4396
      %4398 = vst.msk [vmem:[%s445] sm:$0x3] %vm4397, %v4392
      %p4399 = scmp.lt.s32.totalorder %s23, 1
      %s4400 = scalar_select %p4399, %s23, 1
      %s4401 = smul.addr %s4400, 2
      %s4402 = scalar_lea.vmem %s12, %s4401
      // Predicated region
      $region69: #{barleria_forward.1} parent=67 // pred_check
        %p4403 = pneg %p308
      $region70: #{barleria_forward.1} parent=67 // pred_check_branch
        %4405 = sbr.rel (%p4403) target = $region72
      $region71: #{barleria_forward.1} parent=67 // pred_region
        _
      $region72: #{barleria_forward.1} parent=67 // pred_fallthru
        _
    $region68: #{barleria_forward.1} parent=5 // pred_fallthru
      _
    %p4406 = scmp.le.s32.totalorder 2, %s18
    // Predicated region
    $region73: #{barleria_forward.1} parent=5 // pred_check
      %p4407 = pneg %p4406
    $region74: #{barleria_forward.1} parent=5 // pred_check_branch
      %4409 = sbr.rel (%p4407) target = $region76
    $region75: #{barleria_forward.1} parent=5 // pred_region
      %s4410 = ssub.s32 %s18, 2
      // Predicated region
      $region77: #{barleria_forward.1} parent=75 // pred_check
        %p4411 = pneg %p314
      $region78: #{barleria_forward.1} parent=75 // pred_check_branch
        %4413 = sbr.rel (%p4411) target = $region80
      $region79: #{barleria_forward.1} parent=75 // pred_region
        %p4414 = scmp.lt.s32.totalorder %s24, 1
        %s4415 = scalar_select %p4414, %s24, 1
        %s4416 = smul.addr %s4415, 2
        %s4417 = scalar_lea.vmem %s12, %s4416
      $region80: #{barleria_forward.1} parent=75 // pred_fallthru
        _
    $region76: #{barleria_forward.1} parent=5 // pred_fallthru
      _
  $region6: #{barleria_forward.1} parent=0 // loop_footer
    %s22 = sadd.s32 1, %s18
  $region7: #{barleria_forward.1} parent=0 // loop_footer_branch
    %17 = sbr.rel target = $region3
  $region8: #{barleria_forward.1} parent=0 // loop_exit
    _

</llo_original>
